<compile_context>
chip_gen: v7x
topology: tpu7x:2x2x1
jax: 0.10.0
libtpu: 0.0.40
codegen_flags: <defaults>
</compile_context>

<pallas_src>
import jax
import jax.numpy as jnp
from jax.experimental import pallas as pl
from jax.experimental.pallas import tpu as pltpu

# ------------------------- scaled-down BERT config -------------------------
BATCH      = 2
SEQ        = 8
HIDDEN     = 128          # (BERT-base uses 768)
NUM_HEADS  = 2
HEAD_DIM   = HIDDEN // NUM_HEADS
FFN_DIM    = 256
NUM_LAYERS = 2
VOCAB      = 128
TYPE_VOCAB = 2
MAX_POS    = 16
LN_EPS     = 1e-12
LANES      = 128
ROWS       = BATCH * SEQ


# ------------------------------ helpers -------------------------------------
def _ln(x, g, b):
    mu = jnp.mean(x, axis=-1, keepdims=True)
    var = jnp.mean(jnp.square(x - mu), axis=-1, keepdims=True)
    return (x - mu) * jax.lax.rsqrt(var + LN_EPS) * g + b


# ------------------------------ fused kernel --------------------------------
def fused_bert_kernel(ids_ref, mask_ref, seg_ref, labels_ref,
                      wemb_ref, pemb_ref, temb_ref, elng_ref, elnb_ref,
                      outw_ref, outb_ref,
                      wqkv_ref, bqkv_ref, wo_ref, bo_ref,
                      ln1g_ref, ln1b_ref, w1_ref, b1_ref, w2_ref, b2_ref,
                      ln2g_ref, ln2b_ref,
                      logit_ref, loss_ref):
    # ---- embeddings + embedding LayerNorm (one-hot matmul; fine at V=128) ----
    ids = ids_ref[...]                                            # (BS,1) int32
    vocab_iota = jax.lax.broadcasted_iota(jnp.int32, (ROWS, VOCAB), 1)
    onehot = jnp.where(vocab_iota == ids, 1.0, 0.0).astype(jnp.bfloat16)
    we = jnp.dot(onehot, wemb_ref[...],
                 preferred_element_type=jnp.float32)              # (BS,H) f32
    seg = seg_ref[...]                                            # (BS,1) int32
    te = jnp.where(seg == 0, temb_ref[0:1, :], temb_ref[1:2, :])  # (BS,H)
    pe = pemb_ref[0:SEQ, :]                                       # (S,H) f32
    emb = (we.reshape(BATCH, SEQ, HIDDEN) + pe[None, :, :]
           + te.reshape(BATCH, SEQ, HIDDEN)).reshape(ROWS, HIDDEN)
    h = _ln(emb, elng_ref[...], elnb_ref[...])                    # (BS,H) f32

    # attention additive mask, built once for the whole kernel
    add_mask = (1.0 - mask_ref[...]) * -1e9                       # (B,S) f32
    scale = 1.0 / float(HEAD_DIM) ** 0.5

    # ---- encoder layers, fully unrolled in-kernel ---------------------------
    for l in range(NUM_LAYERS):
        x = h
        # packed QKV projection: one (BS,H)x(H,3H) bf16 matmul
        qkv = jnp.dot(x.astype(jnp.bfloat16), wqkv_ref[l],
                      preferred_element_type=jnp.float32) + bqkv_ref[l]
        q = qkv[:, 0:HIDDEN].reshape(BATCH, SEQ, HIDDEN)
        k = qkv[:, HIDDEN:2 * HIDDEN].reshape(BATCH, SEQ, HIDDEN)
        v = qkv[:, 2 * HIDDEN:3 * HIDDEN].reshape(BATCH, SEQ, HIDDEN)

        wo = wo_ref[l]                                            # (H,H) bf16
        attn = None
        for n in range(NUM_HEADS):                                # unrolled
            lo, hi = n * HEAD_DIM, (n + 1) * HEAD_DIM
            qh = q[:, :, lo:hi].astype(jnp.bfloat16)
            kh = k[:, :, lo:hi].astype(jnp.bfloat16)
            vh = v[:, :, lo:hi].astype(jnp.bfloat16)
            s = jnp.einsum('bqd,bkd->bqk', qh, kh,
                           preferred_element_type=jnp.float32) * scale
            s = s + add_mask[:, None, :]                          # mask pad keys
            s = s - jnp.max(s, axis=-1, keepdims=True)
            p = jnp.exp(s)
            p = p * pl.reciprocal(jnp.sum(p, axis=-1, keepdims=True),
                                  approx=True)
            ctx = jnp.einsum('bqk,bkd->bqd', p.astype(jnp.bfloat16), vh,
                             preferred_element_type=jnp.float32)  # (B,S,D)
            # partial output projection against a sublane row-slice of wo
            part = jnp.dot(ctx.reshape(ROWS, HEAD_DIM).astype(jnp.bfloat16),
                           wo[lo:hi, :], preferred_element_type=jnp.float32)
            attn = part if attn is None else attn + part
        attn = attn + bo_ref[l]

        h1 = _ln(x + attn, ln1g_ref[l], ln1b_ref[l])

        f = jnp.dot(h1.astype(jnp.bfloat16), w1_ref[l],
                    preferred_element_type=jnp.float32) + b1_ref[l]
        f = jax.nn.gelu(f, approximate=True)
        f = jnp.dot(f.astype(jnp.bfloat16), w2_ref[l],
                    preferred_element_type=jnp.float32) + b2_ref[l]
        h = _ln(h1 + f, ln2g_ref[l], ln2b_ref[l])

    # ---- [CLS] head + BCEWithLogits loss -------------------------------------
    # [CLS] token = row b*SEQ of each batch (static sublane slices)
    cls = jnp.concatenate([h[b * SEQ:b * SEQ + 1, :] for b in range(BATCH)],
                          axis=0)                                  # (B,H) f32

    # TODO(synk): nn.Dropout(0.3) before the classifier is identity at
    # inference; training-mode stochastic dropout is not implemented.
    logits = jnp.dot(cls, outw_ref[...],
                     preferred_element_type=jnp.float32) + outb_ref[...]  # (B,1)
    logit_ref[...] = jnp.broadcast_to(logits, (BATCH, LANES))      # lane-dense

    y = labels_ref[...]                                            # (B,1) f32
    # numerically-stable BCEWithLogits, mean reduction
    per = (jnp.maximum(logits, 0.0) - logits * y
           + jnp.log1p(jnp.exp(-jnp.abs(logits))))
    loss_ref[...] = jnp.broadcast_to(jnp.mean(per).reshape(1, 1), (1, LANES))


# ------------------------------ params ----------------------------------------
def init_params(key):
    keys = iter(jax.random.split(key, 32))

    def nrm(shape, dtype=jnp.float32):
        return (jax.random.normal(next(keys), shape, jnp.float32) * 0.02).astype(dtype)

    L = NUM_LAYERS
    return {
        # embeddings (word table feeds the MXU -> bf16; pos/type stay f32)
        'word_emb': nrm((VOCAB, HIDDEN), jnp.bfloat16),
        'pos_emb':  nrm((MAX_POS, HIDDEN)),
        'type_emb': nrm((TYPE_VOCAB, HIDDEN)),
        'emb_ln_g': jnp.ones((1, HIDDEN), jnp.float32),
        'emb_ln_b': jnp.zeros((1, HIDDEN), jnp.float32),
        # classifier head (nn.Linear(768, 1) scaled down)
        'out_w': nrm((HIDDEN, 1)),
        'out_b': jnp.zeros((1, 1), jnp.float32),
        # per-layer weights stacked on a leading layer axis; matmul weights bf16
        'wqkv': nrm((L, HIDDEN, 3 * HIDDEN), jnp.bfloat16),
        'bqkv': jnp.zeros((L, 1, 3 * HIDDEN), jnp.float32),
        'wo':   nrm((L, HIDDEN, HIDDEN), jnp.bfloat16),
        'bo':   jnp.zeros((L, 1, HIDDEN), jnp.float32),
        'ln1_g': jnp.ones((L, 1, HIDDEN), jnp.float32),
        'ln1_b': jnp.zeros((L, 1, HIDDEN), jnp.float32),
        'w1':   nrm((L, HIDDEN, FFN_DIM), jnp.bfloat16),
        'b1':   jnp.zeros((L, 1, FFN_DIM), jnp.float32),
        'w2':   nrm((L, FFN_DIM, HIDDEN), jnp.bfloat16),
        'b2':   jnp.zeros((L, 1, HIDDEN), jnp.float32),
        'ln2_g': jnp.ones((L, 1, HIDDEN), jnp.float32),
        'ln2_b': jnp.zeros((L, 1, HIDDEN), jnp.float32),
    }


# ------------------------------ forward ----------------------------------------
def bert_for_ner_forward(params, ids, mask, seg_ids, labels):
    # reshape / convert small int inputs in the wrapper so the kernel does no
    # lane->sublane XLU reshapes or int->float converts on them
    ids_r = ids.reshape(ROWS, 1)
    seg_r = seg_ids.reshape(ROWS, 1)
    mask_f = mask.astype(jnp.float32)                       # (B,S)
    labels_f = labels.astype(jnp.float32).reshape(BATCH, 1)

    inputs = (ids_r, mask_f, seg_r, labels_f,
              params['word_emb'], params['pos_emb'], params['type_emb'],
              params['emb_ln_g'], params['emb_ln_b'],
              params['out_w'], params['out_b'],
              params['wqkv'], params['bqkv'], params['wo'], params['bo'],
              params['ln1_g'], params['ln1_b'], params['w1'], params['b1'],
              params['w2'], params['b2'], params['ln2_g'], params['ln2_b'])

    # Single grid-less invocation: every array lives whole in VMEM (total
    # < 1 MiB), layers are unrolled inside the kernel.
    logits_pad, loss_pad = pl.pallas_call(
        fused_bert_kernel,
        out_shape=(jax.ShapeDtypeStruct((BATCH, LANES), jnp.float32),
                   jax.ShapeDtypeStruct((1, LANES), jnp.float32)),
    )(*inputs)

    logits = logits_pad[:, 0:1]          # (B, 1)
    loss = loss_pad[0, 0]                # scalar
    return logits, loss


# ------------------------------ main -------------------------------------------
if __name__ == "__main__":
    key = jax.random.PRNGKey(0)
    pkey, ikey, lkey = jax.random.split(key, 3)

    params = init_params(pkey)
    ids = jax.random.randint(ikey, (BATCH, SEQ), 0, VOCAB, dtype=jnp.int32)
    mask = jnp.ones((BATCH, SEQ), jnp.int32).at[1, SEQ - 2:].set(0)
    seg_ids = jnp.zeros((BATCH, SEQ), jnp.int32).at[:, SEQ // 2:].set(1)
    labels = jax.random.randint(lkey, (BATCH,), 0, 2, dtype=jnp.int32)

    logits, loss = bert_for_ner_forward(params, ids, mask, seg_ids, labels)
    jax.block_until_ready((logits, loss))
    assert logits.shape == (BATCH, 1) and loss.shape == ()
    print("KERNEL_OK")
</pallas_src>

<mosaic_0001>
module attributes {stable_mosaic.version = 11 : i64} {
  func.func @fused_bert_kernel(%arg0: memref<16x1xi32, #tpu.memory_space<vmem>>, %arg1: memref<2x8xf32, #tpu.memory_space<vmem>>, %arg2: memref<16x1xi32, #tpu.memory_space<vmem>>, %arg3: memref<2x1xf32, #tpu.memory_space<vmem>>, %arg4: memref<128x128xbf16, #tpu.memory_space<vmem>>, %arg5: memref<16x128xf32, #tpu.memory_space<vmem>>, %arg6: memref<2x128xf32, #tpu.memory_space<vmem>>, %arg7: memref<1x128xf32, #tpu.memory_space<vmem>>, %arg8: memref<1x128xf32, #tpu.memory_space<vmem>>, %arg9: memref<128x1xf32, #tpu.memory_space<vmem>>, %arg10: memref<1x1xf32, #tpu.memory_space<vmem>>, %arg11: memref<2x128x384xbf16, #tpu.memory_space<vmem>>, %arg12: memref<2x1x384xf32, #tpu.memory_space<vmem>>, %arg13: memref<2x128x128xbf16, #tpu.memory_space<vmem>>, %arg14: memref<2x1x128xf32, #tpu.memory_space<vmem>>, %arg15: memref<2x1x128xf32, #tpu.memory_space<vmem>>, %arg16: memref<2x1x128xf32, #tpu.memory_space<vmem>>, %arg17: memref<2x128x256xbf16, #tpu.memory_space<vmem>>, %arg18: memref<2x1x256xf32, #tpu.memory_space<vmem>>, %arg19: memref<2x256x128xbf16, #tpu.memory_space<vmem>>, %arg20: memref<2x1x128xf32, #tpu.memory_space<vmem>>, %arg21: memref<2x1x128xf32, #tpu.memory_space<vmem>>, %arg22: memref<2x1x128xf32, #tpu.memory_space<vmem>>, %arg23: memref<2x128xf32, #tpu.memory_space<vmem>>, %arg24: memref<1x128xf32, #tpu.memory_space<vmem>>) attributes {dimension_semantics = [], scalar_prefetch = 0 : i64, scratch_operands = 0 : i64, tpu.core_type = #tpu.core_type<tc>} {
    %c0 = arith.constant 0 : index
    %c0_0 = arith.constant 0 : index
    %0 = vector.load %arg0[%c0, %c0_0] : memref<16x1xi32, #tpu.memory_space<vmem>>, vector<16x1xi32>
    %1 = tpu.iota {dimensions = array<i32: 1>} : vector<16x128xi32>
    %2 = vector.broadcast %0 : vector<16x1xi32> to vector<16x128xi32>
    %3 = arith.cmpi eq, %1, %2 : vector<16x128xi32>
    %cst = arith.constant 1.000000e+00 : f32
    %cst_1 = arith.constant 0.000000e+00 : f32
    %4 = vector.broadcast %cst : f32 to vector<16x128xf32>
    %5 = vector.broadcast %cst_1 : f32 to vector<16x128xf32>
    %6 = arith.select %3, %4, %5 : vector<16x128xi1>, vector<16x128xf32>
    %7 = arith.truncf %6 : vector<16x128xf32> to vector<16x128xbf16>
    %c0_2 = arith.constant 0 : index
    %c0_3 = arith.constant 0 : index
    %8 = vector.load %arg4[%c0_2, %c0_3] : memref<128x128xbf16, #tpu.memory_space<vmem>>, vector<128x128xbf16>
    %cst_4 = arith.constant dense<0.000000e+00> : vector<16x128xf32>
    %9 = tpu.matmul %7, %8, %cst_4 {dimension_numbers = #tpu.dot_dimension_numbers<[1], [0], [0], [1], [0, 0, 1, 1], [], []>} : vector<16x128xbf16>, vector<128x128xbf16>, vector<16x128xf32> -> vector<16x128xf32>
    %c0_5 = arith.constant 0 : index
    %c0_6 = arith.constant 0 : index
    %10 = vector.load %arg2[%c0_5, %c0_6] : memref<16x1xi32, #tpu.memory_space<vmem>>, vector<16x1xi32>
    %c0_i32 = arith.constant 0 : i32
    %11 = vector.broadcast %c0_i32 : i32 to vector<16x1xi32>
    %12 = arith.cmpi eq, %10, %11 : vector<16x1xi32>
    %c0_7 = arith.constant 0 : index
    %c0_8 = arith.constant 0 : index
    %13 = vector.load %arg6[%c0_7, %c0_8] : memref<2x128xf32, #tpu.memory_space<vmem>>, vector<1x128xf32>
    %c1 = arith.constant 1 : index
    %c0_9 = arith.constant 0 : index
    %14 = vector.load %arg6[%c1, %c0_9] : memref<2x128xf32, #tpu.memory_space<vmem>>, vector<1x128xf32>
    %15 = vector.shape_cast %12 : vector<16x1xi1> to vector<16x1xi1>
    %16 = vector.broadcast %15 : vector<16x1xi1> to vector<16x128xi1>
    %17 = vector.shape_cast %13 : vector<1x128xf32> to vector<1x128xf32>
    %18 = vector.broadcast %17 : vector<1x128xf32> to vector<16x128xf32>
    %19 = vector.shape_cast %14 : vector<1x128xf32> to vector<1x128xf32>
    %20 = vector.broadcast %19 : vector<1x128xf32> to vector<16x128xf32>
    %21 = arith.select %16, %18, %20 : vector<16x128xi1>, vector<16x128xf32>
    %c0_10 = arith.constant 0 : index
    %c0_11 = arith.constant 0 : index
    %22 = vector.load %arg5[%c0_10, %c0_11] : memref<16x128xf32, #tpu.memory_space<vmem>>, vector<8x128xf32>
    %23 = vector.shape_cast %9 : vector<16x128xf32> to vector<2x8x128xf32>
    %24 = vector.shape_cast %22 : vector<8x128xf32> to vector<1x8x128xf32>
    %25 = vector.broadcast %24 : vector<1x8x128xf32> to vector<2x8x128xf32>
    %26 = arith.addf %23, %25 : vector<2x8x128xf32>
    %27 = vector.shape_cast %21 : vector<16x128xf32> to vector<2x8x128xf32>
    %28 = arith.addf %26, %27 : vector<2x8x128xf32>
    %29 = vector.shape_cast %28 : vector<2x8x128xf32> to vector<16x128xf32>
    %c0_12 = arith.constant 0 : index
    %c0_13 = arith.constant 0 : index
    %30 = vector.load %arg7[%c0_12, %c0_13] : memref<1x128xf32, #tpu.memory_space<vmem>>, vector<1x128xf32>
    %c0_14 = arith.constant 0 : index
    %c0_15 = arith.constant 0 : index
    %31 = vector.load %arg8[%c0_14, %c0_15] : memref<1x128xf32, #tpu.memory_space<vmem>>, vector<1x128xf32>
    %cst_16 = arith.constant dense<0.000000e+00> : vector<16xf32>
    %32 = vector.multi_reduction <add>, %29, %cst_16 [1] : vector<16x128xf32> to vector<16xf32>
    %33 = vector.shape_cast %32 : vector<16xf32> to vector<16x1xf32>
    %cst_17 = arith.constant 1.280000e+02 : f32
    %34 = vector.broadcast %cst_17 : f32 to vector<16x1xf32>
    %35 = arith.divf %33, %34 : vector<16x1xf32>
    %36 = vector.broadcast %35 : vector<16x1xf32> to vector<16x128xf32>
    %37 = arith.subf %29, %36 : vector<16x128xf32>
    %38 = arith.mulf %37, %37 : vector<16x128xf32>
    %cst_18 = arith.constant dense<0.000000e+00> : vector<16xf32>
    %39 = vector.multi_reduction <add>, %38, %cst_18 [1] : vector<16x128xf32> to vector<16xf32>
    %40 = vector.shape_cast %39 : vector<16xf32> to vector<16x1xf32>
    %cst_19 = arith.constant 1.280000e+02 : f32
    %41 = vector.broadcast %cst_19 : f32 to vector<16x1xf32>
    %42 = arith.divf %40, %41 : vector<16x1xf32>
    %43 = vector.broadcast %35 : vector<16x1xf32> to vector<16x128xf32>
    %44 = arith.subf %29, %43 : vector<16x128xf32>
    %cst_20 = arith.constant 9.99999996E-13 : f32
    %45 = vector.broadcast %cst_20 : f32 to vector<16x1xf32>
    %46 = arith.addf %42, %45 : vector<16x1xf32>
    %47 = math.rsqrt %46 : vector<16x1xf32>
    %48 = vector.broadcast %47 : vector<16x1xf32> to vector<16x128xf32>
    %49 = arith.mulf %44, %48 : vector<16x128xf32>
    %50 = vector.broadcast %30 : vector<1x128xf32> to vector<16x128xf32>
    %51 = arith.mulf %49, %50 : vector<16x128xf32>
    %52 = vector.broadcast %31 : vector<1x128xf32> to vector<16x128xf32>
    %53 = arith.addf %51, %52 : vector<16x128xf32>
    %c0_21 = arith.constant 0 : index
    %c0_22 = arith.constant 0 : index
    %54 = vector.load %arg1[%c0_21, %c0_22] : memref<2x8xf32, #tpu.memory_space<vmem>>, vector<2x8xf32>
    %cst_23 = arith.constant 1.000000e+00 : f32
    %55 = vector.broadcast %cst_23 : f32 to vector<2x8xf32>
    %56 = arith.subf %55, %54 : vector<2x8xf32>
    %cst_24 = arith.constant -1.000000e+09 : f32
    %57 = vector.broadcast %cst_24 : f32 to vector<2x8xf32>
    %58 = arith.mulf %56, %57 : vector<2x8xf32>
    %59 = arith.truncf %53 : vector<16x128xf32> to vector<16x128xbf16>
    %c0_25 = arith.constant 0 : index
    %c0_26 = arith.constant 0 : index
    %c0_27 = arith.constant 0 : index
    %60 = vector.load %arg11[%c0_25, %c0_26, %c0_27] : memref<2x128x384xbf16, #tpu.memory_space<vmem>>, vector<1x128x384xbf16>
    %61 = vector.shape_cast %60 : vector<1x128x384xbf16> to vector<128x384xbf16>
    %cst_28 = arith.constant dense<0.000000e+00> : vector<16x384xf32>
    %62 = tpu.matmul %59, %61, %cst_28 {dimension_numbers = #tpu.dot_dimension_numbers<[1], [0], [0], [1], [0, 0, 1, 1], [], []>} : vector<16x128xbf16>, vector<128x384xbf16>, vector<16x384xf32> -> vector<16x384xf32>
    %c0_29 = arith.constant 0 : index
    %c0_30 = arith.constant 0 : index
    %c0_31 = arith.constant 0 : index
    %63 = vector.load %arg12[%c0_29, %c0_30, %c0_31] : memref<2x1x384xf32, #tpu.memory_space<vmem>>, vector<1x1x384xf32>
    %64 = vector.shape_cast %63 : vector<1x1x384xf32> to vector<1x384xf32>
    %65 = vector.broadcast %64 : vector<1x384xf32> to vector<16x384xf32>
    %66 = arith.addf %62, %65 : vector<16x384xf32>
    %67 = vector.extract_strided_slice %66 {offsets = [0, 0], sizes = [16, 128], strides = [1, 1]} : vector<16x384xf32> to vector<16x128xf32>
    %68 = vector.shape_cast %67 : vector<16x128xf32> to vector<2x8x128xf32>
    %69 = vector.extract_strided_slice %66 {offsets = [0, 128], sizes = [16, 128], strides = [1, 1]} : vector<16x384xf32> to vector<16x128xf32>
    %70 = vector.shape_cast %69 : vector<16x128xf32> to vector<2x8x128xf32>
    %71 = vector.extract_strided_slice %66 {offsets = [0, 256], sizes = [16, 128], strides = [1, 1]} : vector<16x384xf32> to vector<16x128xf32>
    %72 = vector.shape_cast %71 : vector<16x128xf32> to vector<2x8x128xf32>
    %c0_32 = arith.constant 0 : index
    %c0_33 = arith.constant 0 : index
    %c0_34 = arith.constant 0 : index
    %73 = vector.load %arg13[%c0_32, %c0_33, %c0_34] : memref<2x128x128xbf16, #tpu.memory_space<vmem>>, vector<1x128x128xbf16>
    %74 = vector.shape_cast %73 : vector<1x128x128xbf16> to vector<128x128xbf16>
    %75 = vector.extract_strided_slice %68 {offsets = [0, 0, 0], sizes = [2, 8, 64], strides = [1, 1, 1]} : vector<2x8x128xf32> to vector<2x8x64xf32>
    %76 = arith.truncf %75 : vector<2x8x64xf32> to vector<2x8x64xbf16>
    %77 = vector.extract_strided_slice %70 {offsets = [0, 0, 0], sizes = [2, 8, 64], strides = [1, 1, 1]} : vector<2x8x128xf32> to vector<2x8x64xf32>
    %78 = arith.truncf %77 : vector<2x8x64xf32> to vector<2x8x64xbf16>
    %79 = vector.extract_strided_slice %72 {offsets = [0, 0, 0], sizes = [2, 8, 64], strides = [1, 1, 1]} : vector<2x8x128xf32> to vector<2x8x64xf32>
    %80 = arith.truncf %79 : vector<2x8x64xf32> to vector<2x8x64xbf16>
    "tpu.trace_start"() <{level = 10 : i32, message = "bqd,bkd->bqk"}> : () -> ()
    %cst_35 = arith.constant dense<0.000000e+00> : vector<2x8x8xf32>
    %81 = tpu.matmul %76, %78, %cst_35 {dimension_numbers = #tpu.dot_dimension_numbers<[2], [2], [1], [1], [0, 0, 0, 1, 1, 1], [0], [0]>} : vector<2x8x64xbf16>, vector<2x8x64xbf16>, vector<2x8x8xf32> -> vector<2x8x8xf32>
    "tpu.trace_stop"() : () -> ()
    %cst_36 = arith.constant 1.250000e-01 : f32
    %82 = vector.broadcast %cst_36 : f32 to vector<2x8x8xf32>
    %83 = arith.mulf %81, %82 : vector<2x8x8xf32>
    %84 = vector.shape_cast %58 : vector<2x8xf32> to vector<2x1x8xf32>
    %85 = vector.broadcast %84 : vector<2x1x8xf32> to vector<2x8x8xf32>
    %86 = arith.addf %83, %85 : vector<2x8x8xf32>
    %cst_37 = arith.constant dense<0xFF800000> : vector<2x8xf32>
    %87 = vector.multi_reduction <maximumf>, %86, %cst_37 [2] : vector<2x8x8xf32> to vector<2x8xf32>
    %88 = vector.shape_cast %87 : vector<2x8xf32> to vector<2x8x1xf32>
    %89 = vector.broadcast %88 : vector<2x8x1xf32> to vector<2x8x8xf32>
    %90 = arith.subf %86, %89 : vector<2x8x8xf32>
    %91 = math.exp %90 : vector<2x8x8xf32>
    %cst_38 = arith.constant dense<0.000000e+00> : vector<2x8xf32>
    %92 = vector.multi_reduction <add>, %91, %cst_38 [2] : vector<2x8x8xf32> to vector<2x8xf32>
    %93 = vector.shape_cast %92 : vector<2x8xf32> to vector<2x8x1xf32>
    %94 = tpu.reciprocal %93 {approx = true} : vector<2x8x1xf32> -> vector<2x8x1xf32>
    %95 = vector.broadcast %94 : vector<2x8x1xf32> to vector<2x8x8xf32>
    %96 = arith.mulf %91, %95 : vector<2x8x8xf32>
    %97 = arith.truncf %96 : vector<2x8x8xf32> to vector<2x8x8xbf16>
    "tpu.trace_start"() <{level = 10 : i32, message = "bqk,bkd->bqd"}> : () -> ()
    %cst_39 = arith.constant dense<0.000000e+00> : vector<2x8x64xf32>
    %98 = tpu.matmul %97, %80, %cst_39 {dimension_numbers = #tpu.dot_dimension_numbers<[2], [1], [1], [2], [0, 0, 0, 1, 1, 2], [0], [0]>} : vector<2x8x8xbf16>, vector<2x8x64xbf16>, vector<2x8x64xf32> -> vector<2x8x64xf32>
    "tpu.trace_stop"() : () -> ()
    %99 = vector.shape_cast %98 : vector<2x8x64xf32> to vector<16x64xf32>
    %100 = arith.truncf %99 : vector<16x64xf32> to vector<16x64xbf16>
    %101 = vector.extract_strided_slice %74 {offsets = [0, 0], sizes = [64, 128], strides = [1, 1]} : vector<128x128xbf16> to vector<64x128xbf16>
    %cst_40 = arith.constant dense<0.000000e+00> : vector<16x128xf32>
    %102 = tpu.matmul %100, %101, %cst_40 {dimension_numbers = #tpu.dot_dimension_numbers<[1], [0], [0], [1], [0, 0, 1, 1], [], []>} : vector<16x64xbf16>, vector<64x128xbf16>, vector<16x128xf32> -> vector<16x128xf32>
    %103 = vector.extract_strided_slice %68 {offsets = [0, 0, 64], sizes = [2, 8, 64], strides = [1, 1, 1]} : vector<2x8x128xf32> to vector<2x8x64xf32>
    %104 = arith.truncf %103 : vector<2x8x64xf32> to vector<2x8x64xbf16>
    %105 = vector.extract_strided_slice %70 {offsets = [0, 0, 64], sizes = [2, 8, 64], strides = [1, 1, 1]} : vector<2x8x128xf32> to vector<2x8x64xf32>
    %106 = arith.truncf %105 : vector<2x8x64xf32> to vector<2x8x64xbf16>
    %107 = vector.extract_strided_slice %72 {offsets = [0, 0, 64], sizes = [2, 8, 64], strides = [1, 1, 1]} : vector<2x8x128xf32> to vector<2x8x64xf32>
    %108 = arith.truncf %107 : vector<2x8x64xf32> to vector<2x8x64xbf16>
    "tpu.trace_start"() <{level = 10 : i32, message = "bqd,bkd->bqk"}> : () -> ()
    %cst_41 = arith.constant dense<0.000000e+00> : vector<2x8x8xf32>
    %109 = tpu.matmul %104, %106, %cst_41 {dimension_numbers = #tpu.dot_dimension_numbers<[2], [2], [1], [1], [0, 0, 0, 1, 1, 1], [0], [0]>} : vector<2x8x64xbf16>, vector<2x8x64xbf16>, vector<2x8x8xf32> -> vector<2x8x8xf32>
    "tpu.trace_stop"() : () -> ()
    %cst_42 = arith.constant 1.250000e-01 : f32
    %110 = vector.broadcast %cst_42 : f32 to vector<2x8x8xf32>
    %111 = arith.mulf %109, %110 : vector<2x8x8xf32>
    %112 = vector.shape_cast %58 : vector<2x8xf32> to vector<2x1x8xf32>
    %113 = vector.broadcast %112 : vector<2x1x8xf32> to vector<2x8x8xf32>
    %114 = arith.addf %111, %113 : vector<2x8x8xf32>
    %cst_43 = arith.constant dense<0xFF800000> : vector<2x8xf32>
    %115 = vector.multi_reduction <maximumf>, %114, %cst_43 [2] : vector<2x8x8xf32> to vector<2x8xf32>
    %116 = vector.shape_cast %115 : vector<2x8xf32> to vector<2x8x1xf32>
    %117 = vector.broadcast %116 : vector<2x8x1xf32> to vector<2x8x8xf32>
    %118 = arith.subf %114, %117 : vector<2x8x8xf32>
    %119 = math.exp %118 : vector<2x8x8xf32>
    %cst_44 = arith.constant dense<0.000000e+00> : vector<2x8xf32>
    %120 = vector.multi_reduction <add>, %119, %cst_44 [2] : vector<2x8x8xf32> to vector<2x8xf32>
    %121 = vector.shape_cast %120 : vector<2x8xf32> to vector<2x8x1xf32>
    %122 = tpu.reciprocal %121 {approx = true} : vector<2x8x1xf32> -> vector<2x8x1xf32>
    %123 = vector.broadcast %122 : vector<2x8x1xf32> to vector<2x8x8xf32>
    %124 = arith.mulf %119, %123 : vector<2x8x8xf32>
    %125 = arith.truncf %124 : vector<2x8x8xf32> to vector<2x8x8xbf16>
    "tpu.trace_start"() <{level = 10 : i32, message = "bqk,bkd->bqd"}> : () -> ()
    %cst_45 = arith.constant dense<0.000000e+00> : vector<2x8x64xf32>
    %126 = tpu.matmul %125, %108, %cst_45 {dimension_numbers = #tpu.dot_dimension_numbers<[2], [1], [1], [2], [0, 0, 0, 1, 1, 2], [0], [0]>} : vector<2x8x8xbf16>, vector<2x8x64xbf16>, vector<2x8x64xf32> -> vector<2x8x64xf32>
    "tpu.trace_stop"() : () -> ()
    %127 = vector.shape_cast %126 : vector<2x8x64xf32> to vector<16x64xf32>
    %128 = arith.truncf %127 : vector<16x64xf32> to vector<16x64xbf16>
    %129 = vector.extract_strided_slice %74 {offsets = [64, 0], sizes = [64, 128], strides = [1, 1]} : vector<128x128xbf16> to vector<64x128xbf16>
    %cst_46 = arith.constant dense<0.000000e+00> : vector<16x128xf32>
    %130 = tpu.matmul %128, %129, %cst_46 {dimension_numbers = #tpu.dot_dimension_numbers<[1], [0], [0], [1], [0, 0, 1, 1], [], []>} : vector<16x64xbf16>, vector<64x128xbf16>, vector<16x128xf32> -> vector<16x128xf32>
    %131 = arith.addf %102, %130 : vector<16x128xf32>
    %c0_47 = arith.constant 0 : index
    %c0_48 = arith.constant 0 : index
    %c0_49 = arith.constant 0 : index
    %132 = vector.load %arg14[%c0_47, %c0_48, %c0_49] : memref<2x1x128xf32, #tpu.memory_space<vmem>>, vector<1x1x128xf32>
    %133 = vector.shape_cast %132 : vector<1x1x128xf32> to vector<1x128xf32>
    %134 = vector.broadcast %133 : vector<1x128xf32> to vector<16x128xf32>
    %135 = arith.addf %131, %134 : vector<16x128xf32>
    %136 = arith.addf %53, %135 : vector<16x128xf32>
    %c0_50 = arith.constant 0 : index
    %c0_51 = arith.constant 0 : index
    %c0_52 = arith.constant 0 : index
    %137 = vector.load %arg15[%c0_50, %c0_51, %c0_52] : memref<2x1x128xf32, #tpu.memory_space<vmem>>, vector<1x1x128xf32>
    %138 = vector.shape_cast %137 : vector<1x1x128xf32> to vector<1x128xf32>
    %c0_53 = arith.constant 0 : index
    %c0_54 = arith.constant 0 : index
    %c0_55 = arith.constant 0 : index
    %139 = vector.load %arg16[%c0_53, %c0_54, %c0_55] : memref<2x1x128xf32, #tpu.memory_space<vmem>>, vector<1x1x128xf32>
    %140 = vector.shape_cast %139 : vector<1x1x128xf32> to vector<1x128xf32>
    %cst_56 = arith.constant dense<0.000000e+00> : vector<16xf32>
    %141 = vector.multi_reduction <add>, %136, %cst_56 [1] : vector<16x128xf32> to vector<16xf32>
    %142 = vector.shape_cast %141 : vector<16xf32> to vector<16x1xf32>
    %cst_57 = arith.constant 1.280000e+02 : f32
    %143 = vector.broadcast %cst_57 : f32 to vector<16x1xf32>
    %144 = arith.divf %142, %143 : vector<16x1xf32>
    %145 = vector.broadcast %144 : vector<16x1xf32> to vector<16x128xf32>
    %146 = arith.subf %136, %145 : vector<16x128xf32>
    %147 = arith.mulf %146, %146 : vector<16x128xf32>
    %cst_58 = arith.constant dense<0.000000e+00> : vector<16xf32>
    %148 = vector.multi_reduction <add>, %147, %cst_58 [1] : vector<16x128xf32> to vector<16xf32>
    %149 = vector.shape_cast %148 : vector<16xf32> to vector<16x1xf32>
    %cst_59 = arith.constant 1.280000e+02 : f32
    %150 = vector.broadcast %cst_59 : f32 to vector<16x1xf32>
    %151 = arith.divf %149, %150 : vector<16x1xf32>
    %152 = vector.broadcast %144 : vector<16x1xf32> to vector<16x128xf32>
    %153 = arith.subf %136, %152 : vector<16x128xf32>
    %cst_60 = arith.constant 9.99999996E-13 : f32
    %154 = vector.broadcast %cst_60 : f32 to vector<16x1xf32>
    %155 = arith.addf %151, %154 : vector<16x1xf32>
    %156 = math.rsqrt %155 : vector<16x1xf32>
    %157 = vector.broadcast %156 : vector<16x1xf32> to vector<16x128xf32>
    %158 = arith.mulf %153, %157 : vector<16x128xf32>
    %159 = vector.broadcast %138 : vector<1x128xf32> to vector<16x128xf32>
    %160 = arith.mulf %158, %159 : vector<16x128xf32>
    %161 = vector.broadcast %140 : vector<1x128xf32> to vector<16x128xf32>
    %162 = arith.addf %160, %161 : vector<16x128xf32>
    %163 = arith.truncf %162 : vector<16x128xf32> to vector<16x128xbf16>
    %c0_61 = arith.constant 0 : index
    %c0_62 = arith.constant 0 : index
    %c0_63 = arith.constant 0 : index
    %164 = vector.load %arg17[%c0_61, %c0_62, %c0_63] : memref<2x128x256xbf16, #tpu.memory_space<vmem>>, vector<1x128x256xbf16>
    %165 = vector.shape_cast %164 : vector<1x128x256xbf16> to vector<128x256xbf16>
    %cst_64 = arith.constant dense<0.000000e+00> : vector<16x256xf32>
    %166 = tpu.matmul %163, %165, %cst_64 {dimension_numbers = #tpu.dot_dimension_numbers<[1], [0], [0], [1], [0, 0, 1, 1], [], []>} : vector<16x128xbf16>, vector<128x256xbf16>, vector<16x256xf32> -> vector<16x256xf32>
    %c0_65 = arith.constant 0 : index
    %c0_66 = arith.constant 0 : index
    %c0_67 = arith.constant 0 : index
    %167 = vector.load %arg18[%c0_65, %c0_66, %c0_67] : memref<2x1x256xf32, #tpu.memory_space<vmem>>, vector<1x1x256xf32>
    %168 = vector.shape_cast %167 : vector<1x1x256xf32> to vector<1x256xf32>
    %169 = vector.broadcast %168 : vector<1x256xf32> to vector<16x256xf32>
    %170 = arith.addf %166, %169 : vector<16x256xf32>
    %171 = arith.mulf %170, %170 : vector<16x256xf32>
    %172 = arith.mulf %170, %171 : vector<16x256xf32>
    %cst_68 = arith.constant 4.471500e-02 : f32
    %173 = vector.broadcast %cst_68 : f32 to vector<16x256xf32>
    %174 = arith.mulf %173, %172 : vector<16x256xf32>
    %175 = arith.addf %170, %174 : vector<16x256xf32>
    %cst_69 = arith.constant 0.797884583 : f32
    %176 = vector.broadcast %cst_69 : f32 to vector<16x256xf32>
    %177 = arith.mulf %176, %175 : vector<16x256xf32>
    %178 = math.tanh %177 : vector<16x256xf32>
    %cst_70 = arith.constant 1.000000e+00 : f32
    %179 = vector.broadcast %cst_70 : f32 to vector<16x256xf32>
    %180 = arith.addf %179, %178 : vector<16x256xf32>
    %cst_71 = arith.constant 5.000000e-01 : f32
    %181 = vector.broadcast %cst_71 : f32 to vector<16x256xf32>
    %182 = arith.mulf %181, %180 : vector<16x256xf32>
    %183 = arith.mulf %170, %182 : vector<16x256xf32>
    %184 = arith.truncf %183 : vector<16x256xf32> to vector<16x256xbf16>
    %c0_72 = arith.constant 0 : index
    %c0_73 = arith.constant 0 : index
    %c0_74 = arith.constant 0 : index
    %185 = vector.load %arg19[%c0_72, %c0_73, %c0_74] : memref<2x256x128xbf16, #tpu.memory_space<vmem>>, vector<1x256x128xbf16>
    %186 = vector.shape_cast %185 : vector<1x256x128xbf16> to vector<256x128xbf16>
    %cst_75 = arith.constant dense<0.000000e+00> : vector<16x128xf32>
    %187 = tpu.matmul %184, %186, %cst_75 {dimension_numbers = #tpu.dot_dimension_numbers<[1], [0], [0], [1], [0, 0, 1, 1], [], []>} : vector<16x256xbf16>, vector<256x128xbf16>, vector<16x128xf32> -> vector<16x128xf32>
    %c0_76 = arith.constant 0 : index
    %c0_77 = arith.constant 0 : index
    %c0_78 = arith.constant 0 : index
    %188 = vector.load %arg20[%c0_76, %c0_77, %c0_78] : memref<2x1x128xf32, #tpu.memory_space<vmem>>, vector<1x1x128xf32>
    %189 = vector.shape_cast %188 : vector<1x1x128xf32> to vector<1x128xf32>
    %190 = vector.broadcast %189 : vector<1x128xf32> to vector<16x128xf32>
    %191 = arith.addf %187, %190 : vector<16x128xf32>
    %192 = arith.addf %162, %191 : vector<16x128xf32>
    %c0_79 = arith.constant 0 : index
    %c0_80 = arith.constant 0 : index
    %c0_81 = arith.constant 0 : index
    %193 = vector.load %arg21[%c0_79, %c0_80, %c0_81] : memref<2x1x128xf32, #tpu.memory_space<vmem>>, vector<1x1x128xf32>
    %194 = vector.shape_cast %193 : vector<1x1x128xf32> to vector<1x128xf32>
    %c0_82 = arith.constant 0 : index
    %c0_83 = arith.constant 0 : index
    %c0_84 = arith.constant 0 : index
    %195 = vector.load %arg22[%c0_82, %c0_83, %c0_84] : memref<2x1x128xf32, #tpu.memory_space<vmem>>, vector<1x1x128xf32>
    %196 = vector.shape_cast %195 : vector<1x1x128xf32> to vector<1x128xf32>
    %cst_85 = arith.constant dense<0.000000e+00> : vector<16xf32>
    %197 = vector.multi_reduction <add>, %192, %cst_85 [1] : vector<16x128xf32> to vector<16xf32>
    %198 = vector.shape_cast %197 : vector<16xf32> to vector<16x1xf32>
    %cst_86 = arith.constant 1.280000e+02 : f32
    %199 = vector.broadcast %cst_86 : f32 to vector<16x1xf32>
    %200 = arith.divf %198, %199 : vector<16x1xf32>
    %201 = vector.broadcast %200 : vector<16x1xf32> to vector<16x128xf32>
    %202 = arith.subf %192, %201 : vector<16x128xf32>
    %203 = arith.mulf %202, %202 : vector<16x128xf32>
    %cst_87 = arith.constant dense<0.000000e+00> : vector<16xf32>
    %204 = vector.multi_reduction <add>, %203, %cst_87 [1] : vector<16x128xf32> to vector<16xf32>
    %205 = vector.shape_cast %204 : vector<16xf32> to vector<16x1xf32>
    %cst_88 = arith.constant 1.280000e+02 : f32
    %206 = vector.broadcast %cst_88 : f32 to vector<16x1xf32>
    %207 = arith.divf %205, %206 : vector<16x1xf32>
    %208 = vector.broadcast %200 : vector<16x1xf32> to vector<16x128xf32>
    %209 = arith.subf %192, %208 : vector<16x128xf32>
    %cst_89 = arith.constant 9.99999996E-13 : f32
    %210 = vector.broadcast %cst_89 : f32 to vector<16x1xf32>
    %211 = arith.addf %207, %210 : vector<16x1xf32>
    %212 = math.rsqrt %211 : vector<16x1xf32>
    %213 = vector.broadcast %212 : vector<16x1xf32> to vector<16x128xf32>
    %214 = arith.mulf %209, %213 : vector<16x128xf32>
    %215 = vector.broadcast %194 : vector<1x128xf32> to vector<16x128xf32>
    %216 = arith.mulf %214, %215 : vector<16x128xf32>
    %217 = vector.broadcast %196 : vector<1x128xf32> to vector<16x128xf32>
    %218 = arith.addf %216, %217 : vector<16x128xf32>
    %219 = arith.truncf %218 : vector<16x128xf32> to vector<16x128xbf16>
    %c1_90 = arith.constant 1 : index
    %c0_91 = arith.constant 0 : index
    %c0_92 = arith.constant 0 : index
    %220 = vector.load %arg11[%c1_90, %c0_91, %c0_92] : memref<2x128x384xbf16, #tpu.memory_space<vmem>>, vector<1x128x384xbf16>
    %221 = vector.shape_cast %220 : vector<1x128x384xbf16> to vector<128x384xbf16>
    %cst_93 = arith.constant dense<0.000000e+00> : vector<16x384xf32>
    %222 = tpu.matmul %219, %221, %cst_93 {dimension_numbers = #tpu.dot_dimension_numbers<[1], [0], [0], [1], [0, 0, 1, 1], [], []>} : vector<16x128xbf16>, vector<128x384xbf16>, vector<16x384xf32> -> vector<16x384xf32>
    %c1_94 = arith.constant 1 : index
    %c0_95 = arith.constant 0 : index
    %c0_96 = arith.constant 0 : index
    %223 = vector.load %arg12[%c1_94, %c0_95, %c0_96] : memref<2x1x384xf32, #tpu.memory_space<vmem>>, vector<1x1x384xf32>
    %224 = vector.shape_cast %223 : vector<1x1x384xf32> to vector<1x384xf32>
    %225 = vector.broadcast %224 : vector<1x384xf32> to vector<16x384xf32>
    %226 = arith.addf %222, %225 : vector<16x384xf32>
    %227 = vector.extract_strided_slice %226 {offsets = [0, 0], sizes = [16, 128], strides = [1, 1]} : vector<16x384xf32> to vector<16x128xf32>
    %228 = vector.shape_cast %227 : vector<16x128xf32> to vector<2x8x128xf32>
    %229 = vector.extract_strided_slice %226 {offsets = [0, 128], sizes = [16, 128], strides = [1, 1]} : vector<16x384xf32> to vector<16x128xf32>
    %230 = vector.shape_cast %229 : vector<16x128xf32> to vector<2x8x128xf32>
    %231 = vector.extract_strided_slice %226 {offsets = [0, 256], sizes = [16, 128], strides = [1, 1]} : vector<16x384xf32> to vector<16x128xf32>
    %232 = vector.shape_cast %231 : vector<16x128xf32> to vector<2x8x128xf32>
    %c1_97 = arith.constant 1 : index
    %c0_98 = arith.constant 0 : index
    %c0_99 = arith.constant 0 : index
    %233 = vector.load %arg13[%c1_97, %c0_98, %c0_99] : memref<2x128x128xbf16, #tpu.memory_space<vmem>>, vector<1x128x128xbf16>
    %234 = vector.shape_cast %233 : vector<1x128x128xbf16> to vector<128x128xbf16>
    %235 = vector.extract_strided_slice %228 {offsets = [0, 0, 0], sizes = [2, 8, 64], strides = [1, 1, 1]} : vector<2x8x128xf32> to vector<2x8x64xf32>
    %236 = arith.truncf %235 : vector<2x8x64xf32> to vector<2x8x64xbf16>
    %237 = vector.extract_strided_slice %230 {offsets = [0, 0, 0], sizes = [2, 8, 64], strides = [1, 1, 1]} : vector<2x8x128xf32> to vector<2x8x64xf32>
    %238 = arith.truncf %237 : vector<2x8x64xf32> to vector<2x8x64xbf16>
    %239 = vector.extract_strided_slice %232 {offsets = [0, 0, 0], sizes = [2, 8, 64], strides = [1, 1, 1]} : vector<2x8x128xf32> to vector<2x8x64xf32>
    %240 = arith.truncf %239 : vector<2x8x64xf32> to vector<2x8x64xbf16>
    "tpu.trace_start"() <{level = 10 : i32, message = "bqd,bkd->bqk"}> : () -> ()
    %cst_100 = arith.constant dense<0.000000e+00> : vector<2x8x8xf32>
    %241 = tpu.matmul %236, %238, %cst_100 {dimension_numbers = #tpu.dot_dimension_numbers<[2], [2], [1], [1], [0, 0, 0, 1, 1, 1], [0], [0]>} : vector<2x8x64xbf16>, vector<2x8x64xbf16>, vector<2x8x8xf32> -> vector<2x8x8xf32>
    "tpu.trace_stop"() : () -> ()
    %cst_101 = arith.constant 1.250000e-01 : f32
    %242 = vector.broadcast %cst_101 : f32 to vector<2x8x8xf32>
    %243 = arith.mulf %241, %242 : vector<2x8x8xf32>
    %244 = vector.shape_cast %58 : vector<2x8xf32> to vector<2x1x8xf32>
    %245 = vector.broadcast %244 : vector<2x1x8xf32> to vector<2x8x8xf32>
    %246 = arith.addf %243, %245 : vector<2x8x8xf32>
    %cst_102 = arith.constant dense<0xFF800000> : vector<2x8xf32>
    %247 = vector.multi_reduction <maximumf>, %246, %cst_102 [2] : vector<2x8x8xf32> to vector<2x8xf32>
    %248 = vector.shape_cast %247 : vector<2x8xf32> to vector<2x8x1xf32>
    %249 = vector.broadcast %248 : vector<2x8x1xf32> to vector<2x8x8xf32>
    %250 = arith.subf %246, %249 : vector<2x8x8xf32>
    %251 = math.exp %250 : vector<2x8x8xf32>
    %cst_103 = arith.constant dense<0.000000e+00> : vector<2x8xf32>
    %252 = vector.multi_reduction <add>, %251, %cst_103 [2] : vector<2x8x8xf32> to vector<2x8xf32>
    %253 = vector.shape_cast %252 : vector<2x8xf32> to vector<2x8x1xf32>
    %254 = tpu.reciprocal %253 {approx = true} : vector<2x8x1xf32> -> vector<2x8x1xf32>
    %255 = vector.broadcast %254 : vector<2x8x1xf32> to vector<2x8x8xf32>
    %256 = arith.mulf %251, %255 : vector<2x8x8xf32>
    %257 = arith.truncf %256 : vector<2x8x8xf32> to vector<2x8x8xbf16>
    "tpu.trace_start"() <{level = 10 : i32, message = "bqk,bkd->bqd"}> : () -> ()
    %cst_104 = arith.constant dense<0.000000e+00> : vector<2x8x64xf32>
    %258 = tpu.matmul %257, %240, %cst_104 {dimension_numbers = #tpu.dot_dimension_numbers<[2], [1], [1], [2], [0, 0, 0, 1, 1, 2], [0], [0]>} : vector<2x8x8xbf16>, vector<2x8x64xbf16>, vector<2x8x64xf32> -> vector<2x8x64xf32>
    "tpu.trace_stop"() : () -> ()
    %259 = vector.shape_cast %258 : vector<2x8x64xf32> to vector<16x64xf32>
    %260 = arith.truncf %259 : vector<16x64xf32> to vector<16x64xbf16>
    %261 = vector.extract_strided_slice %234 {offsets = [0, 0], sizes = [64, 128], strides = [1, 1]} : vector<128x128xbf16> to vector<64x128xbf16>
    %cst_105 = arith.constant dense<0.000000e+00> : vector<16x128xf32>
    %262 = tpu.matmul %260, %261, %cst_105 {dimension_numbers = #tpu.dot_dimension_numbers<[1], [0], [0], [1], [0, 0, 1, 1], [], []>} : vector<16x64xbf16>, vector<64x128xbf16>, vector<16x128xf32> -> vector<16x128xf32>
    %263 = vector.extract_strided_slice %228 {offsets = [0, 0, 64], sizes = [2, 8, 64], strides = [1, 1, 1]} : vector<2x8x128xf32> to vector<2x8x64xf32>
    %264 = arith.truncf %263 : vector<2x8x64xf32> to vector<2x8x64xbf16>
    %265 = vector.extract_strided_slice %230 {offsets = [0, 0, 64], sizes = [2, 8, 64], strides = [1, 1, 1]} : vector<2x8x128xf32> to vector<2x8x64xf32>
    %266 = arith.truncf %265 : vector<2x8x64xf32> to vector<2x8x64xbf16>
    %267 = vector.extract_strided_slice %232 {offsets = [0, 0, 64], sizes = [2, 8, 64], strides = [1, 1, 1]} : vector<2x8x128xf32> to vector<2x8x64xf32>
    %268 = arith.truncf %267 : vector<2x8x64xf32> to vector<2x8x64xbf16>
    "tpu.trace_start"() <{level = 10 : i32, message = "bqd,bkd->bqk"}> : () -> ()
    %cst_106 = arith.constant dense<0.000000e+00> : vector<2x8x8xf32>
    %269 = tpu.matmul %264, %266, %cst_106 {dimension_numbers = #tpu.dot_dimension_numbers<[2], [2], [1], [1], [0, 0, 0, 1, 1, 1], [0], [0]>} : vector<2x8x64xbf16>, vector<2x8x64xbf16>, vector<2x8x8xf32> -> vector<2x8x8xf32>
    "tpu.trace_stop"() : () -> ()
    %cst_107 = arith.constant 1.250000e-01 : f32
    %270 = vector.broadcast %cst_107 : f32 to vector<2x8x8xf32>
    %271 = arith.mulf %269, %270 : vector<2x8x8xf32>
    %272 = vector.shape_cast %58 : vector<2x8xf32> to vector<2x1x8xf32>
    %273 = vector.broadcast %272 : vector<2x1x8xf32> to vector<2x8x8xf32>
    %274 = arith.addf %271, %273 : vector<2x8x8xf32>
    %cst_108 = arith.constant dense<0xFF800000> : vector<2x8xf32>
    %275 = vector.multi_reduction <maximumf>, %274, %cst_108 [2] : vector<2x8x8xf32> to vector<2x8xf32>
    %276 = vector.shape_cast %275 : vector<2x8xf32> to vector<2x8x1xf32>
    %277 = vector.broadcast %276 : vector<2x8x1xf32> to vector<2x8x8xf32>
    %278 = arith.subf %274, %277 : vector<2x8x8xf32>
    %279 = math.exp %278 : vector<2x8x8xf32>
    %cst_109 = arith.constant dense<0.000000e+00> : vector<2x8xf32>
    %280 = vector.multi_reduction <add>, %279, %cst_109 [2] : vector<2x8x8xf32> to vector<2x8xf32>
    %281 = vector.shape_cast %280 : vector<2x8xf32> to vector<2x8x1xf32>
    %282 = tpu.reciprocal %281 {approx = true} : vector<2x8x1xf32> -> vector<2x8x1xf32>
    %283 = vector.broadcast %282 : vector<2x8x1xf32> to vector<2x8x8xf32>
    %284 = arith.mulf %279, %283 : vector<2x8x8xf32>
    %285 = arith.truncf %284 : vector<2x8x8xf32> to vector<2x8x8xbf16>
    "tpu.trace_start"() <{level = 10 : i32, message = "bqk,bkd->bqd"}> : () -> ()
    %cst_110 = arith.constant dense<0.000000e+00> : vector<2x8x64xf32>
    %286 = tpu.matmul %285, %268, %cst_110 {dimension_numbers = #tpu.dot_dimension_numbers<[2], [1], [1], [2], [0, 0, 0, 1, 1, 2], [0], [0]>} : vector<2x8x8xbf16>, vector<2x8x64xbf16>, vector<2x8x64xf32> -> vector<2x8x64xf32>
    "tpu.trace_stop"() : () -> ()
    %287 = vector.shape_cast %286 : vector<2x8x64xf32> to vector<16x64xf32>
    %288 = arith.truncf %287 : vector<16x64xf32> to vector<16x64xbf16>
    %289 = vector.extract_strided_slice %234 {offsets = [64, 0], sizes = [64, 128], strides = [1, 1]} : vector<128x128xbf16> to vector<64x128xbf16>
    %cst_111 = arith.constant dense<0.000000e+00> : vector<16x128xf32>
    %290 = tpu.matmul %288, %289, %cst_111 {dimension_numbers = #tpu.dot_dimension_numbers<[1], [0], [0], [1], [0, 0, 1, 1], [], []>} : vector<16x64xbf16>, vector<64x128xbf16>, vector<16x128xf32> -> vector<16x128xf32>
    %291 = arith.addf %262, %290 : vector<16x128xf32>
    %c1_112 = arith.constant 1 : index
    %c0_113 = arith.constant 0 : index
    %c0_114 = arith.constant 0 : index
    %292 = vector.load %arg14[%c1_112, %c0_113, %c0_114] : memref<2x1x128xf32, #tpu.memory_space<vmem>>, vector<1x1x128xf32>
    %293 = vector.shape_cast %292 : vector<1x1x128xf32> to vector<1x128xf32>
    %294 = vector.broadcast %293 : vector<1x128xf32> to vector<16x128xf32>
    %295 = arith.addf %291, %294 : vector<16x128xf32>
    %296 = arith.addf %218, %295 : vector<16x128xf32>
    %c1_115 = arith.constant 1 : index
    %c0_116 = arith.constant 0 : index
    %c0_117 = arith.constant 0 : index
    %297 = vector.load %arg15[%c1_115, %c0_116, %c0_117] : memref<2x1x128xf32, #tpu.memory_space<vmem>>, vector<1x1x128xf32>
    %298 = vector.shape_cast %297 : vector<1x1x128xf32> to vector<1x128xf32>
    %c1_118 = arith.constant 1 : index
    %c0_119 = arith.constant 0 : index
    %c0_120 = arith.constant 0 : index
    %299 = vector.load %arg16[%c1_118, %c0_119, %c0_120] : memref<2x1x128xf32, #tpu.memory_space<vmem>>, vector<1x1x128xf32>
    %300 = vector.shape_cast %299 : vector<1x1x128xf32> to vector<1x128xf32>
    %cst_121 = arith.constant dense<0.000000e+00> : vector<16xf32>
    %301 = vector.multi_reduction <add>, %296, %cst_121 [1] : vector<16x128xf32> to vector<16xf32>
    %302 = vector.shape_cast %301 : vector<16xf32> to vector<16x1xf32>
    %cst_122 = arith.constant 1.280000e+02 : f32
    %303 = vector.broadcast %cst_122 : f32 to vector<16x1xf32>
    %304 = arith.divf %302, %303 : vector<16x1xf32>
    %305 = vector.broadcast %304 : vector<16x1xf32> to vector<16x128xf32>
    %306 = arith.subf %296, %305 : vector<16x128xf32>
    %307 = arith.mulf %306, %306 : vector<16x128xf32>
    %cst_123 = arith.constant dense<0.000000e+00> : vector<16xf32>
    %308 = vector.multi_reduction <add>, %307, %cst_123 [1] : vector<16x128xf32> to vector<16xf32>
    %309 = vector.shape_cast %308 : vector<16xf32> to vector<16x1xf32>
    %cst_124 = arith.constant 1.280000e+02 : f32
    %310 = vector.broadcast %cst_124 : f32 to vector<16x1xf32>
    %311 = arith.divf %309, %310 : vector<16x1xf32>
    %312 = vector.broadcast %304 : vector<16x1xf32> to vector<16x128xf32>
    %313 = arith.subf %296, %312 : vector<16x128xf32>
    %cst_125 = arith.constant 9.99999996E-13 : f32
    %314 = vector.broadcast %cst_125 : f32 to vector<16x1xf32>
    %315 = arith.addf %311, %314 : vector<16x1xf32>
    %316 = math.rsqrt %315 : vector<16x1xf32>
    %317 = vector.broadcast %316 : vector<16x1xf32> to vector<16x128xf32>
    %318 = arith.mulf %313, %317 : vector<16x128xf32>
    %319 = vector.broadcast %298 : vector<1x128xf32> to vector<16x128xf32>
    %320 = arith.mulf %318, %319 : vector<16x128xf32>
    %321 = vector.broadcast %300 : vector<1x128xf32> to vector<16x128xf32>
    %322 = arith.addf %320, %321 : vector<16x128xf32>
    %323 = arith.truncf %322 : vector<16x128xf32> to vector<16x128xbf16>
    %c1_126 = arith.constant 1 : index
    %c0_127 = arith.constant 0 : index
    %c0_128 = arith.constant 0 : index
    %324 = vector.load %arg17[%c1_126, %c0_127, %c0_128] : memref<2x128x256xbf16, #tpu.memory_space<vmem>>, vector<1x128x256xbf16>
    %325 = vector.shape_cast %324 : vector<1x128x256xbf16> to vector<128x256xbf16>
    %cst_129 = arith.constant dense<0.000000e+00> : vector<16x256xf32>
    %326 = tpu.matmul %323, %325, %cst_129 {dimension_numbers = #tpu.dot_dimension_numbers<[1], [0], [0], [1], [0, 0, 1, 1], [], []>} : vector<16x128xbf16>, vector<128x256xbf16>, vector<16x256xf32> -> vector<16x256xf32>
    %c1_130 = arith.constant 1 : index
    %c0_131 = arith.constant 0 : index
    %c0_132 = arith.constant 0 : index
    %327 = vector.load %arg18[%c1_130, %c0_131, %c0_132] : memref<2x1x256xf32, #tpu.memory_space<vmem>>, vector<1x1x256xf32>
    %328 = vector.shape_cast %327 : vector<1x1x256xf32> to vector<1x256xf32>
    %329 = vector.broadcast %328 : vector<1x256xf32> to vector<16x256xf32>
    %330 = arith.addf %326, %329 : vector<16x256xf32>
    %331 = arith.mulf %330, %330 : vector<16x256xf32>
    %332 = arith.mulf %330, %331 : vector<16x256xf32>
    %cst_133 = arith.constant 4.471500e-02 : f32
    %333 = vector.broadcast %cst_133 : f32 to vector<16x256xf32>
    %334 = arith.mulf %333, %332 : vector<16x256xf32>
    %335 = arith.addf %330, %334 : vector<16x256xf32>
    %cst_134 = arith.constant 0.797884583 : f32
    %336 = vector.broadcast %cst_134 : f32 to vector<16x256xf32>
    %337 = arith.mulf %336, %335 : vector<16x256xf32>
    %338 = math.tanh %337 : vector<16x256xf32>
    %cst_135 = arith.constant 1.000000e+00 : f32
    %339 = vector.broadcast %cst_135 : f32 to vector<16x256xf32>
    %340 = arith.addf %339, %338 : vector<16x256xf32>
    %cst_136 = arith.constant 5.000000e-01 : f32
    %341 = vector.broadcast %cst_136 : f32 to vector<16x256xf32>
    %342 = arith.mulf %341, %340 : vector<16x256xf32>
    %343 = arith.mulf %330, %342 : vector<16x256xf32>
    %344 = arith.truncf %343 : vector<16x256xf32> to vector<16x256xbf16>
    %c1_137 = arith.constant 1 : index
    %c0_138 = arith.constant 0 : index
    %c0_139 = arith.constant 0 : index
    %345 = vector.load %arg19[%c1_137, %c0_138, %c0_139] : memref<2x256x128xbf16, #tpu.memory_space<vmem>>, vector<1x256x128xbf16>
    %346 = vector.shape_cast %345 : vector<1x256x128xbf16> to vector<256x128xbf16>
    %cst_140 = arith.constant dense<0.000000e+00> : vector<16x128xf32>
    %347 = tpu.matmul %344, %346, %cst_140 {dimension_numbers = #tpu.dot_dimension_numbers<[1], [0], [0], [1], [0, 0, 1, 1], [], []>} : vector<16x256xbf16>, vector<256x128xbf16>, vector<16x128xf32> -> vector<16x128xf32>
    %c1_141 = arith.constant 1 : index
    %c0_142 = arith.constant 0 : index
    %c0_143 = arith.constant 0 : index
    %348 = vector.load %arg20[%c1_141, %c0_142, %c0_143] : memref<2x1x128xf32, #tpu.memory_space<vmem>>, vector<1x1x128xf32>
    %349 = vector.shape_cast %348 : vector<1x1x128xf32> to vector<1x128xf32>
    %350 = vector.broadcast %349 : vector<1x128xf32> to vector<16x128xf32>
    %351 = arith.addf %347, %350 : vector<16x128xf32>
    %352 = arith.addf %322, %351 : vector<16x128xf32>
    %c1_144 = arith.constant 1 : index
    %c0_145 = arith.constant 0 : index
    %c0_146 = arith.constant 0 : index
    %353 = vector.load %arg21[%c1_144, %c0_145, %c0_146] : memref<2x1x128xf32, #tpu.memory_space<vmem>>, vector<1x1x128xf32>
    %354 = vector.shape_cast %353 : vector<1x1x128xf32> to vector<1x128xf32>
    %c1_147 = arith.constant 1 : index
    %c0_148 = arith.constant 0 : index
    %c0_149 = arith.constant 0 : index
    %355 = vector.load %arg22[%c1_147, %c0_148, %c0_149] : memref<2x1x128xf32, #tpu.memory_space<vmem>>, vector<1x1x128xf32>
    %356 = vector.shape_cast %355 : vector<1x1x128xf32> to vector<1x128xf32>
    %cst_150 = arith.constant dense<0.000000e+00> : vector<16xf32>
    %357 = vector.multi_reduction <add>, %352, %cst_150 [1] : vector<16x128xf32> to vector<16xf32>
    %358 = vector.shape_cast %357 : vector<16xf32> to vector<16x1xf32>
    %cst_151 = arith.constant 1.280000e+02 : f32
    %359 = vector.broadcast %cst_151 : f32 to vector<16x1xf32>
    %360 = arith.divf %358, %359 : vector<16x1xf32>
    %361 = vector.broadcast %360 : vector<16x1xf32> to vector<16x128xf32>
    %362 = arith.subf %352, %361 : vector<16x128xf32>
    %363 = arith.mulf %362, %362 : vector<16x128xf32>
    %cst_152 = arith.constant dense<0.000000e+00> : vector<16xf32>
    %364 = vector.multi_reduction <add>, %363, %cst_152 [1] : vector<16x128xf32> to vector<16xf32>
    %365 = vector.shape_cast %364 : vector<16xf32> to vector<16x1xf32>
    %cst_153 = arith.constant 1.280000e+02 : f32
    %366 = vector.broadcast %cst_153 : f32 to vector<16x1xf32>
    %367 = arith.divf %365, %366 : vector<16x1xf32>
    %368 = vector.broadcast %360 : vector<16x1xf32> to vector<16x128xf32>
    %369 = arith.subf %352, %368 : vector<16x128xf32>
    %cst_154 = arith.constant 9.99999996E-13 : f32
    %370 = vector.broadcast %cst_154 : f32 to vector<16x1xf32>
    %371 = arith.addf %367, %370 : vector<16x1xf32>
    %372 = math.rsqrt %371 : vector<16x1xf32>
    %373 = vector.broadcast %372 : vector<16x1xf32> to vector<16x128xf32>
    %374 = arith.mulf %369, %373 : vector<16x128xf32>
    %375 = vector.broadcast %354 : vector<1x128xf32> to vector<16x128xf32>
    %376 = arith.mulf %374, %375 : vector<16x128xf32>
    %377 = vector.broadcast %356 : vector<1x128xf32> to vector<16x128xf32>
    %378 = arith.addf %376, %377 : vector<16x128xf32>
    %379 = vector.extract_strided_slice %378 {offsets = [0, 0], sizes = [1, 128], strides = [1, 1]} : vector<16x128xf32> to vector<1x128xf32>
    %380 = vector.extract_strided_slice %378 {offsets = [8, 0], sizes = [1, 128], strides = [1, 1]} : vector<16x128xf32> to vector<1x128xf32>
    %381 = tpu.concatenate %379, %380 in 0 : vector<1x128xf32>, vector<1x128xf32> -> vector<2x128xf32>
    %c0_155 = arith.constant 0 : index
    %c0_156 = arith.constant 0 : index
    %382 = vector.load %arg9[%c0_155, %c0_156] : memref<128x1xf32, #tpu.memory_space<vmem>>, vector<128x1xf32>
    %cst_157 = arith.constant dense<0.000000e+00> : vector<2x1xf32>
    %383 = tpu.matmul %381, %382, %cst_157 {dimension_numbers = #tpu.dot_dimension_numbers<[1], [0], [0], [1], [0, 0, 1, 1], [], []>} : vector<2x128xf32>, vector<128x1xf32>, vector<2x1xf32> -> vector<2x1xf32>
    %c0_158 = arith.constant 0 : index
    %c0_159 = arith.constant 0 : index
    %384 = vector.load %arg10[%c0_158, %c0_159] : memref<1x1xf32, #tpu.memory_space<vmem>>, vector<1x1xf32>
    %385 = vector.broadcast %384 : vector<1x1xf32> to vector<2x1xf32>
    %386 = arith.addf %383, %385 : vector<2x1xf32>
    %387 = vector.shape_cast %386 : vector<2x1xf32> to vector<2x1xf32>
    %388 = vector.broadcast %387 : vector<2x1xf32> to vector<2x128xf32>
    %c0_160 = arith.constant 0 : index
    %c0_161 = arith.constant 0 : index
    %389 = vector.load %arg23[%c0_160, %c0_161] : memref<2x128xf32, #tpu.memory_space<vmem>>, vector<2x128xf32>
    tpu.vector_store %arg23[%c0_160, %c0_161], %388 {strides = array<i32>} : memref<2x128xf32, #tpu.memory_space<vmem>>, vector<2x128xf32>,
    %c0_162 = arith.constant 0 : index
    %c0_163 = arith.constant 0 : index
    %390 = vector.load %arg3[%c0_162, %c0_163] : memref<2x1xf32, #tpu.memory_space<vmem>>, vector<2x1xf32>
    %cst_164 = arith.constant 0.000000e+00 : f32
    %391 = vector.broadcast %cst_164 : f32 to vector<2x1xf32>
    %392 = arith.maximumf %386, %391 : vector<2x1xf32>
    %393 = arith.mulf %386, %390 : vector<2x1xf32>
    %394 = arith.subf %392, %393 : vector<2x1xf32>
    %395 = math.absf %386 : vector<2x1xf32>
    %cst_165 = arith.constant 0.000000e+00 : f32
    %396 = vector.broadcast %cst_165 : f32 to vector<2x1xf32>
    %397 = arith.subf %396, %395 : vector<2x1xf32>
    %398 = math.exp %397 : vector<2x1xf32>
    %399 = math.log1p %398 : vector<2x1xf32>
    %400 = arith.addf %394, %399 : vector<2x1xf32>
    %401 = vector.shape_cast %400 : vector<2x1xf32> to vector<1x2x1xf32>
    %cst_166 = arith.constant dense<0.000000e+00> : vector<1xf32>
    %402 = vector.multi_reduction <add>, %401, %cst_166 [1, 2] : vector<1x2x1xf32> to vector<1xf32>
    %403 = vector.shape_cast %402 : vector<1xf32> to vector<1x1x1xf32>
    %404 = vector.extract %403[0, 0, 0] : f32 from vector<1x1x1xf32>
    %cst_167 = arith.constant 2.000000e+00 : f32
    %405 = arith.divf %404, %cst_167 : f32
    %406 = vector.broadcast %405 : f32 to vector<1x1xf32>
    %407 = vector.shape_cast %406 : vector<1x1xf32> to vector<1x1xf32>
    %408 = vector.broadcast %407 : vector<1x1xf32> to vector<1x128xf32>
    %c0_168 = arith.constant 0 : index
    %c0_169 = arith.constant 0 : index
    %409 = vector.load %arg24[%c0_168, %c0_169] : memref<1x128xf32, #tpu.memory_space<vmem>>, vector<1x128xf32>
    tpu.vector_store %arg24[%c0_168, %c0_169], %408 {strides = array<i32>} : memref<1x128xf32, #tpu.memory_space<vmem>>, vector<1x128xf32>,
    return
  }
}

</mosaic_0001>

<llo_original>
// kernel: tpu_custom_call.1
$region0: #{tpu_custom_call.1}
  #allocation0 [shape = 'u32[]', space=smem, size = 0x4, offset = 0x4, fixed_abs, tag = 'smem constant byte address 0x4 - core index']
  #allocation1 [shape = 'u32[144,128]{1,0:T(1,128)}', space=vmem, size = 0x12000, scoped, tag = 'internal scratch']
  #allocation2 [shape = 'f32[1,1]{1,0:T(1,128)S(1)}', space=vmem, size = 0x200, scoped, tag = 'scoped memory for tpu_custom_call.1']
  %s0 = inlined_call_operand.vmem [shape: s32[16,1], index: 0, kind: input, shape index: {}]
  %s1 = inlined_call_operand.hbm [shape: f32[2,8], index: 1, kind: input, shape index: {}]
  %s2 = inlined_call_operand.vmem [shape: s32[16,1], index: 2, kind: input, shape index: {}]
  %s3 = inlined_call_operand.vmem [shape: f32[2,1], index: 3, kind: input, shape index: {}]
  %s4 = inlined_call_operand.vmem [shape: bf16[128,128], index: 4, kind: input, shape index: {}]
  %s5 = inlined_call_operand.vmem [shape: f32[16,128], index: 5, kind: input, shape index: {}]
  %s6 = inlined_call_operand.hbm [shape: f32[2,128], index: 6, kind: input, shape index: {}]
  %s7 = inlined_call_operand.vmem [shape: f32[1,128], index: 7, kind: input, shape index: {}]
  %s8 = inlined_call_operand.hbm [shape: f32[1,128], index: 8, kind: input, shape index: {}]
  %s9 = inlined_call_operand.vmem [shape: f32[128,1], index: 9, kind: input, shape index: {}]
  %s10 = inlined_call_operand.<no memory space> [shape: f32[1,1], index: 10, kind: input, shape index: {}]
  %s11 = inlined_call_operand.hbm [shape: bf16[2,128,384], index: 11, kind: input, shape index: {}]
  %s12 = inlined_call_operand.vmem [shape: f32[2,1,384], index: 12, kind: input, shape index: {}]
  %s13 = inlined_call_operand.vmem [shape: bf16[2,128,128], index: 13, kind: input, shape index: {}]
  %s14 = inlined_call_operand.hbm [shape: f32[2,1,128], index: 14, kind: input, shape index: {}]
  %s15 = inlined_call_operand.vmem [shape: f32[2,1,128], index: 15, kind: input, shape index: {}]
  %s16 = inlined_call_operand.vmem [shape: f32[2,1,128], index: 16, kind: input, shape index: {}]
  %s17 = inlined_call_operand.hbm [shape: bf16[2,128,256], index: 17, kind: input, shape index: {}]
  %s18 = inlined_call_operand.vmem [shape: f32[2,1,256], index: 18, kind: input, shape index: {}]
  %s19 = inlined_call_operand.hbm [shape: bf16[2,256,128], index: 19, kind: input, shape index: {}]
  %s20 = inlined_call_operand.vmem [shape: f32[2,1,128], index: 20, kind: input, shape index: {}]
  %s21 = inlined_call_operand.vmem [shape: f32[2,1,128], index: 21, kind: input, shape index: {}]
  %s22 = inlined_call_operand.vmem [shape: f32[2,1,128], index: 22, kind: input, shape index: {}]
  %s23 = inlined_call_operand.hbm [shape: f32[2,128], index: 23, kind: output, shape index: {0}]
  %s24 = inlined_call_operand.hbm [shape: f32[1,128], index: 24, kind: output, shape index: {1}]
  %25 = xla_tuple %s23, %s24
  %s26 = sld [smem:[#allocation0]]
  $region138: #{tpu_custom_call.1} parent=0
    _
  %s28 = ssub.s32 1, %s26
  %s29 = scalar_select 0, %s28, %s26
  %v30 = vstv %s10
  %31 = vst [vmem:[#allocation2] sm:$0x1] %v30
  $region1: #{tpu_custom_call.1} parent=0
    #allocation3 [shape = 'u8[1024]{0}', space=vmem, size = 0x400, scoped, tag = 'input window, operand 1, single buffered']
    #allocation4 [shape = 's32[1]{0}', space=sflag, size = 0x4, scoped, tag = 'scoped memory for tpu_custom_call.1']
    #allocation5 [shape = 's32[1]{0}', space=sflag, size = 0x4, scoped, tag = 'scoped memory for tpu_custom_call.1']
    #allocation6 [shape = 'u8[1024]{0}', space=vmem, size = 0x400, scoped, tag = 'input window, operand 6, single buffered']
    #allocation7 [shape = 's32[1]{0}', space=sflag, size = 0x4, scoped, tag = 'scoped memory for tpu_custom_call.1']
    #allocation8 [shape = 'u8[512]{0}', space=vmem, size = 0x400, scoped, tag = 'input window, operand 8, single buffered']
    #allocation9 [shape = 'u8[196608]{0}', space=vmem, size = 0x30000, scoped, tag = 'input window, operand 11, single buffered']
    #allocation10 [shape = 's32[1]{0}', space=sflag, size = 0x4, scoped, tag = 'scoped memory for tpu_custom_call.1']
    #allocation11 [shape = 'u8[1024]{0}', space=vmem, size = 0x400, scoped, tag = 'input window, operand 14, single buffered']
    #allocation12 [shape = 'u8[131072]{0}', space=vmem, size = 0x20000, scoped, tag = 'input window, operand 17, single buffered']
    #allocation13 [shape = 's32[1]{0}', space=sflag, size = 0x4, scoped, tag = 'scoped memory for tpu_custom_call.1']
    #allocation14 [shape = 'u8[131072]{0}', space=vmem, size = 0x20000, scoped, tag = 'input window, operand 19, single buffered']
    #allocation15 [shape = 'u8[1024]{0}', space=vmem, size = 0x400, scoped, tag = 'output window, operand 0, single buffered']
    #allocation16 [shape = 'u8[512]{0}', space=vmem, size = 0x400, scoped, tag = 'output window, operand 1, single buffered']
    #allocation17 [shape = 's32[1]{0}', space=sflag, size = 0x4, scoped, tag = 'scoped memory for tpu_custom_call.1']
    %32 = vsyncpa [#allocation4], 0
    %33 = vsyncpa [#allocation7], 0
    %34 = vsyncpa [#allocation10], 0
    %35 = vsyncpa [#allocation13], 0
    %36 = vsyncpa [#allocation5], 0
    %37 = vsyncpa [#allocation17], 0
    // Predicated region
    $region2: #{tpu_custom_call.1} parent=1 // pred_check
      _
    $region3: #{tpu_custom_call.1} parent=1 // pred_check_branch
      %39 = sbr.rel (0) target = $region5
    $region4: #{tpu_custom_call.1} parent=1 // pred_region
      _
    $region5: #{tpu_custom_call.1} parent=1 // pred_fallthru
      _
    // Predicated region
    $region6: #{tpu_custom_call.1} parent=1 // pred_check
      _
    $region7: #{tpu_custom_call.1} parent=1 // pred_check_branch
      %41 = sbr.rel (0) target = $region9
    $region8: #{tpu_custom_call.1} parent=1 // pred_region
      %s43 = ssub.s32 32, 32
      %44 = vsyncadd [#allocation4], %s43
      %s46 = sshll.u32 [#allocation3], 4
      %s47 = int_to_ptr.vmem [resolvable:$true] %s46
      %49 = dma.hbm_to_vmem [thread:$0]  %s1, 32, %s47, [#allocation4]
    $region9: #{tpu_custom_call.1} parent=1 // pred_fallthru
      _
    // Predicated region
    $region10: #{tpu_custom_call.1} parent=1 // pred_check
      _
    $region11: #{tpu_custom_call.1} parent=1 // pred_check_branch
      %51 = sbr.rel (0) target = $region13
    $region12: #{tpu_custom_call.1} parent=1 // pred_region
      _
    $region13: #{tpu_custom_call.1} parent=1 // pred_fallthru
      _
    // Predicated region
    $region14: #{tpu_custom_call.1} parent=1 // pred_check
      _
    $region15: #{tpu_custom_call.1} parent=1 // pred_check_branch
      %53 = sbr.rel (0) target = $region17
    $region16: #{tpu_custom_call.1} parent=1 // pred_region
      _
    $region17: #{tpu_custom_call.1} parent=1 // pred_fallthru
      _
    // Predicated region
    $region18: #{tpu_custom_call.1} parent=1 // pred_check
      _
    $region19: #{tpu_custom_call.1} parent=1 // pred_check_branch
      %55 = sbr.rel (0) target = $region21
    $region20: #{tpu_custom_call.1} parent=1 // pred_region
      _
    $region21: #{tpu_custom_call.1} parent=1 // pred_fallthru
      _
    // Predicated region
    $region22: #{tpu_custom_call.1} parent=1 // pred_check
      _
    $region23: #{tpu_custom_call.1} parent=1 // pred_check_branch
      %57 = sbr.rel (0) target = $region25
    $region24: #{tpu_custom_call.1} parent=1 // pred_region
      _
    $region25: #{tpu_custom_call.1} parent=1 // pred_fallthru
      _
    // Predicated region
    $region26: #{tpu_custom_call.1} parent=1 // pred_check
      _
    $region27: #{tpu_custom_call.1} parent=1 // pred_check_branch
      %59 = sbr.rel (0) target = $region29
    $region28: #{tpu_custom_call.1} parent=1 // pred_region
      %s61 = ssub.s32 32, 32
      %62 = vsyncadd [#allocation7], %s61
      %s64 = sshll.u32 [#allocation6], 4
      %s65 = int_to_ptr.vmem [resolvable:$true] %s64
      %67 = dma.hbm_to_vmem [thread:$0]  %s6, 32, %s65, [#allocation7]
    $region29: #{tpu_custom_call.1} parent=1 // pred_fallthru
      _
    // Predicated region
    $region30: #{tpu_custom_call.1} parent=1 // pred_check
      _
    $region31: #{tpu_custom_call.1} parent=1 // pred_check_branch
      %69 = sbr.rel (0) target = $region33
    $region32: #{tpu_custom_call.1} parent=1 // pred_region
      _
    $region33: #{tpu_custom_call.1} parent=1 // pred_fallthru
      _
    // Predicated region
    $region34: #{tpu_custom_call.1} parent=1 // pred_check
      _
    $region35: #{tpu_custom_call.1} parent=1 // pred_check_branch
      %71 = sbr.rel (0) target = $region37
    $region36: #{tpu_custom_call.1} parent=1 // pred_region
      %s73 = ssub.s32 16, 16
      %74 = vsyncadd [#allocation7], %s73
      %s76 = sshll.u32 [#allocation8], 4
      %s77 = int_to_ptr.vmem [resolvable:$true] %s76
      %79 = dma.hbm_to_vmem [thread:$0]  %s8, 16, %s77, [#allocation7]
    $region37: #{tpu_custom_call.1} parent=1 // pred_fallthru
      _
    // Predicated region
    $region38: #{tpu_custom_call.1} parent=1 // pred_check
      _
    $region39: #{tpu_custom_call.1} parent=1 // pred_check_branch
      %81 = sbr.rel (0) target = $region41
    $region40: #{tpu_custom_call.1} parent=1 // pred_region
      _
    $region41: #{tpu_custom_call.1} parent=1 // pred_fallthru
      _
    // Predicated region
    $region42: #{tpu_custom_call.1} parent=1 // pred_check
      _
    $region43: #{tpu_custom_call.1} parent=1 // pred_check_branch
      %83 = sbr.rel (0) target = $region45
    $region44: #{tpu_custom_call.1} parent=1 // pred_region
      _
    $region45: #{tpu_custom_call.1} parent=1 // pred_fallthru
      _
    // Predicated region
    $region46: #{tpu_custom_call.1} parent=1 // pred_check
      _
    $region47: #{tpu_custom_call.1} parent=1 // pred_check_branch
      %85 = sbr.rel (0) target = $region49
    $region48: #{tpu_custom_call.1} parent=1 // pred_region
      %s87 = ssub.s32 6144, 6144
      %88 = vsyncadd [#allocation10], %s87
      %s89 = sshll.u32 [#allocation9], 4
      %s90 = int_to_ptr.vmem [resolvable:$true] %s89
      %95 = dma.hbm_to_vmem [thread:$0]  %s11, 6144, %s90, [#allocation10], 192, 192, 12
    $region49: #{tpu_custom_call.1} parent=1 // pred_fallthru
      _
    // Predicated region
    $region50: #{tpu_custom_call.1} parent=1 // pred_check
      _
    $region51: #{tpu_custom_call.1} parent=1 // pred_check_branch
      %97 = sbr.rel (0) target = $region53
    $region52: #{tpu_custom_call.1} parent=1 // pred_region
      _
    $region53: #{tpu_custom_call.1} parent=1 // pred_fallthru
      _
    // Predicated region
    $region54: #{tpu_custom_call.1} parent=1 // pred_check
      _
    $region55: #{tpu_custom_call.1} parent=1 // pred_check_branch
      %99 = sbr.rel (0) target = $region57
    $region56: #{tpu_custom_call.1} parent=1 // pred_region
      _
    $region57: #{tpu_custom_call.1} parent=1 // pred_fallthru
      _
    // Predicated region
    $region58: #{tpu_custom_call.1} parent=1 // pred_check
      _
    $region59: #{tpu_custom_call.1} parent=1 // pred_check_branch
      %101 = sbr.rel (0) target = $region61
    $region60: #{tpu_custom_call.1} parent=1 // pred_region
      %s103 = ssub.s32 32, 32
      %104 = vsyncadd [#allocation10], %s103
      %s105 = sshll.u32 [#allocation11], 4
      %s106 = int_to_ptr.vmem [resolvable:$true] %s105
      %111 = dma.hbm_to_vmem [thread:$0]  %s14, 32, %s106, [#allocation10], 16, 16, 1
    $region61: #{tpu_custom_call.1} parent=1 // pred_fallthru
      _
    // Predicated region
    $region62: #{tpu_custom_call.1} parent=1 // pred_check
      _
    $region63: #{tpu_custom_call.1} parent=1 // pred_check_branch
      %113 = sbr.rel (0) target = $region65
    $region64: #{tpu_custom_call.1} parent=1 // pred_region
      _
    $region65: #{tpu_custom_call.1} parent=1 // pred_fallthru
      _
    // Predicated region
    $region66: #{tpu_custom_call.1} parent=1 // pred_check
      _
    $region67: #{tpu_custom_call.1} parent=1 // pred_check_branch
      %115 = sbr.rel (0) target = $region69
    $region68: #{tpu_custom_call.1} parent=1 // pred_region
      _
    $region69: #{tpu_custom_call.1} parent=1 // pred_fallthru
      _
    // Predicated region
    $region70: #{tpu_custom_call.1} parent=1 // pred_check
      _
    $region71: #{tpu_custom_call.1} parent=1 // pred_check_branch
      %117 = sbr.rel (0) target = $region73
    $region72: #{tpu_custom_call.1} parent=1 // pred_region
      %s119 = ssub.s32 4096, 4096
      %120 = vsyncadd [#allocation13], %s119
      %s121 = sshll.u32 [#allocation12], 4
      %s122 = int_to_ptr.vmem [resolvable:$true] %s121
      %127 = dma.hbm_to_vmem [thread:$0]  %s17, 4096, %s122, [#allocation13], 128, 128, 8
    $region73: #{tpu_custom_call.1} parent=1 // pred_fallthru
      _
    // Predicated region
    $region74: #{tpu_custom_call.1} parent=1 // pred_check
      _
    $region75: #{tpu_custom_call.1} parent=1 // pred_check_branch
      %129 = sbr.rel (0) target = $region77
    $region76: #{tpu_custom_call.1} parent=1 // pred_region
      _
    $region77: #{tpu_custom_call.1} parent=1 // pred_fallthru
      _
    // Predicated region
    $region78: #{tpu_custom_call.1} parent=1 // pred_check
      _
    $region79: #{tpu_custom_call.1} parent=1 // pred_check_branch
      %131 = sbr.rel (0) target = $region81
    $region80: #{tpu_custom_call.1} parent=1 // pred_region
      %s133 = ssub.s32 4096, 4096
      %134 = vsyncadd [#allocation13], %s133
      %s135 = sshll.u32 [#allocation14], 4
      %s136 = int_to_ptr.vmem [resolvable:$true] %s135
      %141 = dma.hbm_to_vmem [thread:$0]  %s19, 4096, %s136, [#allocation13], 64, 64, 4
    $region81: #{tpu_custom_call.1} parent=1 // pred_fallthru
      _
    // Predicated region
    $region82: #{tpu_custom_call.1} parent=1 // pred_check
      _
    $region83: #{tpu_custom_call.1} parent=1 // pred_check_branch
      %143 = sbr.rel (0) target = $region85
    $region84: #{tpu_custom_call.1} parent=1 // pred_region
      _
    $region85: #{tpu_custom_call.1} parent=1 // pred_fallthru
      _
    // Predicated region
    $region86: #{tpu_custom_call.1} parent=1 // pred_check
      _
    $region87: #{tpu_custom_call.1} parent=1 // pred_check_branch
      %145 = sbr.rel (0) target = $region89
    $region88: #{tpu_custom_call.1} parent=1 // pred_region
      _
    $region89: #{tpu_custom_call.1} parent=1 // pred_fallthru
      _
    // Predicated region
    $region90: #{tpu_custom_call.1} parent=1 // pred_check
      _
    $region91: #{tpu_custom_call.1} parent=1 // pred_check_branch
      %147 = sbr.rel (0) target = $region93
    $region92: #{tpu_custom_call.1} parent=1 // pred_region
      _
    $region93: #{tpu_custom_call.1} parent=1 // pred_fallthru
      _
    // Predicated region
    $region94: #{tpu_custom_call.1} parent=1 // pred_check
      _
    $region95: #{tpu_custom_call.1} parent=1 // pred_check_branch
      %149 = sbr.rel (0) target = $region97
    $region96: #{tpu_custom_call.1} parent=1 // pred_region
      %150 = dma.done [#allocation4], 32
    $region97: #{tpu_custom_call.1} parent=1 // pred_fallthru
      _
    // Predicated region
    $region98: #{tpu_custom_call.1} parent=1 // pred_check
      _
    $region99: #{tpu_custom_call.1} parent=1 // pred_check_branch
      %152 = sbr.rel (0) target = $region101
    $region100: #{tpu_custom_call.1} parent=1 // pred_region
      %153 = dma.done [#allocation7], 32
    $region101: #{tpu_custom_call.1} parent=1 // pred_fallthru
      _
    // Predicated region
    $region102: #{tpu_custom_call.1} parent=1 // pred_check
      _
    $region103: #{tpu_custom_call.1} parent=1 // pred_check_branch
      %155 = sbr.rel (0) target = $region105
    $region104: #{tpu_custom_call.1} parent=1 // pred_region
      %156 = dma.done [#allocation7], 16
    $region105: #{tpu_custom_call.1} parent=1 // pred_fallthru
      _
    // Predicated region
    $region106: #{tpu_custom_call.1} parent=1 // pred_check
      _
    $region107: #{tpu_custom_call.1} parent=1 // pred_check_branch
      %158 = sbr.rel (0) target = $region109
    $region108: #{tpu_custom_call.1} parent=1 // pred_region
      %159 = dma.done [#allocation10], 6144
    $region109: #{tpu_custom_call.1} parent=1 // pred_fallthru
      _
    // Predicated region
    $region110: #{tpu_custom_call.1} parent=1 // pred_check
      _
    $region111: #{tpu_custom_call.1} parent=1 // pred_check_branch
      %161 = sbr.rel (0) target = $region113
    $region112: #{tpu_custom_call.1} parent=1 // pred_region
      %162 = dma.done [#allocation10], 32
    $region113: #{tpu_custom_call.1} parent=1 // pred_fallthru
      _
    // Predicated region
    $region114: #{tpu_custom_call.1} parent=1 // pred_check
      _
    $region115: #{tpu_custom_call.1} parent=1 // pred_check_branch
      %164 = sbr.rel (0) target = $region117
    $region116: #{tpu_custom_call.1} parent=1 // pred_region
      %165 = dma.done [#allocation13], 4096
    $region117: #{tpu_custom_call.1} parent=1 // pred_fallthru
      _
    // Predicated region
    $region118: #{tpu_custom_call.1} parent=1 // pred_check
      _
    $region119: #{tpu_custom_call.1} parent=1 // pred_check_branch
      %167 = sbr.rel (0) target = $region121
    $region120: #{tpu_custom_call.1} parent=1 // pred_region
      %168 = dma.done [#allocation13], 4096
    $region121: #{tpu_custom_call.1} parent=1 // pred_fallthru
      _
    %v170 = vld [vmem:[%s0] sm:$0xff]
    %v171 = vld [vmem:[%s0 + $0x8] sm:$0xff]
    %v172 = vlaneseq
    %v173 = vand.u32 %v172, 127
    %174 = vset.pattern.permute.xlu0 0
    %175 = vperm.xlu0 %174, %v170
    %v176 = vpop.permute.xlu0 %175
    %177 = vset.pattern.permute.xlu0 0
    %178 = vperm.xlu0 %177, %v171
    %v179 = vpop.permute.xlu0 %178
    %vm180 = vcmp.eq.s32.totalorder %v173, %v176
    %vm181 = vcmp.eq.s32.totalorder %v173, %v179
    %v182 = vsel %vm180, 1.0, 0.0
    %v183 = vsel %vm181, 1.0, 0.0
    %v184 = vpack.c.bf16 %v183, %v182
    %v185 = vld [vmem:[%s4] sm:$0xf]
    %v186 = vld [vmem:[%s4 + $0x4] sm:$0xf]
    %v187 = vld [vmem:[%s4 + $0x8] sm:$0xf]
    %v188 = vld [vmem:[%s4 + $0xc] sm:$0xf]
    %v189 = vld [vmem:[%s4 + $0x10] sm:$0xf]
    %v190 = vld [vmem:[%s4 + $0x14] sm:$0xf]
    %v191 = vld [vmem:[%s4 + $0x18] sm:$0xf]
    %v192 = vld [vmem:[%s4 + $0x1c] sm:$0xf]
    %v193 = vld [vmem:[%s4 + $0x20] sm:$0xf]
    %v194 = vld [vmem:[%s4 + $0x24] sm:$0xf]
    %v195 = vld [vmem:[%s4 + $0x28] sm:$0xf]
    %v196 = vld [vmem:[%s4 + $0x2c] sm:$0xf]
    %v197 = vld [vmem:[%s4 + $0x30] sm:$0xf]
    %v198 = vld [vmem:[%s4 + $0x34] sm:$0xf]
    %v199 = vld [vmem:[%s4 + $0x38] sm:$0xf]
    %v200 = vld [vmem:[%s4 + $0x3c] sm:$0xf]
    %v217 = vunpack.c.l.b16 %v185
    %v218 = vunpack.c.l.b16 %v186
    %v219 = vunpack.c.l.b16 %v187
    %v220 = vunpack.c.l.b16 %v188
    %v221 = vunpack.c.l.b16 %v189
    %v222 = vunpack.c.l.b16 %v190
    %v223 = vunpack.c.l.b16 %v191
    %v224 = vunpack.c.l.b16 %v192
    %v225 = vunpack.c.l.b16 %v193
    %v226 = vunpack.c.l.b16 %v194
    %v227 = vunpack.c.l.b16 %v195
    %v228 = vunpack.c.l.b16 %v196
    %v229 = vunpack.c.l.b16 %v197
    %v230 = vunpack.c.l.b16 %v198
    %v231 = vunpack.c.l.b16 %v199
    %v232 = vunpack.c.l.b16 %v200
    %v233 = vpack.c.b16 %v218, %v217
    %v234 = vpack.c.b16 %v220, %v219
    %v235 = vpack.c.b16 %v222, %v221
    %v236 = vpack.c.b16 %v224, %v223
    %v237 = vpack.c.b16 %v226, %v225
    %v238 = vpack.c.b16 %v228, %v227
    %v239 = vpack.c.b16 %v230, %v229
    %v240 = vpack.c.b16 %v232, %v231
    %249 = vmatprep.subr.bf16.mxu0 0
    %250 = vmatpush1.bf16.msra.mxu0 %v233
    %251 = vmatprep.subr.bf16.mxu0 0
    %252 = vmatpush1.bf16.msra.mxu0 %v234
    %253 = vmatprep.subr.bf16.mxu0 0
    %254 = vmatpush1.bf16.msra.mxu0 %v235
    %255 = vmatprep.subr.bf16.mxu0 0
    %256 = vmatpush1.bf16.msra.mxu0 %v236
    %257 = vmatprep.subr.bf16.mxu0 0
    %258 = vmatpush1.bf16.msra.mxu0 %v237
    %259 = vmatprep.subr.bf16.mxu0 0
    %260 = vmatpush1.bf16.msra.mxu0 %v238
    %261 = vmatprep.subr.bf16.mxu0 0
    %262 = vmatpush1.bf16.msra.mxu0 %v239
    %263 = vmatprep.subr.bf16.mxu0 0
    %264 = vmatpush1.bf16.msra.mxu0 %v240
    %265 = vmatprep.subr.bf16.mxu0 0
    %266 = vmatpush1.bf16.msra.mxu0 0
    %267 = vmatprep.subr.bf16.mxu0 0
    %268 = vmatpush1.bf16.msra.mxu0 0
    %269 = vmatprep.subr.bf16.mxu0 0
    %270 = vmatpush1.bf16.msra.mxu0 0
    %271 = vmatprep.subr.bf16.mxu0 0
    %272 = vmatpush1.bf16.msra.mxu0 0
    %273 = vmatprep.subr.bf16.mxu0 0
    %274 = vmatpush1.bf16.msra.mxu0 0
    %275 = vmatprep.subr.bf16.mxu0 0
    %276 = vmatpush1.bf16.msra.mxu0 0
    %277 = vmatprep.subr.bf16.mxu0 0
    %278 = vmatpush1.bf16.msra.mxu0 0
    %279 = vmatprep.subr.bf16.mxu0 0
    %280 = vmatpush1.bf16.msra.mxu0 0
    %281 = vmatprep.mubr.bf16.mxu0 0
    %282 = vmatmul.mubr.bf16.gmra.mrb[0].mxu0 %v184
    %v283 = vpop.f32.mrb[0].mxu0
    %v284 = vadd.f32 0.0, %v283
    %v285 = vpop.f32.mrb[0].mxu0
    %v286 = vpop.f32.mrb[0].mxu0
    %v287 = vadd.f32 0.0, %v286
    %v288 = vpop.f32.mrb[0].mxu0
    %289 = vdwg.mxu0
    %v290 = vld [vmem:[%s2] sm:$0xff]
    %v291 = vld [vmem:[%s2 + $0x8] sm:$0xff]
    %vm292 = vcmp.eq.s32.totalorder %v290, 0
    %vm293 = vcmp.eq.s32.totalorder %v291, 0
    %v294 = vld [vmem:[#allocation6] sm:$0x1]
    %v295 = vld [vmem:[#allocation6 + $0x1] sm:$0x1]
    %v296 = vsel %vm292, 1, 0
    %v297 = vsel %vm293, 1, 0
    %298 = vset.pattern.permute.xlu0 0
    %299 = vperm.xlu0 %298, %v296
    %v300 = vpop.permute.xlu0 %299
    %301 = vset.pattern.permute.xlu0 0
    %302 = vperm.xlu0 %301, %v297
    %v303 = vpop.permute.xlu0 %302
    %vm304 = vcmp.eq.s32.totalorder %v300, 1
    %vm305 = vcmp.eq.s32.totalorder %v303, 1
    %v306 = vlaneseq
    %v307 = vshrl.u32 %v306, 7
    %v308 = vsub.s32 0, %v307
    %v309 = vrot.slane %v294, %v308
    %v310 = vlaneseq
    %v311 = vshrl.u32 %v310, 7
    %v312 = vsub.s32 0, %v311
    %v313 = vrot.slane %v295, %v312
    %v314 = vsel %vm304, %v309, %v313
    %v315 = vsel %vm305, %v309, %v313
    %v316 = vld [vmem:[%s5] sm:$0xff]
    %v317 = vadd.f32 %v284, %v316
    %v318 = vadd.f32 %v287, %v316
    %v319 = vadd.f32 %v317, %v314
    %v320 = vadd.f32 %v318, %v315
    %v321 = vld [vmem:[%s7] sm:$0x1]
    %v322 = vld [vmem:[#allocation8] sm:$0x1]
    %323 = vadd.xlane.f32.xlu0 %v319
    %v324 = vpop.xlane.xlu0 %323
    %325 = vadd.xlane.f32.xlu0 %v320
    %v326 = vpop.xlane.xlu0 %325
    %v327 = vrcp.pop 128.0
    %v328 = vmul.f32 %v324, %v327
    %v329 = vmul.f32 %v326, %v327
    %v330 = vsub.f32 %v319, %v328
    %v331 = vsub.f32 %v320, %v329
    %v332 = vmul.f32 %v330, %v330
    %v333 = vmul.f32 %v331, %v331
    %334 = vadd.xlane.f32.xlu0 %v332
    %v335 = vpop.xlane.xlu0 %334
    %336 = vadd.xlane.f32.xlu0 %v333
    %v337 = vpop.xlane.xlu0 %336
    %v338 = vmul.f32 %v335, %v327
    %v339 = vmul.f32 %v337, %v327
    %v340 = vadd.f32 %v338, 1e-12
    %v341 = vadd.f32 %v339, 1e-12
    %v342 = vrsqrt.pop %v340
    %v343 = vrsqrt.pop %v341
    %v344 = vmul.f32 %v330, %v342
    %v345 = vmul.f32 %v331, %v343
    %v347 = vlaneseq
    %v348 = vshrl.u32 %v347, 7
    %v349 = vsub.s32 0, %v348
    %v350 = vrot.slane %v321, %v349
    %v352 = vmul.f32 %v344, %v350
    %v353 = vmul.f32 %v345, %v350
    %v355 = vlaneseq
    %v356 = vshrl.u32 %v355, 7
    %v357 = vsub.s32 0, %v356
    %v358 = vrot.slane %v322, %v357
    %v360 = vadd.f32 %v352, %v358
    %v361 = vadd.f32 %v353, %v358
    %v362 = vld [vmem:[#allocation3] sm:$0x3]
    %v363 = vsub.f32 1.0, %v362
    %v364 = vmul.f32 %v363, -1e+09
    %v365 = vpack.c.bf16 %v361, %v360
    %v366 = vld [vmem:[#allocation9] sm:$0xff]
    %v367 = vld [vmem:[#allocation9 + $0x8] sm:$0xf]
    %v368 = vld [vmem:[#allocation9 + $0xc] sm:$0xff]
    %v369 = vld [vmem:[#allocation9 + $0x14] sm:$0xf]
    %v370 = vld [vmem:[#allocation9 + $0x18] sm:$0xff]
    %v371 = vld [vmem:[#allocation9 + $0x20] sm:$0xf]
    %v372 = vld [vmem:[#allocation9 + $0x24] sm:$0xff]
    %v373 = vld [vmem:[#allocation9 + $0x2c] sm:$0xf]
    %v374 = vld [vmem:[#allocation9 + $0x30] sm:$0xff]
    %v375 = vld [vmem:[#allocation9 + $0x38] sm:$0xf]
    %v376 = vld [vmem:[#allocation9 + $0x3c] sm:$0xff]
    %v377 = vld [vmem:[#allocation9 + $0x44] sm:$0xf]
    %v378 = vld [vmem:[#allocation9 + $0x48] sm:$0xff]
    %v379 = vld [vmem:[#allocation9 + $0x50] sm:$0xf]
    %v380 = vld [vmem:[#allocation9 + $0x54] sm:$0xff]
    %v381 = vld [vmem:[#allocation9 + $0x5c] sm:$0xf]
    %v382 = vld [vmem:[#allocation9 + $0x60] sm:$0xff]
    %v383 = vld [vmem:[#allocation9 + $0x68] sm:$0xf]
    %v384 = vld [vmem:[#allocation9 + $0x6c] sm:$0xff]
    %v385 = vld [vmem:[#allocation9 + $0x74] sm:$0xf]
    %v386 = vld [vmem:[#allocation9 + $0x78] sm:$0xff]
    %v387 = vld [vmem:[#allocation9 + $0x80] sm:$0xf]
    %v388 = vld [vmem:[#allocation9 + $0x84] sm:$0xff]
    %v389 = vld [vmem:[#allocation9 + $0x8c] sm:$0xf]
    %v390 = vld [vmem:[#allocation9 + $0x90] sm:$0xff]
    %v391 = vld [vmem:[#allocation9 + $0x98] sm:$0xf]
    %v392 = vld [vmem:[#allocation9 + $0x9c] sm:$0xff]
    %v393 = vld [vmem:[#allocation9 + $0xa4] sm:$0xf]
    %v394 = vld [vmem:[#allocation9 + $0xa8] sm:$0xff]
    %v395 = vld [vmem:[#allocation9 + $0xb0] sm:$0xf]
    %v396 = vld [vmem:[#allocation9 + $0xb4] sm:$0xff]
    %v397 = vld [vmem:[#allocation9 + $0xbc] sm:$0xf]
    %v398 = vld [vmem:[%s12] sm:$0x7]
    %v400 = vlaneseq
    %v401 = vshrl.u32 %v400, 7
    %v402 = vsub.s32 0, %v401
    %v403 = vrot.slane %v398, %v402
    %v404 = vlaneseq
    %v405 = vshrl.u32 %v404, 7
    %v406 = vsub.s32 1, %v405
    %v407 = vrot.slane %v398, %v406
    %v408 = vlaneseq
    %v409 = vshrl.u32 %v408, 7
    %v410 = vsub.s32 2, %v409
    %v411 = vrot.slane %v398, %v410
    %v447 = vunpack.c.l.b16 %v366
    %v448 = vunpack.c.h.b16 %v366
    %v449 = vunpack.c.l.b16 %v367
    %v450 = vunpack.c.l.b16 %v368
    %v451 = vunpack.c.h.b16 %v368
    %v452 = vunpack.c.l.b16 %v369
    %v453 = vunpack.c.l.b16 %v370
    %v454 = vunpack.c.h.b16 %v370
    %v455 = vunpack.c.l.b16 %v371
    %v456 = vunpack.c.l.b16 %v372
    %v457 = vunpack.c.h.b16 %v372
    %v458 = vunpack.c.l.b16 %v373
    %v459 = vunpack.c.l.b16 %v374
    %v460 = vunpack.c.h.b16 %v374
    %v461 = vunpack.c.l.b16 %v375
    %v462 = vunpack.c.l.b16 %v376
    %v463 = vunpack.c.h.b16 %v376
    %v464 = vunpack.c.l.b16 %v377
    %v465 = vunpack.c.l.b16 %v378
    %v466 = vunpack.c.h.b16 %v378
    %v467 = vunpack.c.l.b16 %v379
    %v468 = vunpack.c.l.b16 %v380
    %v469 = vunpack.c.h.b16 %v380
    %v470 = vunpack.c.l.b16 %v381
    %v471 = vunpack.c.l.b16 %v382
    %v472 = vunpack.c.h.b16 %v382
    %v473 = vunpack.c.l.b16 %v383
    %v474 = vunpack.c.l.b16 %v384
    %v475 = vunpack.c.h.b16 %v384
    %v476 = vunpack.c.l.b16 %v385
    %v477 = vunpack.c.l.b16 %v386
    %v478 = vunpack.c.h.b16 %v386
    %v479 = vunpack.c.l.b16 %v387
    %v480 = vunpack.c.l.b16 %v388
    %v481 = vunpack.c.h.b16 %v388
    %v482 = vunpack.c.l.b16 %v389
    %v483 = vunpack.c.l.b16 %v390
    %v484 = vunpack.c.h.b16 %v390
    %v485 = vunpack.c.l.b16 %v391
    %v486 = vunpack.c.l.b16 %v392
    %v487 = vunpack.c.h.b16 %v392
    %v488 = vunpack.c.l.b16 %v393
    %v489 = vunpack.c.l.b16 %v394
    %v490 = vunpack.c.h.b16 %v394
    %v491 = vunpack.c.l.b16 %v395
    %v492 = vunpack.c.l.b16 %v396
    %v493 = vunpack.c.h.b16 %v396
    %v494 = vunpack.c.l.b16 %v397
    %v495 = vpack.c.b16 %v450, %v447
    %v496 = vpack.c.b16 %v451, %v448
    %v497 = vpack.c.b16 %v452, %v449
    %v498 = vpack.c.b16 %v456, %v453
    %v499 = vpack.c.b16 %v457, %v454
    %v500 = vpack.c.b16 %v458, %v455
    %v501 = vpack.c.b16 %v462, %v459
    %v502 = vpack.c.b16 %v463, %v460
    %v503 = vpack.c.b16 %v464, %v461
    %v504 = vpack.c.b16 %v468, %v465
    %v505 = vpack.c.b16 %v469, %v466
    %v506 = vpack.c.b16 %v470, %v467
    %v507 = vpack.c.b16 %v474, %v471
    %v508 = vpack.c.b16 %v475, %v472
    %v509 = vpack.c.b16 %v476, %v473
    %v510 = vpack.c.b16 %v480, %v477
    %v511 = vpack.c.b16 %v481, %v478
    %v512 = vpack.c.b16 %v482, %v479
    %v513 = vpack.c.b16 %v486, %v483
    %v514 = vpack.c.b16 %v487, %v484
    %v515 = vpack.c.b16 %v488, %v485
    %v516 = vpack.c.b16 %v492, %v489
    %v517 = vpack.c.b16 %v493, %v490
    %v518 = vpack.c.b16 %v494, %v491
    %543 = vmatprep.subr.bf16.mxu0 %v496
    %544 = vmatpush1.bf16.msra.mxu0 %v495
    %545 = vmatprep.subr.bf16.mxu0 %v499
    %546 = vmatpush1.bf16.msra.mxu0 %v498
    %547 = vmatprep.subr.bf16.mxu0 %v502
    %548 = vmatpush1.bf16.msra.mxu0 %v501
    %549 = vmatprep.subr.bf16.mxu0 %v505
    %550 = vmatpush1.bf16.msra.mxu0 %v504
    %551 = vmatprep.subr.bf16.mxu0 %v508
    %552 = vmatpush1.bf16.msra.mxu0 %v507
    %553 = vmatprep.subr.bf16.mxu0 %v511
    %554 = vmatpush1.bf16.msra.mxu0 %v510
    %555 = vmatprep.subr.bf16.mxu0 %v514
    %556 = vmatpush1.bf16.msra.mxu0 %v513
    %557 = vmatprep.subr.bf16.mxu0 %v517
    %558 = vmatpush1.bf16.msra.mxu0 %v516
    %559 = vmatprep.subr.bf16.mxu0 0
    %560 = vmatpush1.bf16.msra.mxu0 0
    %561 = vmatprep.subr.bf16.mxu0 0
    %562 = vmatpush1.bf16.msra.mxu0 0
    %563 = vmatprep.subr.bf16.mxu0 0
    %564 = vmatpush1.bf16.msra.mxu0 0
    %565 = vmatprep.subr.bf16.mxu0 0
    %566 = vmatpush1.bf16.msra.mxu0 0
    %567 = vmatprep.subr.bf16.mxu0 0
    %568 = vmatpush1.bf16.msra.mxu0 0
    %569 = vmatprep.subr.bf16.mxu0 0
    %570 = vmatpush1.bf16.msra.mxu0 0
    %571 = vmatprep.subr.bf16.mxu0 0
    %572 = vmatpush1.bf16.msra.mxu0 0
    %573 = vmatprep.subr.bf16.mxu0 0
    %574 = vmatpush1.bf16.msra.mxu0 0
    %575 = vmatprep.mubr.bf16.mxu0 0
    %576 = vmatmul.mubr.bf16.gmra.mrb[0].mxu0 %v365
    %v577 = vpop.f32.mrb[0].mxu0
    %v578 = vadd.f32 %v403, %v577
    %v579 = vpop.f32.mrb[0].mxu0
    %v580 = vadd.f32 %v407, %v579
    %v581 = vpop.f32.mrb[0].mxu0
    %v582 = vadd.f32 %v403, %v581
    %v583 = vpop.f32.mrb[0].mxu0
    %v584 = vadd.f32 %v407, %v583
    %585 = vdwg.mxu0
    %586 = vmatprep.subr.bf16.mxu0 0
    %587 = vmatpush1.bf16.msra.mxu0 %v497
    %588 = vmatprep.subr.bf16.mxu0 0
    %589 = vmatpush1.bf16.msra.mxu0 %v500
    %590 = vmatprep.subr.bf16.mxu0 0
    %591 = vmatpush1.bf16.msra.mxu0 %v503
    %592 = vmatprep.subr.bf16.mxu0 0
    %593 = vmatpush1.bf16.msra.mxu0 %v506
    %594 = vmatprep.subr.bf16.mxu0 0
    %595 = vmatpush1.bf16.msra.mxu0 %v509
    %596 = vmatprep.subr.bf16.mxu0 0
    %597 = vmatpush1.bf16.msra.mxu0 %v512
    %598 = vmatprep.subr.bf16.mxu0 0
    %599 = vmatpush1.bf16.msra.mxu0 %v515
    %600 = vmatprep.subr.bf16.mxu0 0
    %601 = vmatpush1.bf16.msra.mxu0 %v518
    %602 = vmatprep.subr.bf16.mxu0 0
    %603 = vmatpush1.bf16.msra.mxu0 0
    %604 = vmatprep.subr.bf16.mxu0 0
    %605 = vmatpush1.bf16.msra.mxu0 0
    %606 = vmatprep.subr.bf16.mxu0 0
    %607 = vmatpush1.bf16.msra.mxu0 0
    %608 = vmatprep.subr.bf16.mxu0 0
    %609 = vmatpush1.bf16.msra.mxu0 0
    %610 = vmatprep.subr.bf16.mxu0 0
    %611 = vmatpush1.bf16.msra.mxu0 0
    %612 = vmatprep.subr.bf16.mxu0 0
    %613 = vmatpush1.bf16.msra.mxu0 0
    %614 = vmatprep.subr.bf16.mxu0 0
    %615 = vmatpush1.bf16.msra.mxu0 0
    %616 = vmatprep.subr.bf16.mxu0 0
    %617 = vmatpush1.bf16.msra.mxu0 0
    %618 = vmatprep.mubr.bf16.mxu0 0
    %619 = vmatmul.mubr.bf16.gmra.mrb[0].mxu0 %v365
    %v620 = vpop.f32.mrb[0].mxu0
    %v621 = vadd.f32 %v411, %v620
    %v622 = vpop.f32.mrb[0].mxu0
    %v623 = vpop.f32.mrb[0].mxu0
    %v624 = vadd.f32 %v411, %v623
    %v625 = vpop.f32.mrb[0].mxu0
    %626 = vdwg.mxu0
    %v627 = vld [vmem:[%s13] sm:$0xf]
    %v628 = vld [vmem:[%s13 + $0x4] sm:$0xf]
    %v629 = vld [vmem:[%s13 + $0x8] sm:$0xf]
    %v630 = vld [vmem:[%s13 + $0xc] sm:$0xf]
    %v631 = vld [vmem:[%s13 + $0x10] sm:$0xf]
    %v632 = vld [vmem:[%s13 + $0x14] sm:$0xf]
    %v633 = vld [vmem:[%s13 + $0x18] sm:$0xf]
    %v634 = vld [vmem:[%s13 + $0x1c] sm:$0xf]
    %v635 = vld [vmem:[%s13 + $0x20] sm:$0xf]
    %v636 = vld [vmem:[%s13 + $0x24] sm:$0xf]
    %v637 = vld [vmem:[%s13 + $0x28] sm:$0xf]
    %v638 = vld [vmem:[%s13 + $0x2c] sm:$0xf]
    %v639 = vld [vmem:[%s13 + $0x30] sm:$0xf]
    %v640 = vld [vmem:[%s13 + $0x34] sm:$0xf]
    %v641 = vld [vmem:[%s13 + $0x38] sm:$0xf]
    %v642 = vld [vmem:[%s13 + $0x3c] sm:$0xf]
    %v643 = vpack.c.bf16 %v578, %v578
    %v644 = vpack.c.bf16 %v582, %v582
    %v645 = vpack.c.bf16 %v580, %v580
    %v646 = vpack.c.bf16 %v584, %v584
    %v647 = vpack.c.bf16 %v621, %v621
    %v648 = vpack.c.bf16 %v624, %v624
    %vm649 = vcmask 523264
    %v651 = vsel %vm649, %v643, 0
    %v654 = vsel %vm649, %v645, 0
    %656 = vmatprep.subr.bf16.mxu0 0
    %657 = vmatpush1.bf16.xpose.msra.mxu0 %v654
    %658 = vmatprep.subr.bf16.mxu0 0
    %659 = vmatpush1.bf16.xpose.msra.mxu0 0
    %660 = vmatprep.subr.bf16.mxu0 0
    %661 = vmatpush1.bf16.xpose.msra.mxu0 0
    %662 = vmatprep.subr.bf16.mxu0 0
    %663 = vmatpush1.bf16.xpose.msra.mxu0 0
    %664 = vmatprep.subr.bf16.mxu0 0
    %665 = vmatpush1.bf16.xpose.msra.mxu0 0
    %666 = vmatprep.subr.bf16.mxu0 0
    %667 = vmatpush1.bf16.xpose.msra.mxu0 0
    %668 = vmatprep.subr.bf16.mxu0 0
    %669 = vmatpush1.bf16.xpose.msra.mxu0 0
    %670 = vmatprep.subr.bf16.mxu0 0
    %671 = vmatpush1.bf16.xpose.msra.mxu0 0
    %672 = vmatprep.subr.bf16.mxu0 0
    %673 = vmatpush1.bf16.xpose.msra.mxu0 0
    %674 = vmatprep.subr.bf16.mxu0 0
    %675 = vmatpush1.bf16.xpose.msra.mxu0 0
    %676 = vmatprep.subr.bf16.mxu0 0
    %677 = vmatpush1.bf16.xpose.msra.mxu0 0
    %678 = vmatprep.subr.bf16.mxu0 0
    %679 = vmatpush1.bf16.xpose.msra.mxu0 0
    %680 = vmatprep.subr.bf16.mxu0 0
    %681 = vmatpush1.bf16.xpose.msra.mxu0 0
    %682 = vmatprep.subr.bf16.mxu0 0
    %683 = vmatpush1.bf16.xpose.msra.mxu0 0
    %684 = vmatprep.subr.bf16.mxu0 0
    %685 = vmatpush1.bf16.xpose.msra.mxu0 0
    %686 = vmatprep.subr.bf16.mxu0 0
    %687 = vmatpush1.bf16.xpose.msra.mxu0 0
    %688 = vmatprep.mubr.bf16.mxu0 0
    %689 = vmatmul.mubr.bf16.gmra.mrb[0].mxu0 %v651
    %v690 = vpop.f32.mrb[0].mxu0
    %v691 = vadd.f32 0.0, %v690
    %v692 = vpop.f32.mrb[0].mxu0
    %v693 = vpop.f32.mrb[0].mxu0
    %v694 = vpop.f32.mrb[0].mxu0
    %695 = vdwg.mxu0
    %v697 = vsel %vm649, %v644, 0
    %v700 = vsel %vm649, %v646, 0
    %702 = vmatprep.subr.bf16.mxu0 0
    %703 = vmatpush1.bf16.xpose.msra.mxu0 %v700
    %704 = vmatprep.subr.bf16.mxu0 0
    %705 = vmatpush1.bf16.xpose.msra.mxu0 0
    %706 = vmatprep.subr.bf16.mxu0 0
    %707 = vmatpush1.bf16.xpose.msra.mxu0 0
    %708 = vmatprep.subr.bf16.mxu0 0
    %709 = vmatpush1.bf16.xpose.msra.mxu0 0
    %710 = vmatprep.subr.bf16.mxu0 0
    %711 = vmatpush1.bf16.xpose.msra.mxu0 0
    %712 = vmatprep.subr.bf16.mxu0 0
    %713 = vmatpush1.bf16.xpose.msra.mxu0 0
    %714 = vmatprep.subr.bf16.mxu0 0
    %715 = vmatpush1.bf16.xpose.msra.mxu0 0
    %716 = vmatprep.subr.bf16.mxu0 0
    %717 = vmatpush1.bf16.xpose.msra.mxu0 0
    %718 = vmatprep.subr.bf16.mxu0 0
    %719 = vmatpush1.bf16.xpose.msra.mxu0 0
    %720 = vmatprep.subr.bf16.mxu0 0
    %721 = vmatpush1.bf16.xpose.msra.mxu0 0
    %722 = vmatprep.subr.bf16.mxu0 0
    %723 = vmatpush1.bf16.xpose.msra.mxu0 0
    %724 = vmatprep.subr.bf16.mxu0 0
    %725 = vmatpush1.bf16.xpose.msra.mxu0 0
    %726 = vmatprep.subr.bf16.mxu0 0
    %727 = vmatpush1.bf16.xpose.msra.mxu0 0
    %728 = vmatprep.subr.bf16.mxu0 0
    %729 = vmatpush1.bf16.xpose.msra.mxu0 0
    %730 = vmatprep.subr.bf16.mxu0 0
    %731 = vmatpush1.bf16.xpose.msra.mxu0 0
    %732 = vmatprep.subr.bf16.mxu0 0
    %733 = vmatpush1.bf16.xpose.msra.mxu0 0
    %734 = vmatprep.mubr.bf16.mxu0 0
    %735 = vmatmul.mubr.bf16.gmra.mrb[0].mxu0 %v697
    %v736 = vpop.f32.mrb[0].mxu0
    %v737 = vadd.f32 0.0, %v736
    %v738 = vpop.f32.mrb[0].mxu0
    %v739 = vpop.f32.mrb[0].mxu0
    %v740 = vpop.f32.mrb[0].mxu0
    %741 = vdwg.mxu0
    %v742 = vmul.f32 %v691, 0.125
    %v743 = vmul.f32 %v737, 0.125
    %v746 = vunpack.c.l.s4 1966171168
    %v747 = vunpack.c.0.s8 %v746
    %v748 = vlaneseq
    %v749 = vshrl.u32 %v748, 7
    %v750 = vsub.s32 %v747, %v749
    %v751 = vrot.slane %v364, %v750
    %v752 = vcombine.high %v751, %v751
    %v754 = vunpack.c.l.s4 1966171168
    %v755 = vunpack.c.0.s8 %v754
    %v756 = vlaneseq
    %v757 = vshrl.u32 %v756, 7
    %v758 = vsub.s32 %v755, %v757
    %v759 = vrot.slane %v751, %v758
    %v761 = vunpack.c.l.s4 1966171168
    %v762 = vunpack.c.0.s8 %v761
    %v763 = vlaneseq
    %v764 = vshrl.u32 %v763, 7
    %v765 = vsub.s32 %v762, %v764
    %v766 = vrot.slane %v752, %v765
    %v767 = vlaneseq
    %v768 = vshrl.u32 %v767, 7
    %v769 = vsub.s32 0, %v768
    %v770 = vrot.slane %v759, %v769
    %v771 = vlaneseq
    %v772 = vshrl.u32 %v771, 7
    %v773 = vsub.s32 0, %v772
    %v774 = vrot.slane %v766, %v773
    %v777 = vadd.f32 %v742, %v770
    %v778 = vadd.f32 %v743, %v774
    %vm779 = vcmask 64512
    %v780 = vsel %vm779, %v777, -inf
    %781 = vmax.xlane.f32.xlu0 %v780
    %v782 = vpop.xlane.xlu0 %781
    %v783 = vsel %vm779, %v778, -inf
    %784 = vmax.xlane.f32.xlu0 %v783
    %v785 = vpop.xlane.xlu0 %784
    %v786 = vsub.f32 %v777, %v782
    %v787 = vsub.f32 %v778, %v785
    %v788 = vmul.f32 %v786, 1.442695
    %v789 = vpow.pop %v788
    %v790 = vmul.f32 %v787, 1.442695
    %v791 = vpow.pop %v790
    %v792 = vsel %vm779, %v789, 0.0
    %793 = vadd.xlane.f32.xlu0 %v792
    %v794 = vpop.xlane.xlu0 %793
    %v795 = vsel %vm779, %v791, 0.0
    %796 = vadd.xlane.f32.xlu0 %v795
    %v797 = vpop.xlane.xlu0 %796
    %v798 = vrcp.pop %v794
    %v799 = vrcp.pop %v797
    %v800 = vmul.f32 %v789, %v798
    %v801 = vmul.f32 %v791, %v799
    %v802 = vpack.c.bf16 %v800, %v800
    %v803 = vpack.c.bf16 %v801, %v801
    %v805 = vsel %vm779, %v802, 0
    %vm807 = vcmask 1043456
    %v809 = vsel %vm807, %v647, 0
    %811 = vmatprep.subr.bf16.mxu0 0
    %812 = vmatpush1.bf16.msra.mxu0 %v809
    %813 = vmatprep.subr.bf16.mxu0 0
    %814 = vmatpush1.bf16.msra.mxu0 0
    %815 = vmatprep.subr.bf16.mxu0 0
    %816 = vmatpush1.bf16.msra.mxu0 0
    %817 = vmatprep.subr.bf16.mxu0 0
    %818 = vmatpush1.bf16.msra.mxu0 0
    %819 = vmatprep.subr.bf16.mxu0 0
    %820 = vmatpush1.bf16.msra.mxu0 0
    %821 = vmatprep.subr.bf16.mxu0 0
    %822 = vmatpush1.bf16.msra.mxu0 0
    %823 = vmatprep.subr.bf16.mxu0 0
    %824 = vmatpush1.bf16.msra.mxu0 0
    %825 = vmatprep.subr.bf16.mxu0 0
    %826 = vmatpush1.bf16.msra.mxu0 0
    %827 = vmatprep.subr.bf16.mxu0 0
    %828 = vmatpush1.bf16.msra.mxu0 0
    %829 = vmatprep.subr.bf16.mxu0 0
    %830 = vmatpush1.bf16.msra.mxu0 0
    %831 = vmatprep.subr.bf16.mxu0 0
    %832 = vmatpush1.bf16.msra.mxu0 0
    %833 = vmatprep.subr.bf16.mxu0 0
    %834 = vmatpush1.bf16.msra.mxu0 0
    %835 = vmatprep.subr.bf16.mxu0 0
    %836 = vmatpush1.bf16.msra.mxu0 0
    %837 = vmatprep.subr.bf16.mxu0 0
    %838 = vmatpush1.bf16.msra.mxu0 0
    %839 = vmatprep.subr.bf16.mxu0 0
    %840 = vmatpush1.bf16.msra.mxu0 0
    %841 = vmatprep.subr.bf16.mxu0 0
    %842 = vmatpush1.bf16.msra.mxu0 0
    %843 = vmatprep.mubr.bf16.mxu0 0
    %844 = vmatmul.mubr.bf16.gmra.mrb[0].mxu0 %v805
    %v845 = vpop.f32.mrb[0].mxu0
    %v846 = vadd.f32 0.0, %v845
    %v847 = vpop.f32.mrb[0].mxu0
    %v848 = vpop.f32.mrb[0].mxu0
    %v849 = vpop.f32.mrb[0].mxu0
    %850 = vdwg.mxu0
    %v852 = vsel %vm779, %v803, 0
    %v855 = vsel %vm807, %v648, 0
    %857 = vmatprep.subr.bf16.mxu0 0
    %858 = vmatpush1.bf16.msra.mxu0 %v855
    %859 = vmatprep.subr.bf16.mxu0 0
    %860 = vmatpush1.bf16.msra.mxu0 0
    %861 = vmatprep.subr.bf16.mxu0 0
    %862 = vmatpush1.bf16.msra.mxu0 0
    %863 = vmatprep.subr.bf16.mxu0 0
    %864 = vmatpush1.bf16.msra.mxu0 0
    %865 = vmatprep.subr.bf16.mxu0 0
    %866 = vmatpush1.bf16.msra.mxu0 0
    %867 = vmatprep.subr.bf16.mxu0 0
    %868 = vmatpush1.bf16.msra.mxu0 0
    %869 = vmatprep.subr.bf16.mxu0 0
    %870 = vmatpush1.bf16.msra.mxu0 0
    %871 = vmatprep.subr.bf16.mxu0 0
    %872 = vmatpush1.bf16.msra.mxu0 0
    %873 = vmatprep.subr.bf16.mxu0 0
    %874 = vmatpush1.bf16.msra.mxu0 0
    %875 = vmatprep.subr.bf16.mxu0 0
    %876 = vmatpush1.bf16.msra.mxu0 0
    %877 = vmatprep.subr.bf16.mxu0 0
    %878 = vmatpush1.bf16.msra.mxu0 0
    %879 = vmatprep.subr.bf16.mxu0 0
    %880 = vmatpush1.bf16.msra.mxu0 0
    %881 = vmatprep.subr.bf16.mxu0 0
    %882 = vmatpush1.bf16.msra.mxu0 0
    %883 = vmatprep.subr.bf16.mxu0 0
    %884 = vmatpush1.bf16.msra.mxu0 0
    %885 = vmatprep.subr.bf16.mxu0 0
    %886 = vmatpush1.bf16.msra.mxu0 0
    %887 = vmatprep.subr.bf16.mxu0 0
    %888 = vmatpush1.bf16.msra.mxu0 0
    %889 = vmatprep.mubr.bf16.mxu0 0
    %890 = vmatmul.mubr.bf16.gmra.mrb[0].mxu0 %v852
    %v891 = vpop.f32.mrb[0].mxu0
    %v892 = vadd.f32 0.0, %v891
    %v893 = vpop.f32.mrb[0].mxu0
    %v894 = vpop.f32.mrb[0].mxu0
    %v895 = vpop.f32.mrb[0].mxu0
    %896 = vdwg.mxu0
    %v897 = vpack.c.bf16 %v892, %v846
    %899 = vrot.lane.b32.xlu0 %v643, 64
    %v900 = vpop.permute.xlu0 %899
    %902 = vrot.lane.b32.xlu0 %v645, 64
    %v903 = vpop.permute.xlu0 %902
    %v905 = vsel %vm649, %v900, 0
    %v908 = vsel %vm649, %v903, 0
    %910 = vmatprep.subr.bf16.mxu0 0
    %911 = vmatpush1.bf16.xpose.msra.mxu0 %v908
    %912 = vmatprep.subr.bf16.mxu0 0
    %913 = vmatpush1.bf16.xpose.msra.mxu0 0
    %914 = vmatprep.subr.bf16.mxu0 0
    %915 = vmatpush1.bf16.xpose.msra.mxu0 0
    %916 = vmatprep.subr.bf16.mxu0 0
    %917 = vmatpush1.bf16.xpose.msra.mxu0 0
    %918 = vmatprep.subr.bf16.mxu0 0
    %919 = vmatpush1.bf16.xpose.msra.mxu0 0
    %920 = vmatprep.subr.bf16.mxu0 0
    %921 = vmatpush1.bf16.xpose.msra.mxu0 0
    %922 = vmatprep.subr.bf16.mxu0 0
    %923 = vmatpush1.bf16.xpose.msra.mxu0 0
    %924 = vmatprep.subr.bf16.mxu0 0
    %925 = vmatpush1.bf16.xpose.msra.mxu0 0
    %926 = vmatprep.subr.bf16.mxu0 0
    %927 = vmatpush1.bf16.xpose.msra.mxu0 0
    %928 = vmatprep.subr.bf16.mxu0 0
    %929 = vmatpush1.bf16.xpose.msra.mxu0 0
    %930 = vmatprep.subr.bf16.mxu0 0
    %931 = vmatpush1.bf16.xpose.msra.mxu0 0
    %932 = vmatprep.subr.bf16.mxu0 0
    %933 = vmatpush1.bf16.xpose.msra.mxu0 0
    %934 = vmatprep.subr.bf16.mxu0 0
    %935 = vmatpush1.bf16.xpose.msra.mxu0 0
    %936 = vmatprep.subr.bf16.mxu0 0
    %937 = vmatpush1.bf16.xpose.msra.mxu0 0
    %938 = vmatprep.subr.bf16.mxu0 0
    %939 = vmatpush1.bf16.xpose.msra.mxu0 0
    %940 = vmatprep.subr.bf16.mxu0 0
    %941 = vmatpush1.bf16.xpose.msra.mxu0 0
    %942 = vmatprep.mubr.bf16.mxu0 0
    %943 = vmatmul.mubr.bf16.gmra.mrb[0].mxu0 %v905
    %v944 = vpop.f32.mrb[0].mxu0
    %v945 = vadd.f32 0.0, %v944
    %v946 = vpop.f32.mrb[0].mxu0
    %v947 = vpop.f32.mrb[0].mxu0
    %v948 = vpop.f32.mrb[0].mxu0
    %949 = vdwg.mxu0
    %951 = vrot.lane.b32.xlu0 %v644, 64
    %v952 = vpop.permute.xlu0 %951
    %954 = vrot.lane.b32.xlu0 %v646, 64
    %v955 = vpop.permute.xlu0 %954
    %v957 = vsel %vm649, %v952, 0
    %v960 = vsel %vm649, %v955, 0
    %962 = vmatprep.subr.bf16.mxu0 0
    %963 = vmatpush1.bf16.xpose.msra.mxu0 %v960
    %964 = vmatprep.subr.bf16.mxu0 0
    %965 = vmatpush1.bf16.xpose.msra.mxu0 0
    %966 = vmatprep.subr.bf16.mxu0 0
    %967 = vmatpush1.bf16.xpose.msra.mxu0 0
    %968 = vmatprep.subr.bf16.mxu0 0
    %969 = vmatpush1.bf16.xpose.msra.mxu0 0
    %970 = vmatprep.subr.bf16.mxu0 0
    %971 = vmatpush1.bf16.xpose.msra.mxu0 0
    %972 = vmatprep.subr.bf16.mxu0 0
    %973 = vmatpush1.bf16.xpose.msra.mxu0 0
    %974 = vmatprep.subr.bf16.mxu0 0
    %975 = vmatpush1.bf16.xpose.msra.mxu0 0
    %976 = vmatprep.subr.bf16.mxu0 0
    %977 = vmatpush1.bf16.xpose.msra.mxu0 0
    %978 = vmatprep.subr.bf16.mxu0 0
    %979 = vmatpush1.bf16.xpose.msra.mxu0 0
    %980 = vmatprep.subr.bf16.mxu0 0
    %981 = vmatpush1.bf16.xpose.msra.mxu0 0
    %982 = vmatprep.subr.bf16.mxu0 0
    %983 = vmatpush1.bf16.xpose.msra.mxu0 0
    %984 = vmatprep.subr.bf16.mxu0 0
    %985 = vmatpush1.bf16.xpose.msra.mxu0 0
    %986 = vmatprep.subr.bf16.mxu0 0
    %987 = vmatpush1.bf16.xpose.msra.mxu0 0
    %988 = vmatprep.subr.bf16.mxu0 0
    %989 = vmatpush1.bf16.xpose.msra.mxu0 0
    %990 = vmatprep.subr.bf16.mxu0 0
    %991 = vmatpush1.bf16.xpose.msra.mxu0 0
    %992 = vmatprep.subr.bf16.mxu0 0
    %993 = vmatpush1.bf16.xpose.msra.mxu0 0
    %994 = vmatprep.mubr.bf16.mxu0 0
    %995 = vmatmul.mubr.bf16.gmra.mrb[0].mxu0 %v957
    %v996 = vpop.f32.mrb[0].mxu0
    %v997 = vadd.f32 0.0, %v996
    %v998 = vpop.f32.mrb[0].mxu0
    %v999 = vpop.f32.mrb[0].mxu0
    %v1000 = vpop.f32.mrb[0].mxu0
    %1001 = vdwg.mxu0
    %v1002 = vmul.f32 %v945, 0.125
    %v1003 = vmul.f32 %v997, 0.125
    %v1004 = vadd.f32 %v1002, %v770
    %v1005 = vadd.f32 %v1003, %v774
    %v1006 = vsel %vm779, %v1004, -inf
    %1007 = vmax.xlane.f32.xlu0 %v1006
    %v1008 = vpop.xlane.xlu0 %1007
    %v1009 = vsel %vm779, %v1005, -inf
    %1010 = vmax.xlane.f32.xlu0 %v1009
    %v1011 = vpop.xlane.xlu0 %1010
    %v1012 = vsub.f32 %v1004, %v1008
    %v1013 = vsub.f32 %v1005, %v1011
    %v1014 = vmul.f32 %v1012, 1.442695
    %v1015 = vpow.pop %v1014
    %v1016 = vmul.f32 %v1013, 1.442695
    %v1017 = vpow.pop %v1016
    %v1018 = vsel %vm779, %v1015, 0.0
    %1019 = vadd.xlane.f32.xlu0 %v1018
    %v1020 = vpop.xlane.xlu0 %1019
    %v1021 = vsel %vm779, %v1017, 0.0
    %1022 = vadd.xlane.f32.xlu0 %v1021
    %v1023 = vpop.xlane.xlu0 %1022
    %v1024 = vrcp.pop %v1020
    %v1025 = vrcp.pop %v1023
    %v1026 = vmul.f32 %v1015, %v1024
    %v1027 = vmul.f32 %v1017, %v1025
    %v1028 = vpack.c.bf16 %v1026, %v1026
    %v1029 = vpack.c.bf16 %v1027, %v1027
    %1031 = vrot.lane.b32.xlu0 %v647, 64
    %v1032 = vpop.permute.xlu0 %1031
    %v1034 = vsel %vm779, %v1028, 0
    %v1037 = vsel %vm807, %v1032, 0
    %1039 = vmatprep.subr.bf16.mxu0 0
    %1040 = vmatpush1.bf16.msra.mxu0 %v1037
    %1041 = vmatprep.subr.bf16.mxu0 0
    %1042 = vmatpush1.bf16.msra.mxu0 0
    %1043 = vmatprep.subr.bf16.mxu0 0
    %1044 = vmatpush1.bf16.msra.mxu0 0
    %1045 = vmatprep.subr.bf16.mxu0 0
    %1046 = vmatpush1.bf16.msra.mxu0 0
    %1047 = vmatprep.subr.bf16.mxu0 0
    %1048 = vmatpush1.bf16.msra.mxu0 0
    %1049 = vmatprep.subr.bf16.mxu0 0
    %1050 = vmatpush1.bf16.msra.mxu0 0
    %1051 = vmatprep.subr.bf16.mxu0 0
    %1052 = vmatpush1.bf16.msra.mxu0 0
    %1053 = vmatprep.subr.bf16.mxu0 0
    %1054 = vmatpush1.bf16.msra.mxu0 0
    %1055 = vmatprep.subr.bf16.mxu0 0
    %1056 = vmatpush1.bf16.msra.mxu0 0
    %1057 = vmatprep.subr.bf16.mxu0 0
    %1058 = vmatpush1.bf16.msra.mxu0 0
    %1059 = vmatprep.subr.bf16.mxu0 0
    %1060 = vmatpush1.bf16.msra.mxu0 0
    %1061 = vmatprep.subr.bf16.mxu0 0
    %1062 = vmatpush1.bf16.msra.mxu0 0
    %1063 = vmatprep.subr.bf16.mxu0 0
    %1064 = vmatpush1.bf16.msra.mxu0 0
    %1065 = vmatprep.subr.bf16.mxu0 0
    %1066 = vmatpush1.bf16.msra.mxu0 0
    %1067 = vmatprep.subr.bf16.mxu0 0
    %1068 = vmatpush1.bf16.msra.mxu0 0
    %1069 = vmatprep.subr.bf16.mxu0 0
    %1070 = vmatpush1.bf16.msra.mxu0 0
    %1071 = vmatprep.mubr.bf16.mxu0 0
    %1072 = vmatmul.mubr.bf16.gmra.mrb[0].mxu0 %v1034
    %v1073 = vpop.f32.mrb[0].mxu0
    %v1074 = vadd.f32 0.0, %v1073
    %v1075 = vpop.f32.mrb[0].mxu0
    %v1076 = vpop.f32.mrb[0].mxu0
    %v1077 = vpop.f32.mrb[0].mxu0
    %1078 = vdwg.mxu0
    %1080 = vrot.lane.b32.xlu0 %v648, 64
    %v1081 = vpop.permute.xlu0 %1080
    %v1083 = vsel %vm779, %v1029, 0
    %v1086 = vsel %vm807, %v1081, 0
    %1088 = vmatprep.subr.bf16.mxu0 0
    %1089 = vmatpush1.bf16.msra.mxu0 %v1086
    %1090 = vmatprep.subr.bf16.mxu0 0
    %1091 = vmatpush1.bf16.msra.mxu0 0
    %1092 = vmatprep.subr.bf16.mxu0 0
    %1093 = vmatpush1.bf16.msra.mxu0 0
    %1094 = vmatprep.subr.bf16.mxu0 0
    %1095 = vmatpush1.bf16.msra.mxu0 0
    %1096 = vmatprep.subr.bf16.mxu0 0
    %1097 = vmatpush1.bf16.msra.mxu0 0
    %1098 = vmatprep.subr.bf16.mxu0 0
    %1099 = vmatpush1.bf16.msra.mxu0 0
    %1100 = vmatprep.subr.bf16.mxu0 0
    %1101 = vmatpush1.bf16.msra.mxu0 0
    %1102 = vmatprep.subr.bf16.mxu0 0
    %1103 = vmatpush1.bf16.msra.mxu0 0
    %1104 = vmatprep.subr.bf16.mxu0 0
    %1105 = vmatpush1.bf16.msra.mxu0 0
    %1106 = vmatprep.subr.bf16.mxu0 0
    %1107 = vmatpush1.bf16.msra.mxu0 0
    %1108 = vmatprep.subr.bf16.mxu0 0
    %1109 = vmatpush1.bf16.msra.mxu0 0
    %1110 = vmatprep.subr.bf16.mxu0 0
    %1111 = vmatpush1.bf16.msra.mxu0 0
    %1112 = vmatprep.subr.bf16.mxu0 0
    %1113 = vmatpush1.bf16.msra.mxu0 0
    %1114 = vmatprep.subr.bf16.mxu0 0
    %1115 = vmatpush1.bf16.msra.mxu0 0
    %1116 = vmatprep.subr.bf16.mxu0 0
    %1117 = vmatpush1.bf16.msra.mxu0 0
    %1118 = vmatprep.subr.bf16.mxu0 0
    %1119 = vmatpush1.bf16.msra.mxu0 0
    %1120 = vmatprep.mubr.bf16.mxu0 0
    %1121 = vmatmul.mubr.bf16.gmra.mrb[0].mxu0 %v1083
    %v1122 = vpop.f32.mrb[0].mxu0
    %v1123 = vadd.f32 0.0, %v1122
    %v1124 = vpop.f32.mrb[0].mxu0
    %v1125 = vpop.f32.mrb[0].mxu0
    %v1126 = vpop.f32.mrb[0].mxu0
    %1127 = vdwg.mxu0
    %v1128 = vpack.c.bf16 %v1123, %v1074
    %v1137 = vunpack.c.l.b16 %v635
    %v1138 = vunpack.c.l.b16 %v636
    %v1139 = vunpack.c.l.b16 %v637
    %v1140 = vunpack.c.l.b16 %v638
    %v1141 = vunpack.c.l.b16 %v639
    %v1142 = vunpack.c.l.b16 %v640
    %v1143 = vunpack.c.l.b16 %v641
    %v1144 = vunpack.c.l.b16 %v642
    %v1145 = vpack.c.b16 %v1138, %v1137
    %v1146 = vpack.c.b16 %v1140, %v1139
    %v1147 = vpack.c.b16 %v1142, %v1141
    %v1148 = vpack.c.b16 %v1144, %v1143
    %v1154 = vsel %vm649, %v1128, 0
    %1156 = vmatprep.subr.bf16.mxu0 0
    %1157 = vmatpush1.bf16.msra.mxu0 %v1145
    %1158 = vmatprep.subr.bf16.mxu0 0
    %1159 = vmatpush1.bf16.msra.mxu0 %v1146
    %1160 = vmatprep.subr.bf16.mxu0 0
    %1161 = vmatpush1.bf16.msra.mxu0 %v1147
    %1162 = vmatprep.subr.bf16.mxu0 0
    %1163 = vmatpush1.bf16.msra.mxu0 %v1148
    %1164 = vmatprep.subr.bf16.mxu0 0
    %1165 = vmatpush1.bf16.msra.mxu0 0
    %1166 = vmatprep.subr.bf16.mxu0 0
    %1167 = vmatpush1.bf16.msra.mxu0 0
    %1168 = vmatprep.subr.bf16.mxu0 0
    %1169 = vmatpush1.bf16.msra.mxu0 0
    %1170 = vmatprep.subr.bf16.mxu0 0
    %1171 = vmatpush1.bf16.msra.mxu0 0
    %1172 = vmatprep.subr.bf16.mxu0 0
    %1173 = vmatpush1.bf16.msra.mxu0 0
    %1174 = vmatprep.subr.bf16.mxu0 0
    %1175 = vmatpush1.bf16.msra.mxu0 0
    %1176 = vmatprep.subr.bf16.mxu0 0
    %1177 = vmatpush1.bf16.msra.mxu0 0
    %1178 = vmatprep.subr.bf16.mxu0 0
    %1179 = vmatpush1.bf16.msra.mxu0 0
    %1180 = vmatprep.subr.bf16.mxu0 0
    %1181 = vmatpush1.bf16.msra.mxu0 0
    %1182 = vmatprep.subr.bf16.mxu0 0
    %1183 = vmatpush1.bf16.msra.mxu0 0
    %1184 = vmatprep.subr.bf16.mxu0 0
    %1185 = vmatpush1.bf16.msra.mxu0 0
    %1186 = vmatprep.subr.bf16.mxu0 0
    %1187 = vmatpush1.bf16.msra.mxu0 0
    %1188 = vmatprep.mubr.bf16.mxu0 0
    %1189 = vmatmul.mubr.bf16.gmra.mrb[0].mxu0 %v1154
    %v1190 = vpop.f32.mrb[0].mxu0
    %v1191 = vadd.f32 0.0, %v1190
    %v1192 = vpop.f32.mrb[0].mxu0
    %v1193 = vpop.f32.mrb[0].mxu0
    %v1194 = vadd.f32 0.0, %v1193
    %v1195 = vpop.f32.mrb[0].mxu0
    %1196 = vdwg.mxu0
    %v1205 = vunpack.c.l.b16 %v627
    %v1206 = vunpack.c.l.b16 %v628
    %v1207 = vunpack.c.l.b16 %v629
    %v1208 = vunpack.c.l.b16 %v630
    %v1209 = vunpack.c.l.b16 %v631
    %v1210 = vunpack.c.l.b16 %v632
    %v1211 = vunpack.c.l.b16 %v633
    %v1212 = vunpack.c.l.b16 %v634
    %v1213 = vpack.c.b16 %v1206, %v1205
    %v1214 = vpack.c.b16 %v1208, %v1207
    %v1215 = vpack.c.b16 %v1210, %v1209
    %v1216 = vpack.c.b16 %v1212, %v1211
    %v1222 = vsel %vm649, %v897, 0
    %1224 = vmatprep.subr.bf16.mxu0 0
    %1225 = vmatpush1.bf16.msra.mxu0 %v1213
    %1226 = vmatprep.subr.bf16.mxu0 0
    %1227 = vmatpush1.bf16.msra.mxu0 %v1214
    %1228 = vmatprep.subr.bf16.mxu0 0
    %1229 = vmatpush1.bf16.msra.mxu0 %v1215
    %1230 = vmatprep.subr.bf16.mxu0 0
    %1231 = vmatpush1.bf16.msra.mxu0 %v1216
    %1232 = vmatprep.subr.bf16.mxu0 0
    %1233 = vmatpush1.bf16.msra.mxu0 0
    %1234 = vmatprep.subr.bf16.mxu0 0
    %1235 = vmatpush1.bf16.msra.mxu0 0
    %1236 = vmatprep.subr.bf16.mxu0 0
    %1237 = vmatpush1.bf16.msra.mxu0 0
    %1238 = vmatprep.subr.bf16.mxu0 0
    %1239 = vmatpush1.bf16.msra.mxu0 0
    %1240 = vmatprep.subr.bf16.mxu0 0
    %1241 = vmatpush1.bf16.msra.mxu0 0
    %1242 = vmatprep.subr.bf16.mxu0 0
    %1243 = vmatpush1.bf16.msra.mxu0 0
    %1244 = vmatprep.subr.bf16.mxu0 0
    %1245 = vmatpush1.bf16.msra.mxu0 0
    %1246 = vmatprep.subr.bf16.mxu0 0
    %1247 = vmatpush1.bf16.msra.mxu0 0
    %1248 = vmatprep.subr.bf16.mxu0 0
    %1249 = vmatpush1.bf16.msra.mxu0 0
    %1250 = vmatprep.subr.bf16.mxu0 0
    %1251 = vmatpush1.bf16.msra.mxu0 0
    %1252 = vmatprep.subr.bf16.mxu0 0
    %1253 = vmatpush1.bf16.msra.mxu0 0
    %1254 = vmatprep.subr.bf16.mxu0 0
    %1255 = vmatpush1.bf16.msra.mxu0 0
    %1256 = vmatprep.mubr.bf16.mxu0 0
    %1257 = vmatmul.mubr.bf16.gmra.mrb[0].mxu0 %v1222
    %v1258 = vpop.f32.mrb[0].mxu0
    %v1259 = vadd.f32 %v1191, %v1258
    %v1260 = vpop.f32.mrb[0].mxu0
    %v1261 = vpop.f32.mrb[0].mxu0
    %v1262 = vadd.f32 %v1194, %v1261
    %v1263 = vpop.f32.mrb[0].mxu0
    %1264 = vdwg.mxu0
    %v1265 = vld [vmem:[#allocation11] sm:$0x1]
    %v1267 = vlaneseq
    %v1268 = vshrl.u32 %v1267, 7
    %v1269 = vsub.s32 0, %v1268
    %v1270 = vrot.slane %v1265, %v1269
    %v1272 = vadd.f32 %v1259, %v1270
    %v1273 = vadd.f32 %v1262, %v1270
    %v1274 = vadd.f32 %v360, %v1272
    %v1275 = vadd.f32 %v361, %v1273
    %v1276 = vld [vmem:[%s15] sm:$0x1]
    %v1277 = vld [vmem:[%s16] sm:$0x1]
    %1278 = vadd.xlane.f32.xlu0 %v1274
    %v1279 = vpop.xlane.xlu0 %1278
    %1280 = vadd.xlane.f32.xlu0 %v1275
    %v1281 = vpop.xlane.xlu0 %1280
    %v1282 = vmul.f32 %v1279, %v327
    %v1283 = vmul.f32 %v1281, %v327
    %v1284 = vsub.f32 %v1274, %v1282
    %v1285 = vsub.f32 %v1275, %v1283
    %v1286 = vmul.f32 %v1284, %v1284
    %v1287 = vmul.f32 %v1285, %v1285
    %1288 = vadd.xlane.f32.xlu0 %v1286
    %v1289 = vpop.xlane.xlu0 %1288
    %1290 = vadd.xlane.f32.xlu0 %v1287
    %v1291 = vpop.xlane.xlu0 %1290
    %v1292 = vmul.f32 %v1289, %v327
    %v1293 = vmul.f32 %v1291, %v327
    %v1294 = vadd.f32 %v1292, 1e-12
    %v1295 = vadd.f32 %v1293, 1e-12
    %v1296 = vrsqrt.pop %v1294
    %v1297 = vrsqrt.pop %v1295
    %v1298 = vmul.f32 %v1284, %v1296
    %v1299 = vmul.f32 %v1285, %v1297
    %v1301 = vlaneseq
    %v1302 = vshrl.u32 %v1301, 7
    %v1303 = vsub.s32 0, %v1302
    %v1304 = vrot.slane %v1276, %v1303
    %v1306 = vmul.f32 %v1298, %v1304
    %v1307 = vmul.f32 %v1299, %v1304
    %v1309 = vlaneseq
    %v1310 = vshrl.u32 %v1309, 7
    %v1311 = vsub.s32 0, %v1310
    %v1312 = vrot.slane %v1277, %v1311
    %v1314 = vadd.f32 %v1306, %v1312
    %v1315 = vadd.f32 %v1307, %v1312
    %v1316 = vpack.c.bf16 %v1315, %v1314
    %v1317 = vld [vmem:[#allocation12] sm:$0xff]
    %v1318 = vld [vmem:[#allocation12 + $0x8] sm:$0xff]
    %v1319 = vld [vmem:[#allocation12 + $0x10] sm:$0xff]
    %v1320 = vld [vmem:[#allocation12 + $0x18] sm:$0xff]
    %v1321 = vld [vmem:[#allocation12 + $0x20] sm:$0xff]
    %v1322 = vld [vmem:[#allocation12 + $0x28] sm:$0xff]
    %v1323 = vld [vmem:[#allocation12 + $0x30] sm:$0xff]
    %v1324 = vld [vmem:[#allocation12 + $0x38] sm:$0xff]
    %v1325 = vld [vmem:[#allocation12 + $0x40] sm:$0xff]
    %v1326 = vld [vmem:[#allocation12 + $0x48] sm:$0xff]
    %v1327 = vld [vmem:[#allocation12 + $0x50] sm:$0xff]
    %v1328 = vld [vmem:[#allocation12 + $0x58] sm:$0xff]
    %v1329 = vld [vmem:[#allocation12 + $0x60] sm:$0xff]
    %v1330 = vld [vmem:[#allocation12 + $0x68] sm:$0xff]
    %v1331 = vld [vmem:[#allocation12 + $0x70] sm:$0xff]
    %v1332 = vld [vmem:[#allocation12 + $0x78] sm:$0xff]
    %v1333 = vld [vmem:[%s18] sm:$0x3]
    %v1335 = vlaneseq
    %v1336 = vshrl.u32 %v1335, 7
    %v1337 = vsub.s32 0, %v1336
    %v1338 = vrot.slane %v1333, %v1337
    %v1339 = vlaneseq
    %v1340 = vshrl.u32 %v1339, 7
    %v1341 = vsub.s32 1, %v1340
    %v1342 = vrot.slane %v1333, %v1341
    %v1361 = vunpack.c.l.b16 %v1317
    %v1362 = vunpack.c.h.b16 %v1317
    %v1363 = vunpack.c.l.b16 %v1318
    %v1364 = vunpack.c.h.b16 %v1318
    %v1365 = vunpack.c.l.b16 %v1319
    %v1366 = vunpack.c.h.b16 %v1319
    %v1367 = vunpack.c.l.b16 %v1320
    %v1368 = vunpack.c.h.b16 %v1320
    %v1369 = vunpack.c.l.b16 %v1321
    %v1370 = vunpack.c.h.b16 %v1321
    %v1371 = vunpack.c.l.b16 %v1322
    %v1372 = vunpack.c.h.b16 %v1322
    %v1373 = vunpack.c.l.b16 %v1323
    %v1374 = vunpack.c.h.b16 %v1323
    %v1375 = vunpack.c.l.b16 %v1324
    %v1376 = vunpack.c.h.b16 %v1324
    %v1377 = vunpack.c.l.b16 %v1325
    %v1378 = vunpack.c.h.b16 %v1325
    %v1379 = vunpack.c.l.b16 %v1326
    %v1380 = vunpack.c.h.b16 %v1326
    %v1381 = vunpack.c.l.b16 %v1327
    %v1382 = vunpack.c.h.b16 %v1327
    %v1383 = vunpack.c.l.b16 %v1328
    %v1384 = vunpack.c.h.b16 %v1328
    %v1385 = vunpack.c.l.b16 %v1329
    %v1386 = vunpack.c.h.b16 %v1329
    %v1387 = vunpack.c.l.b16 %v1330
    %v1388 = vunpack.c.h.b16 %v1330
    %v1389 = vunpack.c.l.b16 %v1331
    %v1390 = vunpack.c.h.b16 %v1331
    %v1391 = vunpack.c.l.b16 %v1332
    %v1392 = vunpack.c.h.b16 %v1332
    %v1393 = vpack.c.b16 %v1363, %v1361
    %v1394 = vpack.c.b16 %v1364, %v1362
    %v1395 = vpack.c.b16 %v1367, %v1365
    %v1396 = vpack.c.b16 %v1368, %v1366
    %v1397 = vpack.c.b16 %v1371, %v1369
    %v1398 = vpack.c.b16 %v1372, %v1370
    %v1399 = vpack.c.b16 %v1375, %v1373
    %v1400 = vpack.c.b16 %v1376, %v1374
    %v1401 = vpack.c.b16 %v1379, %v1377
    %v1402 = vpack.c.b16 %v1380, %v1378
    %v1403 = vpack.c.b16 %v1383, %v1381
    %v1404 = vpack.c.b16 %v1384, %v1382
    %v1405 = vpack.c.b16 %v1387, %v1385
    %v1406 = vpack.c.b16 %v1388, %v1386
    %v1407 = vpack.c.b16 %v1391, %v1389
    %v1408 = vpack.c.b16 %v1392, %v1390
    %1425 = vmatprep.subr.bf16.mxu0 %v1394
    %1426 = vmatpush1.bf16.msra.mxu0 %v1393
    %1427 = vmatprep.subr.bf16.mxu0 %v1396
    %1428 = vmatpush1.bf16.msra.mxu0 %v1395
    %1429 = vmatprep.subr.bf16.mxu0 %v1398
    %1430 = vmatpush1.bf16.msra.mxu0 %v1397
    %1431 = vmatprep.subr.bf16.mxu0 %v1400
    %1432 = vmatpush1.bf16.msra.mxu0 %v1399
    %1433 = vmatprep.subr.bf16.mxu0 %v1402
    %1434 = vmatpush1.bf16.msra.mxu0 %v1401
    %1435 = vmatprep.subr.bf16.mxu0 %v1404
    %1436 = vmatpush1.bf16.msra.mxu0 %v1403
    %1437 = vmatprep.subr.bf16.mxu0 %v1406
    %1438 = vmatpush1.bf16.msra.mxu0 %v1405
    %1439 = vmatprep.subr.bf16.mxu0 %v1408
    %1440 = vmatpush1.bf16.msra.mxu0 %v1407
    %1441 = vmatprep.subr.bf16.mxu0 0
    %1442 = vmatpush1.bf16.msra.mxu0 0
    %1443 = vmatprep.subr.bf16.mxu0 0
    %1444 = vmatpush1.bf16.msra.mxu0 0
    %1445 = vmatprep.subr.bf16.mxu0 0
    %1446 = vmatpush1.bf16.msra.mxu0 0
    %1447 = vmatprep.subr.bf16.mxu0 0
    %1448 = vmatpush1.bf16.msra.mxu0 0
    %1449 = vmatprep.subr.bf16.mxu0 0
    %1450 = vmatpush1.bf16.msra.mxu0 0
    %1451 = vmatprep.subr.bf16.mxu0 0
    %1452 = vmatpush1.bf16.msra.mxu0 0
    %1453 = vmatprep.subr.bf16.mxu0 0
    %1454 = vmatpush1.bf16.msra.mxu0 0
    %1455 = vmatprep.subr.bf16.mxu0 0
    %1456 = vmatpush1.bf16.msra.mxu0 0
    %1457 = vmatprep.mubr.bf16.mxu0 0
    %1458 = vmatmul.mubr.bf16.gmra.mrb[0].mxu0 %v1316
    %v1459 = vpop.f32.mrb[0].mxu0
    %v1460 = vadd.f32 %v1338, %v1459
    %v1461 = vpop.f32.mrb[0].mxu0
    %v1462 = vadd.f32 %v1342, %v1461
    %v1463 = vpop.f32.mrb[0].mxu0
    %v1464 = vadd.f32 %v1338, %v1463
    %v1465 = vpop.f32.mrb[0].mxu0
    %v1466 = vadd.f32 %v1342, %v1465
    %1467 = vdwg.mxu0
    %v1468 = vmul.f32 %v1460, %v1460
    %v1469 = vmul.f32 %v1462, %v1462
    %v1470 = vmul.f32 %v1464, %v1464
    %v1471 = vmul.f32 %v1466, %v1466
    %v1472 = vmul.f32 %v1460, %v1468
    %v1473 = vmul.f32 %v1462, %v1469
    %v1474 = vmul.f32 %v1464, %v1470
    %v1475 = vmul.f32 %v1466, %v1471
    %v1476 = vmul.f32 %v1472, 0.044715
    %v1477 = vmul.f32 %v1473, 0.044715
    %v1478 = vmul.f32 %v1474, 0.044715
    %v1479 = vmul.f32 %v1475, 0.044715
    %v1480 = vadd.f32 %v1460, %v1476
    %v1481 = vadd.f32 %v1462, %v1477
    %v1482 = vadd.f32 %v1464, %v1478
    %v1483 = vadd.f32 %v1466, %v1479
    %v1484 = vmul.f32 %v1480, 0.7978846
    %v1485 = vmul.f32 %v1481, 0.7978846
    %v1486 = vmul.f32 %v1482, 0.7978846
    %v1487 = vmul.f32 %v1483, 0.7978846
    %v1488 = vtanh.pop %v1484
    %v1489 = vtanh.pop %v1485
    %v1490 = vtanh.pop %v1486
    %v1491 = vtanh.pop %v1487
    %v1492 = vadd.f32 %v1488, 1.0
    %v1493 = vadd.f32 %v1489, 1.0
    %v1494 = vadd.f32 %v1490, 1.0
    %v1495 = vadd.f32 %v1491, 1.0
    %v1496 = vmul.f32 %v1492, 0.5
    %v1497 = vmul.f32 %v1493, 0.5
    %v1498 = vmul.f32 %v1494, 0.5
    %v1499 = vmul.f32 %v1495, 0.5
    %v1500 = vmul.f32 %v1460, %v1496
    %v1501 = vmul.f32 %v1462, %v1497
    %v1502 = vmul.f32 %v1464, %v1498
    %v1503 = vmul.f32 %v1466, %v1499
    %v1504 = vpack.c.bf16 %v1502, %v1500
    %v1505 = vpack.c.bf16 %v1503, %v1501
    %v1506 = vld [vmem:[#allocation14] sm:$0xf]
    %v1507 = vld [vmem:[#allocation14 + $0x4] sm:$0xf]
    %v1508 = vld [vmem:[#allocation14 + $0x8] sm:$0xf]
    %v1509 = vld [vmem:[#allocation14 + $0xc] sm:$0xf]
    %v1510 = vld [vmem:[#allocation14 + $0x10] sm:$0xf]
    %v1511 = vld [vmem:[#allocation14 + $0x14] sm:$0xf]
    %v1512 = vld [vmem:[#allocation14 + $0x18] sm:$0xf]
    %v1513 = vld [vmem:[#allocation14 + $0x1c] sm:$0xf]
    %v1514 = vld [vmem:[#allocation14 + $0x20] sm:$0xf]
    %v1515 = vld [vmem:[#allocation14 + $0x24] sm:$0xf]
    %v1516 = vld [vmem:[#allocation14 + $0x28] sm:$0xf]
    %v1517 = vld [vmem:[#allocation14 + $0x2c] sm:$0xf]
    %v1518 = vld [vmem:[#allocation14 + $0x30] sm:$0xf]
    %v1519 = vld [vmem:[#allocation14 + $0x34] sm:$0xf]
    %v1520 = vld [vmem:[#allocation14 + $0x38] sm:$0xf]
    %v1521 = vld [vmem:[#allocation14 + $0x3c] sm:$0xf]
    %v1522 = vld [vmem:[#allocation14 + $0x40] sm:$0xf]
    %v1523 = vld [vmem:[#allocation14 + $0x44] sm:$0xf]
    %v1524 = vld [vmem:[#allocation14 + $0x48] sm:$0xf]
    %v1525 = vld [vmem:[#allocation14 + $0x4c] sm:$0xf]
    %v1526 = vld [vmem:[#allocation14 + $0x50] sm:$0xf]
    %v1527 = vld [vmem:[#allocation14 + $0x54] sm:$0xf]
    %v1528 = vld [vmem:[#allocation14 + $0x58] sm:$0xf]
    %v1529 = vld [vmem:[#allocation14 + $0x5c] sm:$0xf]
    %v1530 = vld [vmem:[#allocation14 + $0x60] sm:$0xf]
    %v1531 = vld [vmem:[#allocation14 + $0x64] sm:$0xf]
    %v1532 = vld [vmem:[#allocation14 + $0x68] sm:$0xf]
    %v1533 = vld [vmem:[#allocation14 + $0x6c] sm:$0xf]
    %v1534 = vld [vmem:[#allocation14 + $0x70] sm:$0xf]
    %v1535 = vld [vmem:[#allocation14 + $0x74] sm:$0xf]
    %v1536 = vld [vmem:[#allocation14 + $0x78] sm:$0xf]
    %v1537 = vld [vmem:[#allocation14 + $0x7c] sm:$0xf]
    %v1538 = vld [vmem:[%s20] sm:$0x1]
    %v1540 = vlaneseq
    %v1541 = vshrl.u32 %v1540, 7
    %v1542 = vsub.s32 0, %v1541
    %v1543 = vrot.slane %v1538, %v1542
    %v1577 = vunpack.c.l.b16 %v1506
    %v1578 = vunpack.c.l.b16 %v1507
    %v1579 = vunpack.c.l.b16 %v1508
    %v1580 = vunpack.c.l.b16 %v1509
    %v1581 = vunpack.c.l.b16 %v1510
    %v1582 = vunpack.c.l.b16 %v1511
    %v1583 = vunpack.c.l.b16 %v1512
    %v1584 = vunpack.c.l.b16 %v1513
    %v1585 = vunpack.c.l.b16 %v1514
    %v1586 = vunpack.c.l.b16 %v1515
    %v1587 = vunpack.c.l.b16 %v1516
    %v1588 = vunpack.c.l.b16 %v1517
    %v1589 = vunpack.c.l.b16 %v1518
    %v1590 = vunpack.c.l.b16 %v1519
    %v1591 = vunpack.c.l.b16 %v1520
    %v1592 = vunpack.c.l.b16 %v1521
    %v1593 = vunpack.c.l.b16 %v1522
    %v1594 = vunpack.c.l.b16 %v1523
    %v1595 = vunpack.c.l.b16 %v1524
    %v1596 = vunpack.c.l.b16 %v1525
    %v1597 = vunpack.c.l.b16 %v1526
    %v1598 = vunpack.c.l.b16 %v1527
    %v1599 = vunpack.c.l.b16 %v1528
    %v1600 = vunpack.c.l.b16 %v1529
    %v1601 = vunpack.c.l.b16 %v1530
    %v1602 = vunpack.c.l.b16 %v1531
    %v1603 = vunpack.c.l.b16 %v1532
    %v1604 = vunpack.c.l.b16 %v1533
    %v1605 = vunpack.c.l.b16 %v1534
    %v1606 = vunpack.c.l.b16 %v1535
    %v1607 = vunpack.c.l.b16 %v1536
    %v1608 = vunpack.c.l.b16 %v1537
    %v1609 = vpack.c.b16 %v1578, %v1577
    %v1610 = vpack.c.b16 %v1580, %v1579
    %v1611 = vpack.c.b16 %v1582, %v1581
    %v1612 = vpack.c.b16 %v1584, %v1583
    %v1613 = vpack.c.b16 %v1586, %v1585
    %v1614 = vpack.c.b16 %v1588, %v1587
    %v1615 = vpack.c.b16 %v1590, %v1589
    %v1616 = vpack.c.b16 %v1592, %v1591
    %v1617 = vpack.c.b16 %v1594, %v1593
    %v1618 = vpack.c.b16 %v1596, %v1595
    %v1619 = vpack.c.b16 %v1598, %v1597
    %v1620 = vpack.c.b16 %v1600, %v1599
    %v1621 = vpack.c.b16 %v1602, %v1601
    %v1622 = vpack.c.b16 %v1604, %v1603
    %v1623 = vpack.c.b16 %v1606, %v1605
    %v1624 = vpack.c.b16 %v1608, %v1607
    %1641 = vmatprep.subr.bf16.mxu0 0
    %1642 = vmatpush1.bf16.msra.mxu0 %v1609
    %1643 = vmatprep.subr.bf16.mxu0 0
    %1644 = vmatpush1.bf16.msra.mxu0 %v1610
    %1645 = vmatprep.subr.bf16.mxu0 0
    %1646 = vmatpush1.bf16.msra.mxu0 %v1611
    %1647 = vmatprep.subr.bf16.mxu0 0
    %1648 = vmatpush1.bf16.msra.mxu0 %v1612
    %1649 = vmatprep.subr.bf16.mxu0 0
    %1650 = vmatpush1.bf16.msra.mxu0 %v1613
    %1651 = vmatprep.subr.bf16.mxu0 0
    %1652 = vmatpush1.bf16.msra.mxu0 %v1614
    %1653 = vmatprep.subr.bf16.mxu0 0
    %1654 = vmatpush1.bf16.msra.mxu0 %v1615
    %1655 = vmatprep.subr.bf16.mxu0 0
    %1656 = vmatpush1.bf16.msra.mxu0 %v1616
    %1657 = vmatprep.subr.bf16.mxu0 0
    %1658 = vmatpush1.bf16.msra.mxu0 %v1617
    %1659 = vmatprep.subr.bf16.mxu0 0
    %1660 = vmatpush1.bf16.msra.mxu0 %v1618
    %1661 = vmatprep.subr.bf16.mxu0 0
    %1662 = vmatpush1.bf16.msra.mxu0 %v1619
    %1663 = vmatprep.subr.bf16.mxu0 0
    %1664 = vmatpush1.bf16.msra.mxu0 %v1620
    %1665 = vmatprep.subr.bf16.mxu0 0
    %1666 = vmatpush1.bf16.msra.mxu0 %v1621
    %1667 = vmatprep.subr.bf16.mxu0 0
    %1668 = vmatpush1.bf16.msra.mxu0 %v1622
    %1669 = vmatprep.subr.bf16.mxu0 0
    %1670 = vmatpush1.bf16.msra.mxu0 %v1623
    %1671 = vmatprep.subr.bf16.mxu0 0
    %1672 = vmatpush1.bf16.msra.mxu0 %v1624
    %1673 = vmatprep.mubr.bf16.mxu0 %v1505
    %1674 = vmatmul.mubr.bf16.gmra.mrb[0].mxu0 %v1504
    %v1675 = vpop.f32.mrb[0].mxu0
    %v1676 = vadd.f32 %v1543, %v1675
    %v1677 = vpop.f32.mrb[0].mxu0
    %v1678 = vpop.f32.mrb[0].mxu0
    %v1679 = vadd.f32 %v1543, %v1678
    %v1680 = vpop.f32.mrb[0].mxu0
    %1681 = vdwg.mxu0
    %v1682 = vadd.f32 %v1314, %v1676
    %v1683 = vadd.f32 %v1315, %v1679
    %v1684 = vld [vmem:[%s21] sm:$0x1]
    %v1685 = vld [vmem:[%s22] sm:$0x1]
    %1686 = vadd.xlane.f32.xlu0 %v1682
    %v1687 = vpop.xlane.xlu0 %1686
    %1688 = vadd.xlane.f32.xlu0 %v1683
    %v1689 = vpop.xlane.xlu0 %1688
    %v1690 = vmul.f32 %v1687, %v327
    %v1691 = vmul.f32 %v1689, %v327
    %v1692 = vsub.f32 %v1682, %v1690
    %v1693 = vsub.f32 %v1683, %v1691
    %v1694 = vmul.f32 %v1692, %v1692
    %v1695 = vmul.f32 %v1693, %v1693
    %1696 = vadd.xlane.f32.xlu0 %v1694
    %v1697 = vpop.xlane.xlu0 %1696
    %1698 = vadd.xlane.f32.xlu0 %v1695
    %v1699 = vpop.xlane.xlu0 %1698
    %v1700 = vmul.f32 %v1697, %v327
    %v1701 = vmul.f32 %v1699, %v327
    %v1702 = vadd.f32 %v1700, 1e-12
    %v1703 = vadd.f32 %v1701, 1e-12
    %v1704 = vrsqrt.pop %v1702
    %v1705 = vrsqrt.pop %v1703
    %v1706 = vmul.f32 %v1692, %v1704
    %v1707 = vmul.f32 %v1693, %v1705
    %v1709 = vlaneseq
    %v1710 = vshrl.u32 %v1709, 7
    %v1711 = vsub.s32 0, %v1710
    %v1712 = vrot.slane %v1684, %v1711
    %v1714 = vmul.f32 %v1706, %v1712
    %v1715 = vmul.f32 %v1707, %v1712
    %v1717 = vlaneseq
    %v1718 = vshrl.u32 %v1717, 7
    %v1719 = vsub.s32 0, %v1718
    %v1720 = vrot.slane %v1685, %v1719
    %v1722 = vadd.f32 %v1714, %v1720
    %v1723 = vadd.f32 %v1715, %v1720
    %v1724 = vpack.c.bf16 %v1723, %v1722
    %s1725 = scalar_lea.vmem [#allocation9], 192
    %v1726 = vld [vmem:[%s1725] sm:$0xff]
    %v1727 = vld [vmem:[%s1725 + $0x8] sm:$0xf]
    %v1728 = vld [vmem:[%s1725 + $0xc] sm:$0xff]
    %v1729 = vld [vmem:[%s1725 + $0x14] sm:$0xf]
    %v1730 = vld [vmem:[%s1725 + $0x18] sm:$0xff]
    %v1731 = vld [vmem:[%s1725 + $0x20] sm:$0xf]
    %v1732 = vld [vmem:[%s1725 + $0x24] sm:$0xff]
    %v1733 = vld [vmem:[%s1725 + $0x2c] sm:$0xf]
    %v1734 = vld [vmem:[%s1725 + $0x30] sm:$0xff]
    %v1735 = vld [vmem:[%s1725 + $0x38] sm:$0xf]
    %v1736 = vld [vmem:[%s1725 + $0x3c] sm:$0xff]
    %v1737 = vld [vmem:[%s1725 + $0x44] sm:$0xf]
    %v1738 = vld [vmem:[%s1725 + $0x48] sm:$0xff]
    %v1739 = vld [vmem:[%s1725 + $0x50] sm:$0xf]
    %v1740 = vld [vmem:[%s1725 + $0x54] sm:$0xff]
    %v1741 = vld [vmem:[%s1725 + $0x5c] sm:$0xf]
    %v1742 = vld [vmem:[%s1725 + $0x60] sm:$0xff]
    %v1743 = vld [vmem:[%s1725 + $0x68] sm:$0xf]
    %v1744 = vld [vmem:[%s1725 + $0x6c] sm:$0xff]
    %v1745 = vld [vmem:[%s1725 + $0x74] sm:$0xf]
    %v1746 = vld [vmem:[%s1725 + $0x78] sm:$0xff]
    %v1747 = vld [vmem:[%s1725 + $0x80] sm:$0xf]
    %v1748 = vld [vmem:[%s1725 + $0x84] sm:$0xff]
    %v1749 = vld [vmem:[%s1725 + $0x8c] sm:$0xf]
    %v1750 = vld [vmem:[%s1725 + $0x90] sm:$0xff]
    %v1751 = vld [vmem:[%s1725 + $0x98] sm:$0xf]
    %v1752 = vld [vmem:[%s1725 + $0x9c] sm:$0xff]
    %v1753 = vld [vmem:[%s1725 + $0xa4] sm:$0xf]
    %v1754 = vld [vmem:[%s1725 + $0xa8] sm:$0xff]
    %v1755 = vld [vmem:[%s1725 + $0xb0] sm:$0xf]
    %v1756 = vld [vmem:[%s1725 + $0xb4] sm:$0xff]
    %v1757 = vld [vmem:[%s1725 + $0xbc] sm:$0xf]
    %s1758 = scalar_lea.vmem %s12, 3
    %v1759 = vld [vmem:[%s1758] sm:$0x7]
    %v1761 = vlaneseq
    %v1762 = vshrl.u32 %v1761, 7
    %v1763 = vsub.s32 0, %v1762
    %v1764 = vrot.slane %v1759, %v1763
    %v1765 = vlaneseq
    %v1766 = vshrl.u32 %v1765, 7
    %v1767 = vsub.s32 1, %v1766
    %v1768 = vrot.slane %v1759, %v1767
    %v1769 = vlaneseq
    %v1770 = vshrl.u32 %v1769, 7
    %v1771 = vsub.s32 2, %v1770
    %v1772 = vrot.slane %v1759, %v1771
    %v1808 = vunpack.c.l.b16 %v1726
    %v1809 = vunpack.c.h.b16 %v1726
    %v1810 = vunpack.c.l.b16 %v1727
    %v1811 = vunpack.c.l.b16 %v1728
    %v1812 = vunpack.c.h.b16 %v1728
    %v1813 = vunpack.c.l.b16 %v1729
    %v1814 = vunpack.c.l.b16 %v1730
    %v1815 = vunpack.c.h.b16 %v1730
    %v1816 = vunpack.c.l.b16 %v1731
    %v1817 = vunpack.c.l.b16 %v1732
    %v1818 = vunpack.c.h.b16 %v1732
    %v1819 = vunpack.c.l.b16 %v1733
    %v1820 = vunpack.c.l.b16 %v1734
    %v1821 = vunpack.c.h.b16 %v1734
    %v1822 = vunpack.c.l.b16 %v1735
    %v1823 = vunpack.c.l.b16 %v1736
    %v1824 = vunpack.c.h.b16 %v1736
    %v1825 = vunpack.c.l.b16 %v1737
    %v1826 = vunpack.c.l.b16 %v1738
    %v1827 = vunpack.c.h.b16 %v1738
    %v1828 = vunpack.c.l.b16 %v1739
    %v1829 = vunpack.c.l.b16 %v1740
    %v1830 = vunpack.c.h.b16 %v1740
    %v1831 = vunpack.c.l.b16 %v1741
    %v1832 = vunpack.c.l.b16 %v1742
    %v1833 = vunpack.c.h.b16 %v1742
    %v1834 = vunpack.c.l.b16 %v1743
    %v1835 = vunpack.c.l.b16 %v1744
    %v1836 = vunpack.c.h.b16 %v1744
    %v1837 = vunpack.c.l.b16 %v1745
    %v1838 = vunpack.c.l.b16 %v1746
    %v1839 = vunpack.c.h.b16 %v1746
    %v1840 = vunpack.c.l.b16 %v1747
    %v1841 = vunpack.c.l.b16 %v1748
    %v1842 = vunpack.c.h.b16 %v1748
    %v1843 = vunpack.c.l.b16 %v1749
    %v1844 = vunpack.c.l.b16 %v1750
    %v1845 = vunpack.c.h.b16 %v1750
    %v1846 = vunpack.c.l.b16 %v1751
    %v1847 = vunpack.c.l.b16 %v1752
    %v1848 = vunpack.c.h.b16 %v1752
    %v1849 = vunpack.c.l.b16 %v1753
    %v1850 = vunpack.c.l.b16 %v1754
    %v1851 = vunpack.c.h.b16 %v1754
    %v1852 = vunpack.c.l.b16 %v1755
    %v1853 = vunpack.c.l.b16 %v1756
    %v1854 = vunpack.c.h.b16 %v1756
    %v1855 = vunpack.c.l.b16 %v1757
    %v1856 = vpack.c.b16 %v1811, %v1808
    %v1857 = vpack.c.b16 %v1812, %v1809
    %v1858 = vpack.c.b16 %v1813, %v1810
    %v1859 = vpack.c.b16 %v1817, %v1814
    %v1860 = vpack.c.b16 %v1818, %v1815
    %v1861 = vpack.c.b16 %v1819, %v1816
    %v1862 = vpack.c.b16 %v1823, %v1820
    %v1863 = vpack.c.b16 %v1824, %v1821
    %v1864 = vpack.c.b16 %v1825, %v1822
    %v1865 = vpack.c.b16 %v1829, %v1826
    %v1866 = vpack.c.b16 %v1830, %v1827
    %v1867 = vpack.c.b16 %v1831, %v1828
    %v1868 = vpack.c.b16 %v1835, %v1832
    %v1869 = vpack.c.b16 %v1836, %v1833
    %v1870 = vpack.c.b16 %v1837, %v1834
    %v1871 = vpack.c.b16 %v1841, %v1838
    %v1872 = vpack.c.b16 %v1842, %v1839
    %v1873 = vpack.c.b16 %v1843, %v1840
    %v1874 = vpack.c.b16 %v1847, %v1844
    %v1875 = vpack.c.b16 %v1848, %v1845
    %v1876 = vpack.c.b16 %v1849, %v1846
    %v1877 = vpack.c.b16 %v1853, %v1850
    %v1878 = vpack.c.b16 %v1854, %v1851
    %v1879 = vpack.c.b16 %v1855, %v1852
    %1904 = vmatprep.subr.bf16.mxu0 %v1857
    %1905 = vmatpush1.bf16.msra.mxu0 %v1856
    %1906 = vmatprep.subr.bf16.mxu0 %v1860
    %1907 = vmatpush1.bf16.msra.mxu0 %v1859
    %1908 = vmatprep.subr.bf16.mxu0 %v1863
    %1909 = vmatpush1.bf16.msra.mxu0 %v1862
    %1910 = vmatprep.subr.bf16.mxu0 %v1866
    %1911 = vmatpush1.bf16.msra.mxu0 %v1865
    %1912 = vmatprep.subr.bf16.mxu0 %v1869
    %1913 = vmatpush1.bf16.msra.mxu0 %v1868
    %1914 = vmatprep.subr.bf16.mxu0 %v1872
    %1915 = vmatpush1.bf16.msra.mxu0 %v1871
    %1916 = vmatprep.subr.bf16.mxu0 %v1875
    %1917 = vmatpush1.bf16.msra.mxu0 %v1874
    %1918 = vmatprep.subr.bf16.mxu0 %v1878
    %1919 = vmatpush1.bf16.msra.mxu0 %v1877
    %1920 = vmatprep.subr.bf16.mxu0 0
    %1921 = vmatpush1.bf16.msra.mxu0 0
    %1922 = vmatprep.subr.bf16.mxu0 0
    %1923 = vmatpush1.bf16.msra.mxu0 0
    %1924 = vmatprep.subr.bf16.mxu0 0
    %1925 = vmatpush1.bf16.msra.mxu0 0
    %1926 = vmatprep.subr.bf16.mxu0 0
    %1927 = vmatpush1.bf16.msra.mxu0 0
    %1928 = vmatprep.subr.bf16.mxu0 0
    %1929 = vmatpush1.bf16.msra.mxu0 0
    %1930 = vmatprep.subr.bf16.mxu0 0
    %1931 = vmatpush1.bf16.msra.mxu0 0
    %1932 = vmatprep.subr.bf16.mxu0 0
    %1933 = vmatpush1.bf16.msra.mxu0 0
    %1934 = vmatprep.subr.bf16.mxu0 0
    %1935 = vmatpush1.bf16.msra.mxu0 0
    %1936 = vmatprep.mubr.bf16.mxu0 0
    %1937 = vmatmul.mubr.bf16.gmra.mrb[0].mxu0 %v1724
    %v1938 = vpop.f32.mrb[0].mxu0
    %v1939 = vadd.f32 %v1764, %v1938
    %v1940 = vpop.f32.mrb[0].mxu0
    %v1941 = vadd.f32 %v1768, %v1940
    %v1942 = vpop.f32.mrb[0].mxu0
    %v1943 = vadd.f32 %v1764, %v1942
    %v1944 = vpop.f32.mrb[0].mxu0
    %v1945 = vadd.f32 %v1768, %v1944
    %1946 = vdwg.mxu0
    %1947 = vmatprep.subr.bf16.mxu0 0
    %1948 = vmatpush1.bf16.msra.mxu0 %v1858
    %1949 = vmatprep.subr.bf16.mxu0 0
    %1950 = vmatpush1.bf16.msra.mxu0 %v1861
    %1951 = vmatprep.subr.bf16.mxu0 0
    %1952 = vmatpush1.bf16.msra.mxu0 %v1864
    %1953 = vmatprep.subr.bf16.mxu0 0
    %1954 = vmatpush1.bf16.msra.mxu0 %v1867
    %1955 = vmatprep.subr.bf16.mxu0 0
    %1956 = vmatpush1.bf16.msra.mxu0 %v1870
    %1957 = vmatprep.subr.bf16.mxu0 0
    %1958 = vmatpush1.bf16.msra.mxu0 %v1873
    %1959 = vmatprep.subr.bf16.mxu0 0
    %1960 = vmatpush1.bf16.msra.mxu0 %v1876
    %1961 = vmatprep.subr.bf16.mxu0 0
    %1962 = vmatpush1.bf16.msra.mxu0 %v1879
    %1963 = vmatprep.subr.bf16.mxu0 0
    %1964 = vmatpush1.bf16.msra.mxu0 0
    %1965 = vmatprep.subr.bf16.mxu0 0
    %1966 = vmatpush1.bf16.msra.mxu0 0
    %1967 = vmatprep.subr.bf16.mxu0 0
    %1968 = vmatpush1.bf16.msra.mxu0 0
    %1969 = vmatprep.subr.bf16.mxu0 0
    %1970 = vmatpush1.bf16.msra.mxu0 0
    %1971 = vmatprep.subr.bf16.mxu0 0
    %1972 = vmatpush1.bf16.msra.mxu0 0
    %1973 = vmatprep.subr.bf16.mxu0 0
    %1974 = vmatpush1.bf16.msra.mxu0 0
    %1975 = vmatprep.subr.bf16.mxu0 0
    %1976 = vmatpush1.bf16.msra.mxu0 0
    %1977 = vmatprep.subr.bf16.mxu0 0
    %1978 = vmatpush1.bf16.msra.mxu0 0
    %1979 = vmatprep.mubr.bf16.mxu0 0
    %1980 = vmatmul.mubr.bf16.gmra.mrb[0].mxu0 %v1724
    %v1981 = vpop.f32.mrb[0].mxu0
    %v1982 = vadd.f32 %v1772, %v1981
    %v1983 = vpop.f32.mrb[0].mxu0
    %v1984 = vpop.f32.mrb[0].mxu0
    %v1985 = vadd.f32 %v1772, %v1984
    %v1986 = vpop.f32.mrb[0].mxu0
    %1987 = vdwg.mxu0
    %s1988 = scalar_lea.vmem %s13, 64
    %v1989 = vld [vmem:[%s1988] sm:$0xf]
    %v1990 = vld [vmem:[%s1988 + $0x4] sm:$0xf]
    %v1991 = vld [vmem:[%s1988 + $0x8] sm:$0xf]
    %v1992 = vld [vmem:[%s1988 + $0xc] sm:$0xf]
    %v1993 = vld [vmem:[%s1988 + $0x10] sm:$0xf]
    %v1994 = vld [vmem:[%s1988 + $0x14] sm:$0xf]
    %v1995 = vld [vmem:[%s1988 + $0x18] sm:$0xf]
    %v1996 = vld [vmem:[%s1988 + $0x1c] sm:$0xf]
    %v1997 = vld [vmem:[%s1988 + $0x20] sm:$0xf]
    %v1998 = vld [vmem:[%s1988 + $0x24] sm:$0xf]
    %v1999 = vld [vmem:[%s1988 + $0x28] sm:$0xf]
    %v2000 = vld [vmem:[%s1988 + $0x2c] sm:$0xf]
    %v2001 = vld [vmem:[%s1988 + $0x30] sm:$0xf]
    %v2002 = vld [vmem:[%s1988 + $0x34] sm:$0xf]
    %v2003 = vld [vmem:[%s1988 + $0x38] sm:$0xf]
    %v2004 = vld [vmem:[%s1988 + $0x3c] sm:$0xf]
    %v2005 = vpack.c.bf16 %v1939, %v1939
    %v2006 = vpack.c.bf16 %v1943, %v1943
    %v2007 = vpack.c.bf16 %v1941, %v1941
    %v2008 = vpack.c.bf16 %v1945, %v1945
    %v2009 = vpack.c.bf16 %v1982, %v1982
    %v2010 = vpack.c.bf16 %v1985, %v1985
    %v2012 = vsel %vm649, %v2005, 0
    %v2015 = vsel %vm649, %v2007, 0
    %2017 = vmatprep.subr.bf16.mxu0 0
    %2018 = vmatpush1.bf16.xpose.msra.mxu0 %v2015
    %2019 = vmatprep.subr.bf16.mxu0 0
    %2020 = vmatpush1.bf16.xpose.msra.mxu0 0
    %2021 = vmatprep.subr.bf16.mxu0 0
    %2022 = vmatpush1.bf16.xpose.msra.mxu0 0
    %2023 = vmatprep.subr.bf16.mxu0 0
    %2024 = vmatpush1.bf16.xpose.msra.mxu0 0
    %2025 = vmatprep.subr.bf16.mxu0 0
    %2026 = vmatpush1.bf16.xpose.msra.mxu0 0
    %2027 = vmatprep.subr.bf16.mxu0 0
    %2028 = vmatpush1.bf16.xpose.msra.mxu0 0
    %2029 = vmatprep.subr.bf16.mxu0 0
    %2030 = vmatpush1.bf16.xpose.msra.mxu0 0
    %2031 = vmatprep.subr.bf16.mxu0 0
    %2032 = vmatpush1.bf16.xpose.msra.mxu0 0
    %2033 = vmatprep.subr.bf16.mxu0 0
    %2034 = vmatpush1.bf16.xpose.msra.mxu0 0
    %2035 = vmatprep.subr.bf16.mxu0 0
    %2036 = vmatpush1.bf16.xpose.msra.mxu0 0
    %2037 = vmatprep.subr.bf16.mxu0 0
    %2038 = vmatpush1.bf16.xpose.msra.mxu0 0
    %2039 = vmatprep.subr.bf16.mxu0 0
    %2040 = vmatpush1.bf16.xpose.msra.mxu0 0
    %2041 = vmatprep.subr.bf16.mxu0 0
    %2042 = vmatpush1.bf16.xpose.msra.mxu0 0
    %2043 = vmatprep.subr.bf16.mxu0 0
    %2044 = vmatpush1.bf16.xpose.msra.mxu0 0
    %2045 = vmatprep.subr.bf16.mxu0 0
    %2046 = vmatpush1.bf16.xpose.msra.mxu0 0
    %2047 = vmatprep.subr.bf16.mxu0 0
    %2048 = vmatpush1.bf16.xpose.msra.mxu0 0
    %2049 = vmatprep.mubr.bf16.mxu0 0
    %2050 = vmatmul.mubr.bf16.gmra.mrb[0].mxu0 %v2012
    %v2051 = vpop.f32.mrb[0].mxu0
    %v2052 = vadd.f32 0.0, %v2051
    %v2053 = vpop.f32.mrb[0].mxu0
    %v2054 = vpop.f32.mrb[0].mxu0
    %v2055 = vpop.f32.mrb[0].mxu0
    %2056 = vdwg.mxu0
    %v2058 = vsel %vm649, %v2006, 0
    %v2061 = vsel %vm649, %v2008, 0
    %2063 = vmatprep.subr.bf16.mxu0 0
    %2064 = vmatpush1.bf16.xpose.msra.mxu0 %v2061
    %2065 = vmatprep.subr.bf16.mxu0 0
    %2066 = vmatpush1.bf16.xpose.msra.mxu0 0
    %2067 = vmatprep.subr.bf16.mxu0 0
    %2068 = vmatpush1.bf16.xpose.msra.mxu0 0
    %2069 = vmatprep.subr.bf16.mxu0 0
    %2070 = vmatpush1.bf16.xpose.msra.mxu0 0
    %2071 = vmatprep.subr.bf16.mxu0 0
    %2072 = vmatpush1.bf16.xpose.msra.mxu0 0
    %2073 = vmatprep.subr.bf16.mxu0 0
    %2074 = vmatpush1.bf16.xpose.msra.mxu0 0
    %2075 = vmatprep.subr.bf16.mxu0 0
    %2076 = vmatpush1.bf16.xpose.msra.mxu0 0
    %2077 = vmatprep.subr.bf16.mxu0 0
    %2078 = vmatpush1.bf16.xpose.msra.mxu0 0
    %2079 = vmatprep.subr.bf16.mxu0 0
    %2080 = vmatpush1.bf16.xpose.msra.mxu0 0
    %2081 = vmatprep.subr.bf16.mxu0 0
    %2082 = vmatpush1.bf16.xpose.msra.mxu0 0
    %2083 = vmatprep.subr.bf16.mxu0 0
    %2084 = vmatpush1.bf16.xpose.msra.mxu0 0
    %2085 = vmatprep.subr.bf16.mxu0 0
    %2086 = vmatpush1.bf16.xpose.msra.mxu0 0
    %2087 = vmatprep.subr.bf16.mxu0 0
    %2088 = vmatpush1.bf16.xpose.msra.mxu0 0
    %2089 = vmatprep.subr.bf16.mxu0 0
    %2090 = vmatpush1.bf16.xpose.msra.mxu0 0
    %2091 = vmatprep.subr.bf16.mxu0 0
    %2092 = vmatpush1.bf16.xpose.msra.mxu0 0
    %2093 = vmatprep.subr.bf16.mxu0 0
    %2094 = vmatpush1.bf16.xpose.msra.mxu0 0
    %2095 = vmatprep.mubr.bf16.mxu0 0
    %2096 = vmatmul.mubr.bf16.gmra.mrb[0].mxu0 %v2058
    %v2097 = vpop.f32.mrb[0].mxu0
    %v2098 = vadd.f32 0.0, %v2097
    %v2099 = vpop.f32.mrb[0].mxu0
    %v2100 = vpop.f32.mrb[0].mxu0
    %v2101 = vpop.f32.mrb[0].mxu0
    %2102 = vdwg.mxu0
    %v2103 = vmul.f32 %v2052, 0.125
    %v2104 = vmul.f32 %v2098, 0.125
    %v2105 = vadd.f32 %v2103, %v770
    %v2106 = vadd.f32 %v2104, %v774
    %v2107 = vsel %vm779, %v2105, -inf
    %2108 = vmax.xlane.f32.xlu0 %v2107
    %v2109 = vpop.xlane.xlu0 %2108
    %v2110 = vsel %vm779, %v2106, -inf
    %2111 = vmax.xlane.f32.xlu0 %v2110
    %v2112 = vpop.xlane.xlu0 %2111
    %v2113 = vsub.f32 %v2105, %v2109
    %v2114 = vsub.f32 %v2106, %v2112
    %v2115 = vmul.f32 %v2113, 1.442695
    %v2116 = vpow.pop %v2115
    %v2117 = vmul.f32 %v2114, 1.442695
    %v2118 = vpow.pop %v2117
    %v2119 = vsel %vm779, %v2116, 0.0
    %2120 = vadd.xlane.f32.xlu0 %v2119
    %v2121 = vpop.xlane.xlu0 %2120
    %v2122 = vsel %vm779, %v2118, 0.0
    %2123 = vadd.xlane.f32.xlu0 %v2122
    %v2124 = vpop.xlane.xlu0 %2123
    %v2125 = vrcp.pop %v2121
    %v2126 = vrcp.pop %v2124
    %v2127 = vmul.f32 %v2116, %v2125
    %v2128 = vmul.f32 %v2118, %v2126
    %v2129 = vpack.c.bf16 %v2127, %v2127
    %v2130 = vpack.c.bf16 %v2128, %v2128
    %v2132 = vsel %vm779, %v2129, 0
    %v2135 = vsel %vm807, %v2009, 0
    %2137 = vmatprep.subr.bf16.mxu0 0
    %2138 = vmatpush1.bf16.msra.mxu0 %v2135
    %2139 = vmatprep.subr.bf16.mxu0 0
    %2140 = vmatpush1.bf16.msra.mxu0 0
    %2141 = vmatprep.subr.bf16.mxu0 0
    %2142 = vmatpush1.bf16.msra.mxu0 0
    %2143 = vmatprep.subr.bf16.mxu0 0
    %2144 = vmatpush1.bf16.msra.mxu0 0
    %2145 = vmatprep.subr.bf16.mxu0 0
    %2146 = vmatpush1.bf16.msra.mxu0 0
    %2147 = vmatprep.subr.bf16.mxu0 0
    %2148 = vmatpush1.bf16.msra.mxu0 0
    %2149 = vmatprep.subr.bf16.mxu0 0
    %2150 = vmatpush1.bf16.msra.mxu0 0
    %2151 = vmatprep.subr.bf16.mxu0 0
    %2152 = vmatpush1.bf16.msra.mxu0 0
    %2153 = vmatprep.subr.bf16.mxu0 0
    %2154 = vmatpush1.bf16.msra.mxu0 0
    %2155 = vmatprep.subr.bf16.mxu0 0
    %2156 = vmatpush1.bf16.msra.mxu0 0
    %2157 = vmatprep.subr.bf16.mxu0 0
    %2158 = vmatpush1.bf16.msra.mxu0 0
    %2159 = vmatprep.subr.bf16.mxu0 0
    %2160 = vmatpush1.bf16.msra.mxu0 0
    %2161 = vmatprep.subr.bf16.mxu0 0
    %2162 = vmatpush1.bf16.msra.mxu0 0
    %2163 = vmatprep.subr.bf16.mxu0 0
    %2164 = vmatpush1.bf16.msra.mxu0 0
    %2165 = vmatprep.subr.bf16.mxu0 0
    %2166 = vmatpush1.bf16.msra.mxu0 0
    %2167 = vmatprep.subr.bf16.mxu0 0
    %2168 = vmatpush1.bf16.msra.mxu0 0
    %2169 = vmatprep.mubr.bf16.mxu0 0
    %2170 = vmatmul.mubr.bf16.gmra.mrb[0].mxu0 %v2132
    %v2171 = vpop.f32.mrb[0].mxu0
    %v2172 = vadd.f32 0.0, %v2171
    %v2173 = vpop.f32.mrb[0].mxu0
    %v2174 = vpop.f32.mrb[0].mxu0
    %v2175 = vpop.f32.mrb[0].mxu0
    %2176 = vdwg.mxu0
    %v2178 = vsel %vm779, %v2130, 0
    %v2181 = vsel %vm807, %v2010, 0
    %2183 = vmatprep.subr.bf16.mxu0 0
    %2184 = vmatpush1.bf16.msra.mxu0 %v2181
    %2185 = vmatprep.subr.bf16.mxu0 0
    %2186 = vmatpush1.bf16.msra.mxu0 0
    %2187 = vmatprep.subr.bf16.mxu0 0
    %2188 = vmatpush1.bf16.msra.mxu0 0
    %2189 = vmatprep.subr.bf16.mxu0 0
    %2190 = vmatpush1.bf16.msra.mxu0 0
    %2191 = vmatprep.subr.bf16.mxu0 0
    %2192 = vmatpush1.bf16.msra.mxu0 0
    %2193 = vmatprep.subr.bf16.mxu0 0
    %2194 = vmatpush1.bf16.msra.mxu0 0
    %2195 = vmatprep.subr.bf16.mxu0 0
    %2196 = vmatpush1.bf16.msra.mxu0 0
    %2197 = vmatprep.subr.bf16.mxu0 0
    %2198 = vmatpush1.bf16.msra.mxu0 0
    %2199 = vmatprep.subr.bf16.mxu0 0
    %2200 = vmatpush1.bf16.msra.mxu0 0
    %2201 = vmatprep.subr.bf16.mxu0 0
    %2202 = vmatpush1.bf16.msra.mxu0 0
    %2203 = vmatprep.subr.bf16.mxu0 0
    %2204 = vmatpush1.bf16.msra.mxu0 0
    %2205 = vmatprep.subr.bf16.mxu0 0
    %2206 = vmatpush1.bf16.msra.mxu0 0
    %2207 = vmatprep.subr.bf16.mxu0 0
    %2208 = vmatpush1.bf16.msra.mxu0 0
    %2209 = vmatprep.subr.bf16.mxu0 0
    %2210 = vmatpush1.bf16.msra.mxu0 0
    %2211 = vmatprep.subr.bf16.mxu0 0
    %2212 = vmatpush1.bf16.msra.mxu0 0
    %2213 = vmatprep.subr.bf16.mxu0 0
    %2214 = vmatpush1.bf16.msra.mxu0 0
    %2215 = vmatprep.mubr.bf16.mxu0 0
    %2216 = vmatmul.mubr.bf16.gmra.mrb[0].mxu0 %v2178
    %v2217 = vpop.f32.mrb[0].mxu0
    %v2218 = vadd.f32 0.0, %v2217
    %v2219 = vpop.f32.mrb[0].mxu0
    %v2220 = vpop.f32.mrb[0].mxu0
    %v2221 = vpop.f32.mrb[0].mxu0
    %2222 = vdwg.mxu0
    %v2223 = vpack.c.bf16 %v2218, %v2172
    %2225 = vrot.lane.b32.xlu0 %v2005, 64
    %v2226 = vpop.permute.xlu0 %2225
    %2228 = vrot.lane.b32.xlu0 %v2007, 64
    %v2229 = vpop.permute.xlu0 %2228
    %v2231 = vsel %vm649, %v2226, 0
    %v2234 = vsel %vm649, %v2229, 0
    %2236 = vmatprep.subr.bf16.mxu0 0
    %2237 = vmatpush1.bf16.xpose.msra.mxu0 %v2234
    %2238 = vmatprep.subr.bf16.mxu0 0
    %2239 = vmatpush1.bf16.xpose.msra.mxu0 0
    %2240 = vmatprep.subr.bf16.mxu0 0
    %2241 = vmatpush1.bf16.xpose.msra.mxu0 0
    %2242 = vmatprep.subr.bf16.mxu0 0
    %2243 = vmatpush1.bf16.xpose.msra.mxu0 0
    %2244 = vmatprep.subr.bf16.mxu0 0
    %2245 = vmatpush1.bf16.xpose.msra.mxu0 0
    %2246 = vmatprep.subr.bf16.mxu0 0
    %2247 = vmatpush1.bf16.xpose.msra.mxu0 0
    %2248 = vmatprep.subr.bf16.mxu0 0
    %2249 = vmatpush1.bf16.xpose.msra.mxu0 0
    %2250 = vmatprep.subr.bf16.mxu0 0
    %2251 = vmatpush1.bf16.xpose.msra.mxu0 0
    %2252 = vmatprep.subr.bf16.mxu0 0
    %2253 = vmatpush1.bf16.xpose.msra.mxu0 0
    %2254 = vmatprep.subr.bf16.mxu0 0
    %2255 = vmatpush1.bf16.xpose.msra.mxu0 0
    %2256 = vmatprep.subr.bf16.mxu0 0
    %2257 = vmatpush1.bf16.xpose.msra.mxu0 0
    %2258 = vmatprep.subr.bf16.mxu0 0
    %2259 = vmatpush1.bf16.xpose.msra.mxu0 0
    %2260 = vmatprep.subr.bf16.mxu0 0
    %2261 = vmatpush1.bf16.xpose.msra.mxu0 0
    %2262 = vmatprep.subr.bf16.mxu0 0
    %2263 = vmatpush1.bf16.xpose.msra.mxu0 0
    %2264 = vmatprep.subr.bf16.mxu0 0
    %2265 = vmatpush1.bf16.xpose.msra.mxu0 0
    %2266 = vmatprep.subr.bf16.mxu0 0
    %2267 = vmatpush1.bf16.xpose.msra.mxu0 0
    %2268 = vmatprep.mubr.bf16.mxu0 0
    %2269 = vmatmul.mubr.bf16.gmra.mrb[0].mxu0 %v2231
    %v2270 = vpop.f32.mrb[0].mxu0
    %v2271 = vadd.f32 0.0, %v2270
    %v2272 = vpop.f32.mrb[0].mxu0
    %v2273 = vpop.f32.mrb[0].mxu0
    %v2274 = vpop.f32.mrb[0].mxu0
    %2275 = vdwg.mxu0
    %2277 = vrot.lane.b32.xlu0 %v2006, 64
    %v2278 = vpop.permute.xlu0 %2277
    %2280 = vrot.lane.b32.xlu0 %v2008, 64
    %v2281 = vpop.permute.xlu0 %2280
    %v2283 = vsel %vm649, %v2278, 0
    %v2286 = vsel %vm649, %v2281, 0
    %2288 = vmatprep.subr.bf16.mxu0 0
    %2289 = vmatpush1.bf16.xpose.msra.mxu0 %v2286
    %2290 = vmatprep.subr.bf16.mxu0 0
    %2291 = vmatpush1.bf16.xpose.msra.mxu0 0
    %2292 = vmatprep.subr.bf16.mxu0 0
    %2293 = vmatpush1.bf16.xpose.msra.mxu0 0
    %2294 = vmatprep.subr.bf16.mxu0 0
    %2295 = vmatpush1.bf16.xpose.msra.mxu0 0
    %2296 = vmatprep.subr.bf16.mxu0 0
    %2297 = vmatpush1.bf16.xpose.msra.mxu0 0
    %2298 = vmatprep.subr.bf16.mxu0 0
    %2299 = vmatpush1.bf16.xpose.msra.mxu0 0
    %2300 = vmatprep.subr.bf16.mxu0 0
    %2301 = vmatpush1.bf16.xpose.msra.mxu0 0
    %2302 = vmatprep.subr.bf16.mxu0 0
    %2303 = vmatpush1.bf16.xpose.msra.mxu0 0
    %2304 = vmatprep.subr.bf16.mxu0 0
    %2305 = vmatpush1.bf16.xpose.msra.mxu0 0
    %2306 = vmatprep.subr.bf16.mxu0 0
    %2307 = vmatpush1.bf16.xpose.msra.mxu0 0
    %2308 = vmatprep.subr.bf16.mxu0 0
    %2309 = vmatpush1.bf16.xpose.msra.mxu0 0
    %2310 = vmatprep.subr.bf16.mxu0 0
    %2311 = vmatpush1.bf16.xpose.msra.mxu0 0
    %2312 = vmatprep.subr.bf16.mxu0 0
    %2313 = vmatpush1.bf16.xpose.msra.mxu0 0
    %2314 = vmatprep.subr.bf16.mxu0 0
    %2315 = vmatpush1.bf16.xpose.msra.mxu0 0
    %2316 = vmatprep.subr.bf16.mxu0 0
    %2317 = vmatpush1.bf16.xpose.msra.mxu0 0
    %2318 = vmatprep.subr.bf16.mxu0 0
    %2319 = vmatpush1.bf16.xpose.msra.mxu0 0
    %2320 = vmatprep.mubr.bf16.mxu0 0
    %2321 = vmatmul.mubr.bf16.gmra.mrb[0].mxu0 %v2283
    %v2322 = vpop.f32.mrb[0].mxu0
    %v2323 = vadd.f32 0.0, %v2322
    %v2324 = vpop.f32.mrb[0].mxu0
    %v2325 = vpop.f32.mrb[0].mxu0
    %v2326 = vpop.f32.mrb[0].mxu0
    %2327 = vdwg.mxu0
    %v2328 = vmul.f32 %v2271, 0.125
    %v2329 = vmul.f32 %v2323, 0.125
    %v2330 = vadd.f32 %v2328, %v770
    %v2331 = vadd.f32 %v2329, %v774
    %v2332 = vsel %vm779, %v2330, -inf
    %2333 = vmax.xlane.f32.xlu0 %v2332
    %v2334 = vpop.xlane.xlu0 %2333
    %v2335 = vsel %vm779, %v2331, -inf
    %2336 = vmax.xlane.f32.xlu0 %v2335
    %v2337 = vpop.xlane.xlu0 %2336
    %v2338 = vsub.f32 %v2330, %v2334
    %v2339 = vsub.f32 %v2331, %v2337
    %v2340 = vmul.f32 %v2338, 1.442695
    %v2341 = vpow.pop %v2340
    %v2342 = vmul.f32 %v2339, 1.442695
    %v2343 = vpow.pop %v2342
    %v2344 = vsel %vm779, %v2341, 0.0
    %2345 = vadd.xlane.f32.xlu0 %v2344
    %v2346 = vpop.xlane.xlu0 %2345
    %v2347 = vsel %vm779, %v2343, 0.0
    %2348 = vadd.xlane.f32.xlu0 %v2347
    %v2349 = vpop.xlane.xlu0 %2348
    %v2350 = vrcp.pop %v2346
    %v2351 = vrcp.pop %v2349
    %v2352 = vmul.f32 %v2341, %v2350
    %v2353 = vmul.f32 %v2343, %v2351
    %v2354 = vpack.c.bf16 %v2352, %v2352
    %v2355 = vpack.c.bf16 %v2353, %v2353
    %2357 = vrot.lane.b32.xlu0 %v2009, 64
    %v2358 = vpop.permute.xlu0 %2357
    %v2360 = vsel %vm779, %v2354, 0
    %v2363 = vsel %vm807, %v2358, 0
    %2365 = vmatprep.subr.bf16.mxu0 0
    %2366 = vmatpush1.bf16.msra.mxu0 %v2363
    %2367 = vmatprep.subr.bf16.mxu0 0
    %2368 = vmatpush1.bf16.msra.mxu0 0
    %2369 = vmatprep.subr.bf16.mxu0 0
    %2370 = vmatpush1.bf16.msra.mxu0 0
    %2371 = vmatprep.subr.bf16.mxu0 0
    %2372 = vmatpush1.bf16.msra.mxu0 0
    %2373 = vmatprep.subr.bf16.mxu0 0
    %2374 = vmatpush1.bf16.msra.mxu0 0
    %2375 = vmatprep.subr.bf16.mxu0 0
    %2376 = vmatpush1.bf16.msra.mxu0 0
    %2377 = vmatprep.subr.bf16.mxu0 0
    %2378 = vmatpush1.bf16.msra.mxu0 0
    %2379 = vmatprep.subr.bf16.mxu0 0
    %2380 = vmatpush1.bf16.msra.mxu0 0
    %2381 = vmatprep.subr.bf16.mxu0 0
    %2382 = vmatpush1.bf16.msra.mxu0 0
    %2383 = vmatprep.subr.bf16.mxu0 0
    %2384 = vmatpush1.bf16.msra.mxu0 0
    %2385 = vmatprep.subr.bf16.mxu0 0
    %2386 = vmatpush1.bf16.msra.mxu0 0
    %2387 = vmatprep.subr.bf16.mxu0 0
    %2388 = vmatpush1.bf16.msra.mxu0 0
    %2389 = vmatprep.subr.bf16.mxu0 0
    %2390 = vmatpush1.bf16.msra.mxu0 0
    %2391 = vmatprep.subr.bf16.mxu0 0
    %2392 = vmatpush1.bf16.msra.mxu0 0
    %2393 = vmatprep.subr.bf16.mxu0 0
    %2394 = vmatpush1.bf16.msra.mxu0 0
    %2395 = vmatprep.subr.bf16.mxu0 0
    %2396 = vmatpush1.bf16.msra.mxu0 0
    %2397 = vmatprep.mubr.bf16.mxu0 0
    %2398 = vmatmul.mubr.bf16.gmra.mrb[0].mxu0 %v2360
    %v2399 = vpop.f32.mrb[0].mxu0
    %v2400 = vadd.f32 0.0, %v2399
    %v2401 = vpop.f32.mrb[0].mxu0
    %v2402 = vpop.f32.mrb[0].mxu0
    %v2403 = vpop.f32.mrb[0].mxu0
    %2404 = vdwg.mxu0
    %2406 = vrot.lane.b32.xlu0 %v2010, 64
    %v2407 = vpop.permute.xlu0 %2406
    %v2409 = vsel %vm779, %v2355, 0
    %v2412 = vsel %vm807, %v2407, 0
    %2414 = vmatprep.subr.bf16.mxu0 0
    %2415 = vmatpush1.bf16.msra.mxu0 %v2412
    %2416 = vmatprep.subr.bf16.mxu0 0
    %2417 = vmatpush1.bf16.msra.mxu0 0
    %2418 = vmatprep.subr.bf16.mxu0 0
    %2419 = vmatpush1.bf16.msra.mxu0 0
    %2420 = vmatprep.subr.bf16.mxu0 0
    %2421 = vmatpush1.bf16.msra.mxu0 0
    %2422 = vmatprep.subr.bf16.mxu0 0
    %2423 = vmatpush1.bf16.msra.mxu0 0
    %2424 = vmatprep.subr.bf16.mxu0 0
    %2425 = vmatpush1.bf16.msra.mxu0 0
    %2426 = vmatprep.subr.bf16.mxu0 0
    %2427 = vmatpush1.bf16.msra.mxu0 0
    %2428 = vmatprep.subr.bf16.mxu0 0
    %2429 = vmatpush1.bf16.msra.mxu0 0
    %2430 = vmatprep.subr.bf16.mxu0 0
    %2431 = vmatpush1.bf16.msra.mxu0 0
    %2432 = vmatprep.subr.bf16.mxu0 0
    %2433 = vmatpush1.bf16.msra.mxu0 0
    %2434 = vmatprep.subr.bf16.mxu0 0
    %2435 = vmatpush1.bf16.msra.mxu0 0
    %2436 = vmatprep.subr.bf16.mxu0 0
    %2437 = vmatpush1.bf16.msra.mxu0 0
    %2438 = vmatprep.subr.bf16.mxu0 0
    %2439 = vmatpush1.bf16.msra.mxu0 0
    %2440 = vmatprep.subr.bf16.mxu0 0
    %2441 = vmatpush1.bf16.msra.mxu0 0
    %2442 = vmatprep.subr.bf16.mxu0 0
    %2443 = vmatpush1.bf16.msra.mxu0 0
    %2444 = vmatprep.subr.bf16.mxu0 0
    %2445 = vmatpush1.bf16.msra.mxu0 0
    %2446 = vmatprep.mubr.bf16.mxu0 0
    %2447 = vmatmul.mubr.bf16.gmra.mrb[0].mxu0 %v2409
    %v2448 = vpop.f32.mrb[0].mxu0
    %v2449 = vadd.f32 0.0, %v2448
    %v2450 = vpop.f32.mrb[0].mxu0
    %v2451 = vpop.f32.mrb[0].mxu0
    %v2452 = vpop.f32.mrb[0].mxu0
    %2453 = vdwg.mxu0
    %v2454 = vpack.c.bf16 %v2449, %v2400
    %v2463 = vunpack.c.l.b16 %v1997
    %v2464 = vunpack.c.l.b16 %v1998
    %v2465 = vunpack.c.l.b16 %v1999
    %v2466 = vunpack.c.l.b16 %v2000
    %v2467 = vunpack.c.l.b16 %v2001
    %v2468 = vunpack.c.l.b16 %v2002
    %v2469 = vunpack.c.l.b16 %v2003
    %v2470 = vunpack.c.l.b16 %v2004
    %v2471 = vpack.c.b16 %v2464, %v2463
    %v2472 = vpack.c.b16 %v2466, %v2465
    %v2473 = vpack.c.b16 %v2468, %v2467
    %v2474 = vpack.c.b16 %v2470, %v2469
    %v2480 = vsel %vm649, %v2454, 0
    %2482 = vmatprep.subr.bf16.mxu0 0
    %2483 = vmatpush1.bf16.msra.mxu0 %v2471
    %2484 = vmatprep.subr.bf16.mxu0 0
    %2485 = vmatpush1.bf16.msra.mxu0 %v2472
    %2486 = vmatprep.subr.bf16.mxu0 0
    %2487 = vmatpush1.bf16.msra.mxu0 %v2473
    %2488 = vmatprep.subr.bf16.mxu0 0
    %2489 = vmatpush1.bf16.msra.mxu0 %v2474
    %2490 = vmatprep.subr.bf16.mxu0 0
    %2491 = vmatpush1.bf16.msra.mxu0 0
    %2492 = vmatprep.subr.bf16.mxu0 0
    %2493 = vmatpush1.bf16.msra.mxu0 0
    %2494 = vmatprep.subr.bf16.mxu0 0
    %2495 = vmatpush1.bf16.msra.mxu0 0
    %2496 = vmatprep.subr.bf16.mxu0 0
    %2497 = vmatpush1.bf16.msra.mxu0 0
    %2498 = vmatprep.subr.bf16.mxu0 0
    %2499 = vmatpush1.bf16.msra.mxu0 0
    %2500 = vmatprep.subr.bf16.mxu0 0
    %2501 = vmatpush1.bf16.msra.mxu0 0
    %2502 = vmatprep.subr.bf16.mxu0 0
    %2503 = vmatpush1.bf16.msra.mxu0 0
    %2504 = vmatprep.subr.bf16.mxu0 0
    %2505 = vmatpush1.bf16.msra.mxu0 0
    %2506 = vmatprep.subr.bf16.mxu0 0
    %2507 = vmatpush1.bf16.msra.mxu0 0
    %2508 = vmatprep.subr.bf16.mxu0 0
    %2509 = vmatpush1.bf16.msra.mxu0 0
    %2510 = vmatprep.subr.bf16.mxu0 0
    %2511 = vmatpush1.bf16.msra.mxu0 0
    %2512 = vmatprep.subr.bf16.mxu0 0
    %2513 = vmatpush1.bf16.msra.mxu0 0
    %2514 = vmatprep.mubr.bf16.mxu0 0
    %2515 = vmatmul.mubr.bf16.gmra.mrb[0].mxu0 %v2480
    %v2516 = vpop.f32.mrb[0].mxu0
    %v2517 = vadd.f32 0.0, %v2516
    %v2518 = vpop.f32.mrb[0].mxu0
    %v2519 = vpop.f32.mrb[0].mxu0
    %v2520 = vadd.f32 0.0, %v2519
    %v2521 = vpop.f32.mrb[0].mxu0
    %2522 = vdwg.mxu0
    %v2531 = vunpack.c.l.b16 %v1989
    %v2532 = vunpack.c.l.b16 %v1990
    %v2533 = vunpack.c.l.b16 %v1991
    %v2534 = vunpack.c.l.b16 %v1992
    %v2535 = vunpack.c.l.b16 %v1993
    %v2536 = vunpack.c.l.b16 %v1994
    %v2537 = vunpack.c.l.b16 %v1995
    %v2538 = vunpack.c.l.b16 %v1996
    %v2539 = vpack.c.b16 %v2532, %v2531
    %v2540 = vpack.c.b16 %v2534, %v2533
    %v2541 = vpack.c.b16 %v2536, %v2535
    %v2542 = vpack.c.b16 %v2538, %v2537
    %v2548 = vsel %vm649, %v2223, 0
    %2550 = vmatprep.subr.bf16.mxu0 0
    %2551 = vmatpush1.bf16.msra.mxu0 %v2539
    %2552 = vmatprep.subr.bf16.mxu0 0
    %2553 = vmatpush1.bf16.msra.mxu0 %v2540
    %2554 = vmatprep.subr.bf16.mxu0 0
    %2555 = vmatpush1.bf16.msra.mxu0 %v2541
    %2556 = vmatprep.subr.bf16.mxu0 0
    %2557 = vmatpush1.bf16.msra.mxu0 %v2542
    %2558 = vmatprep.subr.bf16.mxu0 0
    %2559 = vmatpush1.bf16.msra.mxu0 0
    %2560 = vmatprep.subr.bf16.mxu0 0
    %2561 = vmatpush1.bf16.msra.mxu0 0
    %2562 = vmatprep.subr.bf16.mxu0 0
    %2563 = vmatpush1.bf16.msra.mxu0 0
    %2564 = vmatprep.subr.bf16.mxu0 0
    %2565 = vmatpush1.bf16.msra.mxu0 0
    %2566 = vmatprep.subr.bf16.mxu0 0
    %2567 = vmatpush1.bf16.msra.mxu0 0
    %2568 = vmatprep.subr.bf16.mxu0 0
    %2569 = vmatpush1.bf16.msra.mxu0 0
    %2570 = vmatprep.subr.bf16.mxu0 0
    %2571 = vmatpush1.bf16.msra.mxu0 0
    %2572 = vmatprep.subr.bf16.mxu0 0
    %2573 = vmatpush1.bf16.msra.mxu0 0
    %2574 = vmatprep.subr.bf16.mxu0 0
    %2575 = vmatpush1.bf16.msra.mxu0 0
    %2576 = vmatprep.subr.bf16.mxu0 0
    %2577 = vmatpush1.bf16.msra.mxu0 0
    %2578 = vmatprep.subr.bf16.mxu0 0
    %2579 = vmatpush1.bf16.msra.mxu0 0
    %2580 = vmatprep.subr.bf16.mxu0 0
    %2581 = vmatpush1.bf16.msra.mxu0 0
    %2582 = vmatprep.mubr.bf16.mxu0 0
    %2583 = vmatmul.mubr.bf16.gmra.mrb[0].mxu0 %v2548
    %v2584 = vpop.f32.mrb[0].mxu0
    %v2585 = vadd.f32 %v2517, %v2584
    %v2586 = vpop.f32.mrb[0].mxu0
    %v2587 = vpop.f32.mrb[0].mxu0
    %v2588 = vadd.f32 %v2520, %v2587
    %v2589 = vpop.f32.mrb[0].mxu0
    %2590 = vdwg.mxu0
    %s2591 = scalar_lea.vmem [#allocation11], 1
    %v2592 = vld [vmem:[%s2591] sm:$0x1]
    %v2594 = vlaneseq
    %v2595 = vshrl.u32 %v2594, 7
    %v2596 = vsub.s32 0, %v2595
    %v2597 = vrot.slane %v2592, %v2596
    %v2599 = vadd.f32 %v2585, %v2597
    %v2600 = vadd.f32 %v2588, %v2597
    %v2601 = vadd.f32 %v1722, %v2599
    %v2602 = vadd.f32 %v1723, %v2600
    %s2603 = scalar_lea.vmem %s15, 1
    %v2604 = vld [vmem:[%s2603] sm:$0x1]
    %s2605 = scalar_lea.vmem %s16, 1
    %v2606 = vld [vmem:[%s2605] sm:$0x1]
    %2607 = vadd.xlane.f32.xlu0 %v2601
    %v2608 = vpop.xlane.xlu0 %2607
    %2609 = vadd.xlane.f32.xlu0 %v2602
    %v2610 = vpop.xlane.xlu0 %2609
    %v2611 = vmul.f32 %v2608, %v327
    %v2612 = vmul.f32 %v2610, %v327
    %v2613 = vsub.f32 %v2601, %v2611
    %v2614 = vsub.f32 %v2602, %v2612
    %v2615 = vmul.f32 %v2613, %v2613
    %v2616 = vmul.f32 %v2614, %v2614
    %2617 = vadd.xlane.f32.xlu0 %v2615
    %v2618 = vpop.xlane.xlu0 %2617
    %2619 = vadd.xlane.f32.xlu0 %v2616
    %v2620 = vpop.xlane.xlu0 %2619
    %v2621 = vmul.f32 %v2618, %v327
    %v2622 = vmul.f32 %v2620, %v327
    %v2623 = vadd.f32 %v2621, 1e-12
    %v2624 = vadd.f32 %v2622, 1e-12
    %v2625 = vrsqrt.pop %v2623
    %v2626 = vrsqrt.pop %v2624
    %v2627 = vmul.f32 %v2613, %v2625
    %v2628 = vmul.f32 %v2614, %v2626
    %v2630 = vlaneseq
    %v2631 = vshrl.u32 %v2630, 7
    %v2632 = vsub.s32 0, %v2631
    %v2633 = vrot.slane %v2604, %v2632
    %v2635 = vmul.f32 %v2627, %v2633
    %v2636 = vmul.f32 %v2628, %v2633
    %v2638 = vlaneseq
    %v2639 = vshrl.u32 %v2638, 7
    %v2640 = vsub.s32 0, %v2639
    %v2641 = vrot.slane %v2606, %v2640
    %v2643 = vadd.f32 %v2635, %v2641
    %v2644 = vadd.f32 %v2636, %v2641
    %v2645 = vpack.c.bf16 %v2644, %v2643
    %s2646 = scalar_lea.vmem [#allocation12], 128
    %v2647 = vld [vmem:[%s2646] sm:$0xff]
    %v2648 = vld [vmem:[%s2646 + $0x8] sm:$0xff]
    %v2649 = vld [vmem:[%s2646 + $0x10] sm:$0xff]
    %v2650 = vld [vmem:[%s2646 + $0x18] sm:$0xff]
    %v2651 = vld [vmem:[%s2646 + $0x20] sm:$0xff]
    %v2652 = vld [vmem:[%s2646 + $0x28] sm:$0xff]
    %v2653 = vld [vmem:[%s2646 + $0x30] sm:$0xff]
    %v2654 = vld [vmem:[%s2646 + $0x38] sm:$0xff]
    %v2655 = vld [vmem:[%s2646 + $0x40] sm:$0xff]
    %v2656 = vld [vmem:[%s2646 + $0x48] sm:$0xff]
    %v2657 = vld [vmem:[%s2646 + $0x50] sm:$0xff]
    %v2658 = vld [vmem:[%s2646 + $0x58] sm:$0xff]
    %v2659 = vld [vmem:[%s2646 + $0x60] sm:$0xff]
    %v2660 = vld [vmem:[%s2646 + $0x68] sm:$0xff]
    %v2661 = vld [vmem:[%s2646 + $0x70] sm:$0xff]
    %v2662 = vld [vmem:[%s2646 + $0x78] sm:$0xff]
    %s2663 = scalar_lea.vmem %s18, 2
    %v2664 = vld [vmem:[%s2663] sm:$0x3]
    %v2666 = vlaneseq
    %v2667 = vshrl.u32 %v2666, 7
    %v2668 = vsub.s32 0, %v2667
    %v2669 = vrot.slane %v2664, %v2668
    %v2670 = vlaneseq
    %v2671 = vshrl.u32 %v2670, 7
    %v2672 = vsub.s32 1, %v2671
    %v2673 = vrot.slane %v2664, %v2672
    %v2692 = vunpack.c.l.b16 %v2647
    %v2693 = vunpack.c.h.b16 %v2647
    %v2694 = vunpack.c.l.b16 %v2648
    %v2695 = vunpack.c.h.b16 %v2648
    %v2696 = vunpack.c.l.b16 %v2649
    %v2697 = vunpack.c.h.b16 %v2649
    %v2698 = vunpack.c.l.b16 %v2650
    %v2699 = vunpack.c.h.b16 %v2650
    %v2700 = vunpack.c.l.b16 %v2651
    %v2701 = vunpack.c.h.b16 %v2651
    %v2702 = vunpack.c.l.b16 %v2652
    %v2703 = vunpack.c.h.b16 %v2652
    %v2704 = vunpack.c.l.b16 %v2653
    %v2705 = vunpack.c.h.b16 %v2653
    %v2706 = vunpack.c.l.b16 %v2654
    %v2707 = vunpack.c.h.b16 %v2654
    %v2708 = vunpack.c.l.b16 %v2655
    %v2709 = vunpack.c.h.b16 %v2655
    %v2710 = vunpack.c.l.b16 %v2656
    %v2711 = vunpack.c.h.b16 %v2656
    %v2712 = vunpack.c.l.b16 %v2657
    %v2713 = vunpack.c.h.b16 %v2657
    %v2714 = vunpack.c.l.b16 %v2658
    %v2715 = vunpack.c.h.b16 %v2658
    %v2716 = vunpack.c.l.b16 %v2659
    %v2717 = vunpack.c.h.b16 %v2659
    %v2718 = vunpack.c.l.b16 %v2660
    %v2719 = vunpack.c.h.b16 %v2660
    %v2720 = vunpack.c.l.b16 %v2661
    %v2721 = vunpack.c.h.b16 %v2661
    %v2722 = vunpack.c.l.b16 %v2662
    %v2723 = vunpack.c.h.b16 %v2662
    %v2724 = vpack.c.b16 %v2694, %v2692
    %v2725 = vpack.c.b16 %v2695, %v2693
    %v2726 = vpack.c.b16 %v2698, %v2696
    %v2727 = vpack.c.b16 %v2699, %v2697
    %v2728 = vpack.c.b16 %v2702, %v2700
    %v2729 = vpack.c.b16 %v2703, %v2701
    %v2730 = vpack.c.b16 %v2706, %v2704
    %v2731 = vpack.c.b16 %v2707, %v2705
    %v2732 = vpack.c.b16 %v2710, %v2708
    %v2733 = vpack.c.b16 %v2711, %v2709
    %v2734 = vpack.c.b16 %v2714, %v2712
    %v2735 = vpack.c.b16 %v2715, %v2713
    %v2736 = vpack.c.b16 %v2718, %v2716
    %v2737 = vpack.c.b16 %v2719, %v2717
    %v2738 = vpack.c.b16 %v2722, %v2720
    %v2739 = vpack.c.b16 %v2723, %v2721
    %2756 = vmatprep.subr.bf16.mxu0 %v2725
    %2757 = vmatpush1.bf16.msra.mxu0 %v2724
    %2758 = vmatprep.subr.bf16.mxu0 %v2727
    %2759 = vmatpush1.bf16.msra.mxu0 %v2726
    %2760 = vmatprep.subr.bf16.mxu0 %v2729
    %2761 = vmatpush1.bf16.msra.mxu0 %v2728
    %2762 = vmatprep.subr.bf16.mxu0 %v2731
    %2763 = vmatpush1.bf16.msra.mxu0 %v2730
    %2764 = vmatprep.subr.bf16.mxu0 %v2733
    %2765 = vmatpush1.bf16.msra.mxu0 %v2732
    %2766 = vmatprep.subr.bf16.mxu0 %v2735
    %2767 = vmatpush1.bf16.msra.mxu0 %v2734
    %2768 = vmatprep.subr.bf16.mxu0 %v2737
    %2769 = vmatpush1.bf16.msra.mxu0 %v2736
    %2770 = vmatprep.subr.bf16.mxu0 %v2739
    %2771 = vmatpush1.bf16.msra.mxu0 %v2738
    %2772 = vmatprep.subr.bf16.mxu0 0
    %2773 = vmatpush1.bf16.msra.mxu0 0
    %2774 = vmatprep.subr.bf16.mxu0 0
    %2775 = vmatpush1.bf16.msra.mxu0 0
    %2776 = vmatprep.subr.bf16.mxu0 0
    %2777 = vmatpush1.bf16.msra.mxu0 0
    %2778 = vmatprep.subr.bf16.mxu0 0
    %2779 = vmatpush1.bf16.msra.mxu0 0
    %2780 = vmatprep.subr.bf16.mxu0 0
    %2781 = vmatpush1.bf16.msra.mxu0 0
    %2782 = vmatprep.subr.bf16.mxu0 0
    %2783 = vmatpush1.bf16.msra.mxu0 0
    %2784 = vmatprep.subr.bf16.mxu0 0
    %2785 = vmatpush1.bf16.msra.mxu0 0
    %2786 = vmatprep.subr.bf16.mxu0 0
    %2787 = vmatpush1.bf16.msra.mxu0 0
    %2788 = vmatprep.mubr.bf16.mxu0 0
    %2789 = vmatmul.mubr.bf16.gmra.mrb[0].mxu0 %v2645
    %v2790 = vpop.f32.mrb[0].mxu0
    %v2791 = vadd.f32 %v2669, %v2790
    %v2792 = vpop.f32.mrb[0].mxu0
    %v2793 = vadd.f32 %v2673, %v2792
    %v2794 = vpop.f32.mrb[0].mxu0
    %v2795 = vadd.f32 %v2669, %v2794
    %v2796 = vpop.f32.mrb[0].mxu0
    %v2797 = vadd.f32 %v2673, %v2796
    %2798 = vdwg.mxu0
    %v2799 = vmul.f32 %v2791, %v2791
    %v2800 = vmul.f32 %v2793, %v2793
    %v2801 = vmul.f32 %v2795, %v2795
    %v2802 = vmul.f32 %v2797, %v2797
    %v2803 = vmul.f32 %v2791, %v2799
    %v2804 = vmul.f32 %v2793, %v2800
    %v2805 = vmul.f32 %v2795, %v2801
    %v2806 = vmul.f32 %v2797, %v2802
    %v2807 = vmul.f32 %v2803, 0.044715
    %v2808 = vmul.f32 %v2804, 0.044715
    %v2809 = vmul.f32 %v2805, 0.044715
    %v2810 = vmul.f32 %v2806, 0.044715
    %v2811 = vadd.f32 %v2791, %v2807
    %v2812 = vadd.f32 %v2793, %v2808
    %v2813 = vadd.f32 %v2795, %v2809
    %v2814 = vadd.f32 %v2797, %v2810
    %v2815 = vmul.f32 %v2811, 0.7978846
    %v2816 = vmul.f32 %v2812, 0.7978846
    %v2817 = vmul.f32 %v2813, 0.7978846
    %v2818 = vmul.f32 %v2814, 0.7978846
    %v2819 = vtanh.pop %v2815
    %v2820 = vtanh.pop %v2816
    %v2821 = vtanh.pop %v2817
    %v2822 = vtanh.pop %v2818
    %v2823 = vadd.f32 %v2819, 1.0
    %v2824 = vadd.f32 %v2820, 1.0
    %v2825 = vadd.f32 %v2821, 1.0
    %v2826 = vadd.f32 %v2822, 1.0
    %v2827 = vmul.f32 %v2823, 0.5
    %v2828 = vmul.f32 %v2824, 0.5
    %v2829 = vmul.f32 %v2825, 0.5
    %v2830 = vmul.f32 %v2826, 0.5
    %v2831 = vmul.f32 %v2791, %v2827
    %v2832 = vmul.f32 %v2793, %v2828
    %v2833 = vmul.f32 %v2795, %v2829
    %v2834 = vmul.f32 %v2797, %v2830
    %v2835 = vpack.c.bf16 %v2833, %v2831
    %v2836 = vpack.c.bf16 %v2834, %v2832
    %s2837 = scalar_lea.vmem [#allocation14], 128
    %v2838 = vld [vmem:[%s2837] sm:$0xf]
    %v2839 = vld [vmem:[%s2837 + $0x4] sm:$0xf]
    %v2840 = vld [vmem:[%s2837 + $0x8] sm:$0xf]
    %v2841 = vld [vmem:[%s2837 + $0xc] sm:$0xf]
    %v2842 = vld [vmem:[%s2837 + $0x10] sm:$0xf]
    %v2843 = vld [vmem:[%s2837 + $0x14] sm:$0xf]
    %v2844 = vld [vmem:[%s2837 + $0x18] sm:$0xf]
    %v2845 = vld [vmem:[%s2837 + $0x1c] sm:$0xf]
    %v2846 = vld [vmem:[%s2837 + $0x20] sm:$0xf]
    %v2847 = vld [vmem:[%s2837 + $0x24] sm:$0xf]
    %v2848 = vld [vmem:[%s2837 + $0x28] sm:$0xf]
    %v2849 = vld [vmem:[%s2837 + $0x2c] sm:$0xf]
    %v2850 = vld [vmem:[%s2837 + $0x30] sm:$0xf]
    %v2851 = vld [vmem:[%s2837 + $0x34] sm:$0xf]
    %v2852 = vld [vmem:[%s2837 + $0x38] sm:$0xf]
    %v2853 = vld [vmem:[%s2837 + $0x3c] sm:$0xf]
    %v2854 = vld [vmem:[%s2837 + $0x40] sm:$0xf]
    %v2855 = vld [vmem:[%s2837 + $0x44] sm:$0xf]
    %v2856 = vld [vmem:[%s2837 + $0x48] sm:$0xf]
    %v2857 = vld [vmem:[%s2837 + $0x4c] sm:$0xf]
    %v2858 = vld [vmem:[%s2837 + $0x50] sm:$0xf]
    %v2859 = vld [vmem:[%s2837 + $0x54] sm:$0xf]
    %v2860 = vld [vmem:[%s2837 + $0x58] sm:$0xf]
    %v2861 = vld [vmem:[%s2837 + $0x5c] sm:$0xf]
    %v2862 = vld [vmem:[%s2837 + $0x60] sm:$0xf]
    %v2863 = vld [vmem:[%s2837 + $0x64] sm:$0xf]
    %v2864 = vld [vmem:[%s2837 + $0x68] sm:$0xf]
    %v2865 = vld [vmem:[%s2837 + $0x6c] sm:$0xf]
    %v2866 = vld [vmem:[%s2837 + $0x70] sm:$0xf]
    %v2867 = vld [vmem:[%s2837 + $0x74] sm:$0xf]
    %v2868 = vld [vmem:[%s2837 + $0x78] sm:$0xf]
    %v2869 = vld [vmem:[%s2837 + $0x7c] sm:$0xf]
    %s2870 = scalar_lea.vmem %s20, 1
    %v2871 = vld [vmem:[%s2870] sm:$0x1]
    %v2873 = vlaneseq
    %v2874 = vshrl.u32 %v2873, 7
    %v2875 = vsub.s32 0, %v2874
    %v2876 = vrot.slane %v2871, %v2875
    %v2910 = vunpack.c.l.b16 %v2838
    %v2911 = vunpack.c.l.b16 %v2839
    %v2912 = vunpack.c.l.b16 %v2840
    %v2913 = vunpack.c.l.b16 %v2841
    %v2914 = vunpack.c.l.b16 %v2842
    %v2915 = vunpack.c.l.b16 %v2843
    %v2916 = vunpack.c.l.b16 %v2844
    %v2917 = vunpack.c.l.b16 %v2845
    %v2918 = vunpack.c.l.b16 %v2846
    %v2919 = vunpack.c.l.b16 %v2847
    %v2920 = vunpack.c.l.b16 %v2848
    %v2921 = vunpack.c.l.b16 %v2849
    %v2922 = vunpack.c.l.b16 %v2850
    %v2923 = vunpack.c.l.b16 %v2851
    %v2924 = vunpack.c.l.b16 %v2852
    %v2925 = vunpack.c.l.b16 %v2853
    %v2926 = vunpack.c.l.b16 %v2854
    %v2927 = vunpack.c.l.b16 %v2855
    %v2928 = vunpack.c.l.b16 %v2856
    %v2929 = vunpack.c.l.b16 %v2857
    %v2930 = vunpack.c.l.b16 %v2858
    %v2931 = vunpack.c.l.b16 %v2859
    %v2932 = vunpack.c.l.b16 %v2860
    %v2933 = vunpack.c.l.b16 %v2861
    %v2934 = vunpack.c.l.b16 %v2862
    %v2935 = vunpack.c.l.b16 %v2863
    %v2936 = vunpack.c.l.b16 %v2864
    %v2937 = vunpack.c.l.b16 %v2865
    %v2938 = vunpack.c.l.b16 %v2866
    %v2939 = vunpack.c.l.b16 %v2867
    %v2940 = vunpack.c.l.b16 %v2868
    %v2941 = vunpack.c.l.b16 %v2869
    %v2942 = vpack.c.b16 %v2911, %v2910
    %v2943 = vpack.c.b16 %v2913, %v2912
    %v2944 = vpack.c.b16 %v2915, %v2914
    %v2945 = vpack.c.b16 %v2917, %v2916
    %v2946 = vpack.c.b16 %v2919, %v2918
    %v2947 = vpack.c.b16 %v2921, %v2920
    %v2948 = vpack.c.b16 %v2923, %v2922
    %v2949 = vpack.c.b16 %v2925, %v2924
    %v2950 = vpack.c.b16 %v2927, %v2926
    %v2951 = vpack.c.b16 %v2929, %v2928
    %v2952 = vpack.c.b16 %v2931, %v2930
    %v2953 = vpack.c.b16 %v2933, %v2932
    %v2954 = vpack.c.b16 %v2935, %v2934
    %v2955 = vpack.c.b16 %v2937, %v2936
    %v2956 = vpack.c.b16 %v2939, %v2938
    %v2957 = vpack.c.b16 %v2941, %v2940
    %2974 = vmatprep.subr.bf16.mxu0 0
    %2975 = vmatpush1.bf16.msra.mxu0 %v2942
    %2976 = vmatprep.subr.bf16.mxu0 0
    %2977 = vmatpush1.bf16.msra.mxu0 %v2943
    %2978 = vmatprep.subr.bf16.mxu0 0
    %2979 = vmatpush1.bf16.msra.mxu0 %v2944
    %2980 = vmatprep.subr.bf16.mxu0 0
    %2981 = vmatpush1.bf16.msra.mxu0 %v2945
    %2982 = vmatprep.subr.bf16.mxu0 0
    %2983 = vmatpush1.bf16.msra.mxu0 %v2946
    %2984 = vmatprep.subr.bf16.mxu0 0
    %2985 = vmatpush1.bf16.msra.mxu0 %v2947
    %2986 = vmatprep.subr.bf16.mxu0 0
    %2987 = vmatpush1.bf16.msra.mxu0 %v2948
    %2988 = vmatprep.subr.bf16.mxu0 0
    %2989 = vmatpush1.bf16.msra.mxu0 %v2949
    %2990 = vmatprep.subr.bf16.mxu0 0
    %2991 = vmatpush1.bf16.msra.mxu0 %v2950
    %2992 = vmatprep.subr.bf16.mxu0 0
    %2993 = vmatpush1.bf16.msra.mxu0 %v2951
    %2994 = vmatprep.subr.bf16.mxu0 0
    %2995 = vmatpush1.bf16.msra.mxu0 %v2952
    %2996 = vmatprep.subr.bf16.mxu0 0
    %2997 = vmatpush1.bf16.msra.mxu0 %v2953
    %2998 = vmatprep.subr.bf16.mxu0 0
    %2999 = vmatpush1.bf16.msra.mxu0 %v2954
    %3000 = vmatprep.subr.bf16.mxu0 0
    %3001 = vmatpush1.bf16.msra.mxu0 %v2955
    %3002 = vmatprep.subr.bf16.mxu0 0
    %3003 = vmatpush1.bf16.msra.mxu0 %v2956
    %3004 = vmatprep.subr.bf16.mxu0 0
    %3005 = vmatpush1.bf16.msra.mxu0 %v2957
    %3006 = vmatprep.mubr.bf16.mxu0 %v2836
    %3007 = vmatmul.mubr.bf16.gmra.mrb[0].mxu0 %v2835
    %v3008 = vpop.f32.mrb[0].mxu0
    %v3009 = vadd.f32 %v2876, %v3008
    %v3010 = vpop.f32.mrb[0].mxu0
    %v3011 = vpop.f32.mrb[0].mxu0
    %v3012 = vadd.f32 %v2876, %v3011
    %v3013 = vpop.f32.mrb[0].mxu0
    %3014 = vdwg.mxu0
    %v3015 = vadd.f32 %v2643, %v3009
    %v3016 = vadd.f32 %v2644, %v3012
    %s3017 = scalar_lea.vmem %s21, 1
    %v3018 = vld [vmem:[%s3017] sm:$0x1]
    %s3019 = scalar_lea.vmem %s22, 1
    %v3020 = vld [vmem:[%s3019] sm:$0x1]
    %3021 = vadd.xlane.f32.xlu0 %v3015
    %v3022 = vpop.xlane.xlu0 %3021
    %3023 = vadd.xlane.f32.xlu0 %v3016
    %v3024 = vpop.xlane.xlu0 %3023
    %v3025 = vmul.f32 %v3022, %v327
    %v3026 = vmul.f32 %v3024, %v327
    %v3027 = vsub.f32 %v3015, %v3025
    %v3028 = vsub.f32 %v3016, %v3026
    %v3029 = vmul.f32 %v3027, %v3027
    %v3030 = vmul.f32 %v3028, %v3028
    %3031 = vadd.xlane.f32.xlu0 %v3029
    %v3032 = vpop.xlane.xlu0 %3031
    %3033 = vadd.xlane.f32.xlu0 %v3030
    %v3034 = vpop.xlane.xlu0 %3033
    %v3035 = vmul.f32 %v3032, %v327
    %v3036 = vmul.f32 %v3034, %v327
    %v3037 = vadd.f32 %v3035, 1e-12
    %v3038 = vadd.f32 %v3036, 1e-12
    %v3039 = vrsqrt.pop %v3037
    %v3040 = vrsqrt.pop %v3038
    %v3041 = vmul.f32 %v3027, %v3039
    %v3042 = vmul.f32 %v3028, %v3040
    %v3044 = vlaneseq
    %v3045 = vshrl.u32 %v3044, 7
    %v3046 = vsub.s32 0, %v3045
    %v3047 = vrot.slane %v3018, %v3046
    %v3049 = vmul.f32 %v3041, %v3047
    %v3050 = vmul.f32 %v3042, %v3047
    %v3052 = vlaneseq
    %v3053 = vshrl.u32 %v3052, 7
    %v3054 = vsub.s32 0, %v3053
    %v3055 = vrot.slane %v3020, %v3054
    %v3057 = vadd.f32 %v3049, %v3055
    %v3058 = vadd.f32 %v3050, %v3055
    %v3060 = vrot.slane %v3058, 7
    %vm3062 = vcmask 1040384
    %v3063 = vsel %vm3062, %v3057, %v3060
    %v3064 = vld [vmem:[%s9] sm:$0xff]
    %v3065 = vld [vmem:[%s9 + $0x8] sm:$0xff]
    %v3066 = vld [vmem:[%s9 + $0x10] sm:$0xff]
    %v3067 = vld [vmem:[%s9 + $0x18] sm:$0xff]
    %v3068 = vld [vmem:[%s9 + $0x20] sm:$0xff]
    %v3069 = vld [vmem:[%s9 + $0x28] sm:$0xff]
    %v3070 = vld [vmem:[%s9 + $0x30] sm:$0xff]
    %v3071 = vld [vmem:[%s9 + $0x38] sm:$0xff]
    %v3072 = vld [vmem:[%s9 + $0x40] sm:$0xff]
    %v3073 = vld [vmem:[%s9 + $0x48] sm:$0xff]
    %v3074 = vld [vmem:[%s9 + $0x50] sm:$0xff]
    %v3075 = vld [vmem:[%s9 + $0x58] sm:$0xff]
    %v3076 = vld [vmem:[%s9 + $0x60] sm:$0xff]
    %v3077 = vld [vmem:[%s9 + $0x68] sm:$0xff]
    %v3078 = vld [vmem:[%s9 + $0x70] sm:$0xff]
    %v3079 = vld [vmem:[%s9 + $0x78] sm:$0xff]
    %v3080 = vld [vmem:[#allocation2] sm:$0x1]
    %v3082 = vlaneseq
    %v3083 = vshrl.u32 %v3082, 7
    %v3084 = vsub.s32 0, %v3083
    %v3085 = vrot.slane %v3080, %v3084
    %3087 = vmatprep.subr.mxu0 0.0
    %3088 = vmatpush1.msra.mxu0 %v3064
    %3089 = vmatprep.subr.mxu0 0.0
    %3090 = vmatpush1.msra.mxu0 %v3065
    %3091 = vmatprep.subr.mxu0 0.0
    %3092 = vmatpush1.msra.mxu0 %v3066
    %3093 = vmatprep.subr.mxu0 0.0
    %3094 = vmatpush1.msra.mxu0 %v3067
    %3095 = vmatprep.subr.mxu0 0.0
    %3096 = vmatpush1.msra.mxu0 %v3068
    %3097 = vmatprep.subr.mxu0 0.0
    %3098 = vmatpush1.msra.mxu0 %v3069
    %3099 = vmatprep.subr.mxu0 0.0
    %3100 = vmatpush1.msra.mxu0 %v3070
    %3101 = vmatprep.subr.mxu0 0.0
    %3102 = vmatpush1.msra.mxu0 %v3071
    %3103 = vmatprep.subr.mxu0 0.0
    %3104 = vmatpush1.msra.mxu0 %v3072
    %3105 = vmatprep.subr.mxu0 0.0
    %3106 = vmatpush1.msra.mxu0 %v3073
    %3107 = vmatprep.subr.mxu0 0.0
    %3108 = vmatpush1.msra.mxu0 %v3074
    %3109 = vmatprep.subr.mxu0 0.0
    %3110 = vmatpush1.msra.mxu0 %v3075
    %3111 = vmatprep.subr.mxu0 0.0
    %3112 = vmatpush1.msra.mxu0 %v3076
    %3113 = vmatprep.subr.mxu0 0.0
    %3114 = vmatpush1.msra.mxu0 %v3077
    %3115 = vmatprep.subr.mxu0 0.0
    %3116 = vmatpush1.msra.mxu0 %v3078
    %3117 = vmatprep.subr.mxu0 0.0
    %3118 = vmatpush1.msra.mxu0 %v3079
    %3119 = vmatprep.subr.mxu0 0.0
    %3120 = vmatpush1.msra.mxu0 0.0
    %3121 = vmatprep.subr.mxu0 0.0
    %3122 = vmatpush1.msra.mxu0 0.0
    %3123 = vmatprep.subr.mxu0 0.0
    %3124 = vmatpush1.msra.mxu0 0.0
    %3125 = vmatprep.subr.mxu0 0.0
    %3126 = vmatpush1.msra.mxu0 0.0
    %3127 = vmatprep.subr.mxu0 0.0
    %3128 = vmatpush1.msra.mxu0 0.0
    %3129 = vmatprep.subr.mxu0 0.0
    %3130 = vmatpush1.msra.mxu0 0.0
    %3131 = vmatprep.subr.mxu0 0.0
    %3132 = vmatpush1.msra.mxu0 0.0
    %3133 = vmatprep.subr.mxu0 0.0
    %3134 = vmatpush1.msra.mxu0 0.0
    %3135 = vmatprep.subr.mxu0 0.0
    %3136 = vmatpush1.msra.mxu0 0.0
    %3137 = vmatprep.subr.mxu0 0.0
    %3138 = vmatpush1.msra.mxu0 0.0
    %3139 = vmatprep.subr.mxu0 0.0
    %3140 = vmatpush1.msra.mxu0 0.0
    %3141 = vmatprep.subr.mxu0 0.0
    %3142 = vmatpush1.msra.mxu0 0.0
    %3143 = vmatprep.subr.mxu0 0.0
    %3144 = vmatpush1.msra.mxu0 0.0
    %3145 = vmatprep.subr.mxu0 0.0
    %3146 = vmatpush1.msra.mxu0 0.0
    %3147 = vmatprep.subr.mxu0 0.0
    %3148 = vmatpush1.msra.mxu0 0.0
    %3149 = vmatprep.subr.mxu0 0.0
    %3150 = vmatpush1.msra.mxu0 0.0
    %3151 = vmatprep.mubr.f32.mxu0 0.0
    %3152 = vmatmul.mubr.f32.gmra.mrb[0].mxu0 %v3063
    %v3153 = vpop.f32.mrb[0].mxu0
    %v3154 = vadd.f32 %v3085, %v3153
    %v3155 = vpop.f32.mrb[0].mxu0
    %3156 = vdwg.mxu0
    %3158 = vset.pattern.permute.xlu0 0
    %3159 = vperm.xlu0 %3158, %v3154
    %v3160 = vpop.permute.xlu0 %3159
    %3162 = vst [vmem:[#allocation15] sm:$0x3] %v3160
    %v3163 = vld [vmem:[%s3] sm:$0x3]
    %v3164 = vmax.f32 %v3154, 0.0
    %v3165 = vmul.f32 %v3154, %v3163
    %v3166 = vsub.f32 %v3164, %v3165
    %v3167 = vand.u32 2147483647, %v3154
    %v3168 = vsub.f32 0.0, %v3167
    %v3169 = vmul.f32 %v3168, 1.442695
    %v3170 = vpow.pop %v3169
    %v3171 = vadd.f32 %v3170, 1.0
    %v3172 = vlog2.pop %v3171
    %v3173 = vmul.f32 %v3172, 0.6931472
    %v3174 = vmul.f32 -0.5, %v3170
    %v3175 = vadd.f32 %v3174, 1.0
    %v3176 = vmul.f32 %v3175, %v3170
    %v3177 = vand.u32 2147483647, %v3170
    %vm3178 = vcmp.lt.f32.partialorder %v3177, 0.0004427343
    %v3179 = vsel %vm3178, %v3176, %v3173
    %v3180 = vadd.f32 %v3166, %v3179
    %vm3181 = vcmask 1024
    %v3182 = vsel %vm3181, %v3180, 0.0
    %3183 = vadd.xlane.f32.xlu0 %v3182
    %v3184 = vpop.xlane.xlu0 %3183
    %v3185 = vrot.slane %v3184, 4
    %v3186 = vadd.f32 %v3184, %v3185
    %v3187 = vrot.slane %v3186, 2
    %v3188 = vadd.f32 %v3186, %v3187
    %v3189 = vrot.slane %v3188, 1
    %v3190 = vadd.f32 %v3188, %v3189
    %s3191 = vtos %v3190
    %v3192 = vrcp.pop 2.0
    %s3193 = vtos %v3192
    %s3194 = smul.f32 %s3191, %s3193
    %v3195 = vstv %s3194
    %3196 = vst [vmem:[#allocation16] sm:$0x1] %v3195
    // Predicated region
    $region122: #{tpu_custom_call.1} parent=1 // pred_check
      _
    $region123: #{tpu_custom_call.1} parent=1 // pred_check_branch
      %3198 = sbr.rel (0) target = $region125
    $region124: #{tpu_custom_call.1} parent=1 // pred_region
      %s3200 = ssub.s32 32, 32
      %3201 = vsyncadd [#allocation5], %s3200
      %s3203 = sshll.u32 [#allocation15], 4
      %s3204 = int_to_ptr.vmem [resolvable:$true] %s3203
      %3206 = dma.vmem_to_hbm [thread:$0]  %s3204, 32, %s23, [#allocation5]
    $region125: #{tpu_custom_call.1} parent=1 // pred_fallthru
      _
    // Predicated region
    $region126: #{tpu_custom_call.1} parent=1 // pred_check
      _
    $region127: #{tpu_custom_call.1} parent=1 // pred_check_branch
      %3208 = sbr.rel (0) target = $region129
    $region128: #{tpu_custom_call.1} parent=1 // pred_region
      %s3210 = ssub.s32 16, 16
      %3211 = vsyncadd [#allocation17], %s3210
      %s3213 = sshll.u32 [#allocation16], 4
      %s3214 = int_to_ptr.vmem [resolvable:$true] %s3213
      %3216 = dma.vmem_to_hbm [thread:$0]  %s3214, 16, %s24, [#allocation17]
    $region129: #{tpu_custom_call.1} parent=1 // pred_fallthru
      _
    // Predicated region
    $region130: #{tpu_custom_call.1} parent=1 // pred_check
      _
    $region131: #{tpu_custom_call.1} parent=1 // pred_check_branch
      %3218 = sbr.rel (0) target = $region133
    $region132: #{tpu_custom_call.1} parent=1 // pred_region
      %3219 = dma.done [#allocation5], 32
    $region133: #{tpu_custom_call.1} parent=1 // pred_fallthru
      _
    // Predicated region
    $region134: #{tpu_custom_call.1} parent=1 // pred_check
      _
    $region135: #{tpu_custom_call.1} parent=1 // pred_check_branch
      %3221 = sbr.rel (0) target = $region137
    $region136: #{tpu_custom_call.1} parent=1 // pred_region
      %3222 = dma.done [#allocation17], 16
    $region137: #{tpu_custom_call.1} parent=1 // pred_fallthru
      _
    %3223 = vsyncpa [#allocation4], 1
    %3224 = vsyncpa [#allocation7], 1
    %3225 = vsyncpa [#allocation10], 1
    %3226 = vsyncpa [#allocation13], 1
    %3227 = vsyncpa [#allocation5], 1
    %3228 = vsyncpa [#allocation17], 1

</llo_original>
